<compile_context>
chip_gen: v6e
topology: v6e:2x2x1
jax: 0.10.0
libtpu: 0.0.40
codegen_flags: <defaults>
</compile_context>

<pallas_src>
import functools

import jax
import jax.numpy as jnp
from jax.experimental import pallas as pl
from jax.experimental.pallas import tpu as pltpu

SUB = 8      # f32 sublane multiple
LANE = 128   # lane width


def _round_up(x, m):
    return ((x + m - 1) // m) * m


# ----------------------------------------------------------------------------
# Fused Pallas kernel
# ----------------------------------------------------------------------------
def _make_fused_gru_kernel(num_layers, seq_len, Bp, Hp, Op):
    """Builds the fused kernel for a fixed (L, S, Bp, Hp, Op) configuration.

    Ref order (positional):
      inputs : x2d   (S*Bp, Hp)   f32  -- input features zero-padded to Hp lanes
               h0    (L, Bp, Hp)  f32
               wslab (2*L*Hp, 3*Hp) bf16 -- per layer: [Wi_all; Wh_all], gate slots
                                            r/z/n at lane offsets 0 / Hp / 2*Hp
               bslab (rows, 3*Hp) f32  -- row 2l: combined input bias (b_i + b_h for
                                          r,z; b_in for n); row 2l+1[:Hp]: b_hn;
                                          row 2L[:Op]: linear bias
               linw  (Hp, Op)     f32  -- linear head weight (padded)
      outputs: y2d (S*Bp, Op) f32, hN (L, Bp, Hp) f32
      scratch: act (S*Bp, Hp) f32 VMEM -- current layer's full output sequence
    """

    def kernel(x_ref, h0_ref, w_ref, b_ref, linw_ref, out_ref, hN_ref, act_ref):
        layer_in = x_ref[...]                                   # (S*Bp, Hp) f32
        for l in range(num_layers):
            r0 = 2 * l * Hp
            wi = w_ref[r0:r0 + Hp, :]                           # (Hp, 3Hp) bf16
            wh = w_ref[r0 + Hp:r0 + 2 * Hp, :]                  # (Hp, 3Hp) bf16
            bi = b_ref[2 * l:2 * l + 1, :]                      # (1, 3Hp) f32
            # b_hn stays inside r*(W_hn h + b_hn); broadcast hoisted out of t-loop.
            bhn = jnp.broadcast_to(b_ref[2 * l + 1:2 * l + 2, 0:Hp], (Bp, Hp))

            # Hoisted input projection for the WHOLE sequence: one fused
            # (S*Bp, Hp) @ (Hp, 3Hp) matmul per layer, off the serial path.
            gi = jnp.dot(layer_in.astype(jnp.bfloat16), wi,
                         preferred_element_type=jnp.float32) + bi   # (S*Bp, 3Hp) f32

            h = h0_ref[l]                                       # (Bp, Hp) f32
            # seq_len is small & static: fully unrolled so all indices are static
            # (TODO(synk): fori_loop(unroll=k) + gi chunking at larger S/H).
            for t in range(seq_len):
                lo = t * Bp                                     # sublane-aligned
                # ONE fused recurrent MXU push per timestep; gate slots are
                # 128-lane aligned so the r/z/n slices below are free views.
                gh = jnp.dot(h.astype(jnp.bfloat16), wh,
                             preferred_element_type=jnp.float32)    # (Bp, 3Hp) f32
                # PyTorch gate order / math: r, z, n (all elementwise math in f32)
                r = jax.nn.sigmoid(gi[lo:lo + Bp, 0:Hp] + gh[:, 0:Hp])
                z = jax.nn.sigmoid(gi[lo:lo + Bp, Hp:2 * Hp] + gh[:, Hp:2 * Hp])
                n = jnp.tanh(gi[lo:lo + Bp, 2 * Hp:3 * Hp]
                             + r * (gh[:, 2 * Hp:3 * Hp] + bhn))
                h = (1.0 - z) * n + z * h
                act_ref[lo:lo + Bp, :] = h                      # full-tile store
            hN_ref[l] = h
            layer_in = act_ref[...]                             # (S*Bp, Hp)

        # Fused Linear head (kept f32): one matmul over the whole sequence,
        # written once to a lane-dense (last dim = Op = 128) output.
        lin_b = b_ref[2 * num_layers:2 * num_layers + 1, 0:Op]
        out_ref[...] = (jnp.dot(layer_in, linw_ref[...],
                                preferred_element_type=jnp.float32) + lin_b)

    return kernel


# ----------------------------------------------------------------------------
# Wrapper
# ----------------------------------------------------------------------------
def gru_forward(X, params, H, O, hidden=None):
    """Equivalent of GRU.forward(X, hidden) -> (linear_out, hidden)."""
    S, B, I = X.shape
    wslab, bslab, linw = params["wslab"], params["bslab"], params["linw"]
    Hp = wslab.shape[1] // 3
    Op = linw.shape[1]
    L = wslab.shape[0] // (2 * Hp)
    assert I <= Hp  # TODO(synk): widen the Wi row-block for input_size > 128
    Bp = _round_up(max(B, SUB), SUB)

    # Zero-pad batch rows to a sublane multiple and features/hidden to Hp lanes.
    xp = jnp.zeros((S, Bp, Hp), jnp.float32).at[:, :B, :I].set(
        X.astype(jnp.float32))
    x2d = xp.reshape(S * Bp, Hp)

    if hidden is None:
        h0 = jnp.zeros((L, Bp, Hp), dtype=jnp.float32)
    else:
        h0 = jnp.zeros((L, Bp, Hp), jnp.float32).at[:, :B, :H].set(
            hidden.astype(jnp.float32))

    kernel = _make_fused_gru_kernel(L, S, Bp, Hp, Op)
    b_rows = bslab.shape[0]

    y2d, hNp = pl.pallas_call(
        kernel,
        out_shape=(
            jax.ShapeDtypeStruct((S * Bp, Op), jnp.float32),
            jax.ShapeDtypeStruct((L, Bp, Hp), jnp.float32),
        ),
        grid_spec=pltpu.PrefetchScalarGridSpec(
            num_scalar_prefetch=0,
            grid=(1,),
            in_specs=[
                pl.BlockSpec((S * Bp, Hp), lambda i: (0, 0)),
                pl.BlockSpec((L, Bp, Hp), lambda i: (0, 0, 0)),
                pl.BlockSpec((2 * L * Hp, 3 * Hp), lambda i: (0, 0)),
                pl.BlockSpec((b_rows, 3 * Hp), lambda i: (0, 0)),
                pl.BlockSpec((Hp, Op), lambda i: (0, 0)),
            ],
            out_specs=(
                pl.BlockSpec((S * Bp, Op), lambda i: (0, 0)),
                pl.BlockSpec((L, Bp, Hp), lambda i: (0, 0, 0)),
            ),
            scratch_shapes=[pltpu.VMEM((S * Bp, Hp), jnp.float32)],
        ),
        compiler_params=pltpu.CompilerParams(
            dimension_semantics=("arbitrary",)),
    )(x2d, h0, wslab, bslab, linw)

    linear_out = y2d.reshape(S, Bp, Op)[:, :B, :O]
    hN = hNp[:, :B, :H]
    return linear_out, hN


# ----------------------------------------------------------------------------
# Parameter init (PyTorch nn.GRU / nn.Linear layout) + packed kernel layout
# ----------------------------------------------------------------------------
def init_raw_params(key, num_inputs, num_hidden, num_layers, num_outputs):
    raw = {"gru": []}
    k_gru = 1.0 / float(num_hidden) ** 0.5
    for l in range(num_layers):
        in_sz = num_inputs if l == 0 else num_hidden
        key, k1, k2, k3, k4 = jax.random.split(key, 5)
        raw["gru"].append({
            "w_ih": jax.random.uniform(k1, (3 * num_hidden, in_sz),
                                       minval=-k_gru, maxval=k_gru,
                                       dtype=jnp.float32),
            "w_hh": jax.random.uniform(k2, (3 * num_hidden, num_hidden),
                                       minval=-k_gru, maxval=k_gru,
                                       dtype=jnp.float32),
            "b_ih": jax.random.uniform(k3, (3 * num_hidden,),
                                       minval=-k_gru, maxval=k_gru,
                                       dtype=jnp.float32),
            "b_hh": jax.random.uniform(k4, (3 * num_hidden,),
                                       minval=-k_gru, maxval=k_gru,
                                       dtype=jnp.float32),
        })
    key, k5, k6 = jax.random.split(key, 3)
    k_lin = 1.0 / float(num_hidden) ** 0.5
    raw["lin_w"] = jax.random.uniform(k5, (num_outputs, num_hidden),
                                      minval=-k_lin, maxval=k_lin,
                                      dtype=jnp.float32)
    raw["lin_b"] = jax.random.uniform(k6, (num_outputs,),
                                      minval=-k_lin, maxval=k_lin,
                                      dtype=jnp.float32)
    return raw


def prep_params(raw):
    """Pack PyTorch-layout params into lane-dense, 128-padded kernel slabs."""
    L = len(raw["gru"])
    H = raw["gru"][0]["w_hh"].shape[1]
    O = raw["lin_w"].shape[0]
    Hp = _round_up(H, LANE)
    Op = _round_up(O, LANE)
    G = 3 * Hp

    w_blocks = []
    b_rows = _round_up(2 * L + 1, SUB)
    bslab = jnp.zeros((b_rows, G), jnp.float32)
    for l, p in enumerate(raw["gru"]):
        in_l = p["w_ih"].shape[1]
        wi = jnp.zeros((Hp, G), jnp.float32)
        wh = jnp.zeros((Hp, G), jnp.float32)
        for g in range(3):  # gate order r, z, n; each gate in a 128-lane slot
            wi = wi.at[:in_l, g * Hp:g * Hp + H].set(
                p["w_ih"][g * H:(g + 1) * H, :].T)
            wh = wh.at[:H, g * Hp:g * Hp + H].set(
                p["w_hh"][g * H:(g + 1) * H, :].T)
        w_blocks += [wi, wh]
        # b_hr / b_hz fold into the hoisted input projection; b_hn must stay
        # inside r * (W_hn h + b_hn).
        bi = jnp.zeros((G,), jnp.float32)
        bi = bi.at[0:H].set(p["b_ih"][0:H] + p["b_hh"][0:H])
        bi = bi.at[Hp:Hp + H].set(p["b_ih"][H:2 * H] + p["b_hh"][H:2 * H])
        bi = bi.at[2 * Hp:2 * Hp + H].set(p["b_ih"][2 * H:3 * H])
        bslab = bslab.at[2 * l, :].set(bi)
        bslab = bslab.at[2 * l + 1, 0:H].set(p["b_hh"][2 * H:3 * H])
    bslab = bslab.at[2 * L, 0:O].set(raw["lin_b"])

    wslab = jnp.concatenate(w_blocks, axis=0).astype(jnp.bfloat16)  # (2L*Hp, 3Hp)
    linw = jnp.zeros((Hp, Op), jnp.float32).at[0:H, 0:O].set(raw["lin_w"].T)
    return {"wslab": wslab, "bslab": bslab, "linw": linw}


# ----------------------------------------------------------------------------
# Pure-JAX reference (raw PyTorch-layout params, independent math path)
# ----------------------------------------------------------------------------
def ref_forward(X, raw, hidden=None, matmul_dtype=jnp.float32):
    S, B, _ = X.shape
    L = len(raw["gru"])
    H = raw["gru"][0]["w_hh"].shape[1]
    if hidden is None:
        hidden = jnp.zeros((L, B, H), dtype=jnp.float32)

    def cast(a):
        return a.astype(matmul_dtype)

    layer_in = X.astype(jnp.float32)
    h_finals = []
    for l in range(L):
        p = raw["gru"][l]
        w_ih_t = cast(p["w_ih"].T)   # (in, 3H)
        w_hh_t = cast(p["w_hh"].T)   # (H, 3H)
        b_ih, b_hh = p["b_ih"], p["b_hh"]

        def step(h, x, w_ih_t=w_ih_t, w_hh_t=w_hh_t, b_ih=b_ih, b_hh=b_hh):
            gi = jnp.dot(cast(x), w_ih_t,
                         preferred_element_type=jnp.float32) + b_ih
            gh = jnp.dot(cast(h), w_hh_t,
                         preferred_element_type=jnp.float32) + b_hh
            r = jax.nn.sigmoid(gi[:, :H] + gh[:, :H])
            z = jax.nn.sigmoid(gi[:, H:2 * H] + gh[:, H:2 * H])
            n = jnp.tanh(gi[:, 2 * H:] + r * gh[:, 2 * H:])
            h_new = (1.0 - z) * n + z * h
            return h_new, h_new

        hN, outs = jax.lax.scan(step, hidden[l], layer_in)
        h_finals.append(hN)
        layer_in = outs
    lin = layer_in @ raw["lin_w"].T + raw["lin_b"]
    return lin, jnp.stack(h_finals, axis=0)


# ----------------------------------------------------------------------------
if __name__ == "__main__":
    # config: num_inputs=8, num_hidden=32, num_layers=2, num_dropout=0.0, num_outputs=4
    SEQ, BATCH = 8, 4
    NUM_INPUTS, NUM_HIDDEN, NUM_LAYERS, NUM_OUTPUTS = 8, 32, 2, 4

    key = jax.random.PRNGKey(0)
    key, kx = jax.random.split(key)
    X = jax.random.normal(kx, (SEQ, BATCH, NUM_INPUTS), dtype=jnp.float32)
    raw = init_raw_params(key, NUM_INPUTS, NUM_HIDDEN, NUM_LAYERS, NUM_OUTPUTS)
    params = prep_params(raw)

    fwd = jax.jit(gru_forward, static_argnames=("H", "O"))
    linear_out, hidden_out = fwd(X, params, H=NUM_HIDDEN, O=NUM_OUTPUTS)
    jax.block_until_ready((linear_out, hidden_out))

    assert linear_out.shape == (SEQ, BATCH, NUM_OUTPUTS)
    assert hidden_out.shape == (NUM_LAYERS, BATCH, NUM_HIDDEN)

    # Tight check against a reference that uses the same bf16 matmul operands.
    ref_lin_bf, ref_hid_bf = ref_forward(X, raw, matmul_dtype=jnp.bfloat16)
    assert jnp.allclose(linear_out, ref_lin_bf, atol=5e-3, rtol=5e-3), \
        float(jnp.max(jnp.abs(linear_out - ref_lin_bf)))
    assert jnp.allclose(hidden_out, ref_hid_bf, atol=5e-3, rtol=5e-3), \
        float(jnp.max(jnp.abs(hidden_out - ref_hid_bf)))

    # Loose semantic check against the full-f32 reference (bf16 weight drift).
    ref_lin, ref_hid = ref_forward(X, raw)
    assert jnp.allclose(linear_out, ref_lin, atol=5e-2, rtol=5e-2), \
        float(jnp.max(jnp.abs(linear_out - ref_lin)))
    assert jnp.allclose(hidden_out, ref_hid, atol=5e-2, rtol=5e-2), \
        float(jnp.max(jnp.abs(hidden_out - ref_hid)))

    print("KERNEL_OK")
</pallas_src>

<mosaic_0001>
module attributes {stable_mosaic.version = 11 : i64} {
  func.func @kernel(%arg0: i32, %arg1: memref<64x128xf32, #tpu.memory_space<vmem>>, %arg2: memref<2x8x128xf32, #tpu.memory_space<vmem>>, %arg3: memref<512x384xbf16, #tpu.memory_space<vmem>>, %arg4: memref<8x384xf32, #tpu.memory_space<vmem>>, %arg5: memref<128x128xf32, #tpu.memory_space<vmem>>, %arg6: memref<64x128xf32, #tpu.memory_space<vmem>>, %arg7: memref<2x8x128xf32, #tpu.memory_space<vmem>>, %arg8: memref<64x128xf32, #tpu.memory_space<vmem>>) attributes {dimension_semantics = [#tpu.dimension_semantics<arbitrary>], iteration_bounds = array<i64: 1>, scalar_prefetch = 0 : i64, scratch_operands = 1 : i64, tpu.core_type = #tpu.core_type<tc>, window_params = [{pipeline_mode = #tpu.pipeline_mode<synchronous>, transform_indices = @transform_0, window_bounds = array<i64: 64, 128>}, {pipeline_mode = #tpu.pipeline_mode<synchronous>, transform_indices = @transform_1, window_bounds = array<i64: 2, 8, 128>}, {pipeline_mode = #tpu.pipeline_mode<synchronous>, transform_indices = @transform_2, window_bounds = array<i64: 512, 384>}, {pipeline_mode = #tpu.pipeline_mode<synchronous>, transform_indices = @transform_3, window_bounds = array<i64: 8, 384>}, {pipeline_mode = #tpu.pipeline_mode<synchronous>, transform_indices = @transform_4, window_bounds = array<i64: 128, 128>}, {pipeline_mode = #tpu.pipeline_mode<synchronous>, transform_indices = @transform_5, window_bounds = array<i64: 64, 128>}, {pipeline_mode = #tpu.pipeline_mode<synchronous>, transform_indices = @transform_6, window_bounds = array<i64: 2, 8, 128>}]} {
    %c0 = arith.constant 0 : index
    %c0_0 = arith.constant 0 : index
    %0 = vector.load %arg1[%c0, %c0_0] : memref<64x128xf32, #tpu.memory_space<vmem>>, vector<64x128xf32>
    %c0_1 = arith.constant 0 : index
    %c0_2 = arith.constant 0 : index
    %1 = vector.load %arg3[%c0_1, %c0_2] : memref<512x384xbf16, #tpu.memory_space<vmem>>, vector<128x384xbf16>
    %c128 = arith.constant 128 : index
    %c0_3 = arith.constant 0 : index
    %2 = vector.load %arg3[%c128, %c0_3] : memref<512x384xbf16, #tpu.memory_space<vmem>>, vector<128x384xbf16>
    %c0_4 = arith.constant 0 : index
    %c0_5 = arith.constant 0 : index
    %3 = vector.load %arg4[%c0_4, %c0_5] : memref<8x384xf32, #tpu.memory_space<vmem>>, vector<1x384xf32>
    %c1 = arith.constant 1 : index
    %c0_6 = arith.constant 0 : index
    %4 = vector.load %arg4[%c1, %c0_6] : memref<8x384xf32, #tpu.memory_space<vmem>>, vector<1x128xf32>
    %5 = vector.shape_cast %4 : vector<1x128xf32> to vector<1x128xf32>
    %6 = vector.broadcast %5 : vector<1x128xf32> to vector<8x128xf32>
    %7 = arith.truncf %0 : vector<64x128xf32> to vector<64x128xbf16>
    %cst = arith.constant dense<0.000000e+00> : vector<64x384xf32>
    %8 = tpu.matmul %7, %1, %cst {dimension_numbers = #tpu.dot_dimension_numbers<[1], [0], [0], [1], [0, 0, 1, 1], [], []>} : vector<64x128xbf16>, vector<128x384xbf16>, vector<64x384xf32> -> vector<64x384xf32>
    %9 = vector.broadcast %3 : vector<1x384xf32> to vector<64x384xf32>
    %10 = arith.addf %8, %9 : vector<64x384xf32>
    %c0_7 = arith.constant 0 : index
    %c0_8 = arith.constant 0 : index
    %c0_9 = arith.constant 0 : index
    %11 = vector.load %arg2[%c0_7, %c0_8, %c0_9] : memref<2x8x128xf32, #tpu.memory_space<vmem>>, vector<1x8x128xf32>
    %12 = vector.shape_cast %11 : vector<1x8x128xf32> to vector<8x128xf32>
    %13 = arith.truncf %12 : vector<8x128xf32> to vector<8x128xbf16>
    %cst_10 = arith.constant dense<0.000000e+00> : vector<8x384xf32>
    %14 = tpu.matmul %13, %2, %cst_10 {dimension_numbers = #tpu.dot_dimension_numbers<[1], [0], [0], [1], [0, 0, 1, 1], [], []>} : vector<8x128xbf16>, vector<128x384xbf16>, vector<8x384xf32> -> vector<8x384xf32>
    %15 = vector.extract_strided_slice %10 {offsets = [0, 0], sizes = [8, 128], strides = [1, 1]} : vector<64x384xf32> to vector<8x128xf32>
    %16 = vector.extract_strided_slice %14 {offsets = [0, 0], sizes = [8, 128], strides = [1, 1]} : vector<8x384xf32> to vector<8x128xf32>
    %17 = arith.addf %15, %16 : vector<8x128xf32>
    %18 = arith.negf %17 : vector<8x128xf32>
    %19 = math.exp %18 : vector<8x128xf32>
    %cst_11 = arith.constant 1.000000e+00 : f32
    %20 = vector.broadcast %cst_11 : f32 to vector<8x128xf32>
    %21 = arith.addf %20, %19 : vector<8x128xf32>
    %22 = arith.divf %20, %21 : vector<8x128xf32>
    %23 = vector.extract_strided_slice %10 {offsets = [0, 128], sizes = [8, 128], strides = [1, 1]} : vector<64x384xf32> to vector<8x128xf32>
    %24 = vector.extract_strided_slice %14 {offsets = [0, 128], sizes = [8, 128], strides = [1, 1]} : vector<8x384xf32> to vector<8x128xf32>
    %25 = arith.addf %23, %24 : vector<8x128xf32>
    %26 = arith.negf %25 : vector<8x128xf32>
    %27 = math.exp %26 : vector<8x128xf32>
    %cst_12 = arith.constant 1.000000e+00 : f32
    %28 = vector.broadcast %cst_12 : f32 to vector<8x128xf32>
    %29 = arith.addf %28, %27 : vector<8x128xf32>
    %30 = arith.divf %28, %29 : vector<8x128xf32>
    %31 = vector.extract_strided_slice %10 {offsets = [0, 256], sizes = [8, 128], strides = [1, 1]} : vector<64x384xf32> to vector<8x128xf32>
    %32 = vector.extract_strided_slice %14 {offsets = [0, 256], sizes = [8, 128], strides = [1, 1]} : vector<8x384xf32> to vector<8x128xf32>
    %33 = arith.addf %32, %6 : vector<8x128xf32>
    %34 = arith.mulf %22, %33 : vector<8x128xf32>
    %35 = arith.addf %31, %34 : vector<8x128xf32>
    %36 = math.tanh %35 : vector<8x128xf32>
    %cst_13 = arith.constant 1.000000e+00 : f32
    %37 = vector.broadcast %cst_13 : f32 to vector<8x128xf32>
    %38 = arith.subf %37, %30 : vector<8x128xf32>
    %39 = arith.mulf %38, %36 : vector<8x128xf32>
    %40 = arith.mulf %30, %12 : vector<8x128xf32>
    %41 = arith.addf %39, %40 : vector<8x128xf32>
    %c0_14 = arith.constant 0 : index
    %c0_15 = arith.constant 0 : index
    %42 = vector.load %arg8[%c0_14, %c0_15] : memref<64x128xf32, #tpu.memory_space<vmem>>, vector<8x128xf32>
    tpu.vector_store %arg8[%c0_14, %c0_15], %41 {strides = array<i32>} : memref<64x128xf32, #tpu.memory_space<vmem>>, vector<8x128xf32>,
    %43 = arith.truncf %41 : vector<8x128xf32> to vector<8x128xbf16>
    %cst_16 = arith.constant dense<0.000000e+00> : vector<8x384xf32>
    %44 = tpu.matmul %43, %2, %cst_16 {dimension_numbers = #tpu.dot_dimension_numbers<[1], [0], [0], [1], [0, 0, 1, 1], [], []>} : vector<8x128xbf16>, vector<128x384xbf16>, vector<8x384xf32> -> vector<8x384xf32>
    %45 = vector.extract_strided_slice %10 {offsets = [8, 0], sizes = [8, 128], strides = [1, 1]} : vector<64x384xf32> to vector<8x128xf32>
    %46 = vector.extract_strided_slice %44 {offsets = [0, 0], sizes = [8, 128], strides = [1, 1]} : vector<8x384xf32> to vector<8x128xf32>
    %47 = arith.addf %45, %46 : vector<8x128xf32>
    %48 = arith.negf %47 : vector<8x128xf32>
    %49 = math.exp %48 : vector<8x128xf32>
    %cst_17 = arith.constant 1.000000e+00 : f32
    %50 = vector.broadcast %cst_17 : f32 to vector<8x128xf32>
    %51 = arith.addf %50, %49 : vector<8x128xf32>
    %52 = arith.divf %50, %51 : vector<8x128xf32>
    %53 = vector.extract_strided_slice %10 {offsets = [8, 128], sizes = [8, 128], strides = [1, 1]} : vector<64x384xf32> to vector<8x128xf32>
    %54 = vector.extract_strided_slice %44 {offsets = [0, 128], sizes = [8, 128], strides = [1, 1]} : vector<8x384xf32> to vector<8x128xf32>
    %55 = arith.addf %53, %54 : vector<8x128xf32>
    %56 = arith.negf %55 : vector<8x128xf32>
    %57 = math.exp %56 : vector<8x128xf32>
    %cst_18 = arith.constant 1.000000e+00 : f32
    %58 = vector.broadcast %cst_18 : f32 to vector<8x128xf32>
    %59 = arith.addf %58, %57 : vector<8x128xf32>
    %60 = arith.divf %58, %59 : vector<8x128xf32>
    %61 = vector.extract_strided_slice %10 {offsets = [8, 256], sizes = [8, 128], strides = [1, 1]} : vector<64x384xf32> to vector<8x128xf32>
    %62 = vector.extract_strided_slice %44 {offsets = [0, 256], sizes = [8, 128], strides = [1, 1]} : vector<8x384xf32> to vector<8x128xf32>
    %63 = arith.addf %62, %6 : vector<8x128xf32>
    %64 = arith.mulf %52, %63 : vector<8x128xf32>
    %65 = arith.addf %61, %64 : vector<8x128xf32>
    %66 = math.tanh %65 : vector<8x128xf32>
    %cst_19 = arith.constant 1.000000e+00 : f32
    %67 = vector.broadcast %cst_19 : f32 to vector<8x128xf32>
    %68 = arith.subf %67, %60 : vector<8x128xf32>
    %69 = arith.mulf %68, %66 : vector<8x128xf32>
    %70 = arith.mulf %60, %41 : vector<8x128xf32>
    %71 = arith.addf %69, %70 : vector<8x128xf32>
    %c8 = arith.constant 8 : index
    %c0_20 = arith.constant 0 : index
    %72 = vector.load %arg8[%c8, %c0_20] : memref<64x128xf32, #tpu.memory_space<vmem>>, vector<8x128xf32>
    tpu.vector_store %arg8[%c8, %c0_20], %71 {strides = array<i32>} : memref<64x128xf32, #tpu.memory_space<vmem>>, vector<8x128xf32>,
    %73 = arith.truncf %71 : vector<8x128xf32> to vector<8x128xbf16>
    %cst_21 = arith.constant dense<0.000000e+00> : vector<8x384xf32>
    %74 = tpu.matmul %73, %2, %cst_21 {dimension_numbers = #tpu.dot_dimension_numbers<[1], [0], [0], [1], [0, 0, 1, 1], [], []>} : vector<8x128xbf16>, vector<128x384xbf16>, vector<8x384xf32> -> vector<8x384xf32>
    %75 = vector.extract_strided_slice %10 {offsets = [16, 0], sizes = [8, 128], strides = [1, 1]} : vector<64x384xf32> to vector<8x128xf32>
    %76 = vector.extract_strided_slice %74 {offsets = [0, 0], sizes = [8, 128], strides = [1, 1]} : vector<8x384xf32> to vector<8x128xf32>
    %77 = arith.addf %75, %76 : vector<8x128xf32>
    %78 = arith.negf %77 : vector<8x128xf32>
    %79 = math.exp %78 : vector<8x128xf32>
    %cst_22 = arith.constant 1.000000e+00 : f32
    %80 = vector.broadcast %cst_22 : f32 to vector<8x128xf32>
    %81 = arith.addf %80, %79 : vector<8x128xf32>
    %82 = arith.divf %80, %81 : vector<8x128xf32>
    %83 = vector.extract_strided_slice %10 {offsets = [16, 128], sizes = [8, 128], strides = [1, 1]} : vector<64x384xf32> to vector<8x128xf32>
    %84 = vector.extract_strided_slice %74 {offsets = [0, 128], sizes = [8, 128], strides = [1, 1]} : vector<8x384xf32> to vector<8x128xf32>
    %85 = arith.addf %83, %84 : vector<8x128xf32>
    %86 = arith.negf %85 : vector<8x128xf32>
    %87 = math.exp %86 : vector<8x128xf32>
    %cst_23 = arith.constant 1.000000e+00 : f32
    %88 = vector.broadcast %cst_23 : f32 to vector<8x128xf32>
    %89 = arith.addf %88, %87 : vector<8x128xf32>
    %90 = arith.divf %88, %89 : vector<8x128xf32>
    %91 = vector.extract_strided_slice %10 {offsets = [16, 256], sizes = [8, 128], strides = [1, 1]} : vector<64x384xf32> to vector<8x128xf32>
    %92 = vector.extract_strided_slice %74 {offsets = [0, 256], sizes = [8, 128], strides = [1, 1]} : vector<8x384xf32> to vector<8x128xf32>
    %93 = arith.addf %92, %6 : vector<8x128xf32>
    %94 = arith.mulf %82, %93 : vector<8x128xf32>
    %95 = arith.addf %91, %94 : vector<8x128xf32>
    %96 = math.tanh %95 : vector<8x128xf32>
    %cst_24 = arith.constant 1.000000e+00 : f32
    %97 = vector.broadcast %cst_24 : f32 to vector<8x128xf32>
    %98 = arith.subf %97, %90 : vector<8x128xf32>
    %99 = arith.mulf %98, %96 : vector<8x128xf32>
    %100 = arith.mulf %90, %71 : vector<8x128xf32>
    %101 = arith.addf %99, %100 : vector<8x128xf32>
    %c16 = arith.constant 16 : index
    %c0_25 = arith.constant 0 : index
    %102 = vector.load %arg8[%c16, %c0_25] : memref<64x128xf32, #tpu.memory_space<vmem>>, vector<8x128xf32>
    tpu.vector_store %arg8[%c16, %c0_25], %101 {strides = array<i32>} : memref<64x128xf32, #tpu.memory_space<vmem>>, vector<8x128xf32>,
    %103 = arith.truncf %101 : vector<8x128xf32> to vector<8x128xbf16>
    %cst_26 = arith.constant dense<0.000000e+00> : vector<8x384xf32>
    %104 = tpu.matmul %103, %2, %cst_26 {dimension_numbers = #tpu.dot_dimension_numbers<[1], [0], [0], [1], [0, 0, 1, 1], [], []>} : vector<8x128xbf16>, vector<128x384xbf16>, vector<8x384xf32> -> vector<8x384xf32>
    %105 = vector.extract_strided_slice %10 {offsets = [24, 0], sizes = [8, 128], strides = [1, 1]} : vector<64x384xf32> to vector<8x128xf32>
    %106 = vector.extract_strided_slice %104 {offsets = [0, 0], sizes = [8, 128], strides = [1, 1]} : vector<8x384xf32> to vector<8x128xf32>
    %107 = arith.addf %105, %106 : vector<8x128xf32>
    %108 = arith.negf %107 : vector<8x128xf32>
    %109 = math.exp %108 : vector<8x128xf32>
    %cst_27 = arith.constant 1.000000e+00 : f32
    %110 = vector.broadcast %cst_27 : f32 to vector<8x128xf32>
    %111 = arith.addf %110, %109 : vector<8x128xf32>
    %112 = arith.divf %110, %111 : vector<8x128xf32>
    %113 = vector.extract_strided_slice %10 {offsets = [24, 128], sizes = [8, 128], strides = [1, 1]} : vector<64x384xf32> to vector<8x128xf32>
    %114 = vector.extract_strided_slice %104 {offsets = [0, 128], sizes = [8, 128], strides = [1, 1]} : vector<8x384xf32> to vector<8x128xf32>
    %115 = arith.addf %113, %114 : vector<8x128xf32>
    %116 = arith.negf %115 : vector<8x128xf32>
    %117 = math.exp %116 : vector<8x128xf32>
    %cst_28 = arith.constant 1.000000e+00 : f32
    %118 = vector.broadcast %cst_28 : f32 to vector<8x128xf32>
    %119 = arith.addf %118, %117 : vector<8x128xf32>
    %120 = arith.divf %118, %119 : vector<8x128xf32>
    %121 = vector.extract_strided_slice %10 {offsets = [24, 256], sizes = [8, 128], strides = [1, 1]} : vector<64x384xf32> to vector<8x128xf32>
    %122 = vector.extract_strided_slice %104 {offsets = [0, 256], sizes = [8, 128], strides = [1, 1]} : vector<8x384xf32> to vector<8x128xf32>
    %123 = arith.addf %122, %6 : vector<8x128xf32>
    %124 = arith.mulf %112, %123 : vector<8x128xf32>
    %125 = arith.addf %121, %124 : vector<8x128xf32>
    %126 = math.tanh %125 : vector<8x128xf32>
    %cst_29 = arith.constant 1.000000e+00 : f32
    %127 = vector.broadcast %cst_29 : f32 to vector<8x128xf32>
    %128 = arith.subf %127, %120 : vector<8x128xf32>
    %129 = arith.mulf %128, %126 : vector<8x128xf32>
    %130 = arith.mulf %120, %101 : vector<8x128xf32>
    %131 = arith.addf %129, %130 : vector<8x128xf32>
    %c24 = arith.constant 24 : index
    %c0_30 = arith.constant 0 : index
    %132 = vector.load %arg8[%c24, %c0_30] : memref<64x128xf32, #tpu.memory_space<vmem>>, vector<8x128xf32>
    tpu.vector_store %arg8[%c24, %c0_30], %131 {strides = array<i32>} : memref<64x128xf32, #tpu.memory_space<vmem>>, vector<8x128xf32>,
    %133 = arith.truncf %131 : vector<8x128xf32> to vector<8x128xbf16>
    %cst_31 = arith.constant dense<0.000000e+00> : vector<8x384xf32>
    %134 = tpu.matmul %133, %2, %cst_31 {dimension_numbers = #tpu.dot_dimension_numbers<[1], [0], [0], [1], [0, 0, 1, 1], [], []>} : vector<8x128xbf16>, vector<128x384xbf16>, vector<8x384xf32> -> vector<8x384xf32>
    %135 = vector.extract_strided_slice %10 {offsets = [32, 0], sizes = [8, 128], strides = [1, 1]} : vector<64x384xf32> to vector<8x128xf32>
    %136 = vector.extract_strided_slice %134 {offsets = [0, 0], sizes = [8, 128], strides = [1, 1]} : vector<8x384xf32> to vector<8x128xf32>
    %137 = arith.addf %135, %136 : vector<8x128xf32>
    %138 = arith.negf %137 : vector<8x128xf32>
    %139 = math.exp %138 : vector<8x128xf32>
    %cst_32 = arith.constant 1.000000e+00 : f32
    %140 = vector.broadcast %cst_32 : f32 to vector<8x128xf32>
    %141 = arith.addf %140, %139 : vector<8x128xf32>
    %142 = arith.divf %140, %141 : vector<8x128xf32>
    %143 = vector.extract_strided_slice %10 {offsets = [32, 128], sizes = [8, 128], strides = [1, 1]} : vector<64x384xf32> to vector<8x128xf32>
    %144 = vector.extract_strided_slice %134 {offsets = [0, 128], sizes = [8, 128], strides = [1, 1]} : vector<8x384xf32> to vector<8x128xf32>
    %145 = arith.addf %143, %144 : vector<8x128xf32>
    %146 = arith.negf %145 : vector<8x128xf32>
    %147 = math.exp %146 : vector<8x128xf32>
    %cst_33 = arith.constant 1.000000e+00 : f32
    %148 = vector.broadcast %cst_33 : f32 to vector<8x128xf32>
    %149 = arith.addf %148, %147 : vector<8x128xf32>
    %150 = arith.divf %148, %149 : vector<8x128xf32>
    %151 = vector.extract_strided_slice %10 {offsets = [32, 256], sizes = [8, 128], strides = [1, 1]} : vector<64x384xf32> to vector<8x128xf32>
    %152 = vector.extract_strided_slice %134 {offsets = [0, 256], sizes = [8, 128], strides = [1, 1]} : vector<8x384xf32> to vector<8x128xf32>
    %153 = arith.addf %152, %6 : vector<8x128xf32>
    %154 = arith.mulf %142, %153 : vector<8x128xf32>
    %155 = arith.addf %151, %154 : vector<8x128xf32>
    %156 = math.tanh %155 : vector<8x128xf32>
    %cst_34 = arith.constant 1.000000e+00 : f32
    %157 = vector.broadcast %cst_34 : f32 to vector<8x128xf32>
    %158 = arith.subf %157, %150 : vector<8x128xf32>
    %159 = arith.mulf %158, %156 : vector<8x128xf32>
    %160 = arith.mulf %150, %131 : vector<8x128xf32>
    %161 = arith.addf %159, %160 : vector<8x128xf32>
    %c32 = arith.constant 32 : index
    %c0_35 = arith.constant 0 : index
    %162 = vector.load %arg8[%c32, %c0_35] : memref<64x128xf32, #tpu.memory_space<vmem>>, vector<8x128xf32>
    tpu.vector_store %arg8[%c32, %c0_35], %161 {strides = array<i32>} : memref<64x128xf32, #tpu.memory_space<vmem>>, vector<8x128xf32>,
    %163 = arith.truncf %161 : vector<8x128xf32> to vector<8x128xbf16>
    %cst_36 = arith.constant dense<0.000000e+00> : vector<8x384xf32>
    %164 = tpu.matmul %163, %2, %cst_36 {dimension_numbers = #tpu.dot_dimension_numbers<[1], [0], [0], [1], [0, 0, 1, 1], [], []>} : vector<8x128xbf16>, vector<128x384xbf16>, vector<8x384xf32> -> vector<8x384xf32>
    %165 = vector.extract_strided_slice %10 {offsets = [40, 0], sizes = [8, 128], strides = [1, 1]} : vector<64x384xf32> to vector<8x128xf32>
    %166 = vector.extract_strided_slice %164 {offsets = [0, 0], sizes = [8, 128], strides = [1, 1]} : vector<8x384xf32> to vector<8x128xf32>
    %167 = arith.addf %165, %166 : vector<8x128xf32>
    %168 = arith.negf %167 : vector<8x128xf32>
    %169 = math.exp %168 : vector<8x128xf32>
    %cst_37 = arith.constant 1.000000e+00 : f32
    %170 = vector.broadcast %cst_37 : f32 to vector<8x128xf32>
    %171 = arith.addf %170, %169 : vector<8x128xf32>
    %172 = arith.divf %170, %171 : vector<8x128xf32>
    %173 = vector.extract_strided_slice %10 {offsets = [40, 128], sizes = [8, 128], strides = [1, 1]} : vector<64x384xf32> to vector<8x128xf32>
    %174 = vector.extract_strided_slice %164 {offsets = [0, 128], sizes = [8, 128], strides = [1, 1]} : vector<8x384xf32> to vector<8x128xf32>
    %175 = arith.addf %173, %174 : vector<8x128xf32>
    %176 = arith.negf %175 : vector<8x128xf32>
    %177 = math.exp %176 : vector<8x128xf32>
    %cst_38 = arith.constant 1.000000e+00 : f32
    %178 = vector.broadcast %cst_38 : f32 to vector<8x128xf32>
    %179 = arith.addf %178, %177 : vector<8x128xf32>
    %180 = arith.divf %178, %179 : vector<8x128xf32>
    %181 = vector.extract_strided_slice %10 {offsets = [40, 256], sizes = [8, 128], strides = [1, 1]} : vector<64x384xf32> to vector<8x128xf32>
    %182 = vector.extract_strided_slice %164 {offsets = [0, 256], sizes = [8, 128], strides = [1, 1]} : vector<8x384xf32> to vector<8x128xf32>
    %183 = arith.addf %182, %6 : vector<8x128xf32>
    %184 = arith.mulf %172, %183 : vector<8x128xf32>
    %185 = arith.addf %181, %184 : vector<8x128xf32>
    %186 = math.tanh %185 : vector<8x128xf32>
    %cst_39 = arith.constant 1.000000e+00 : f32
    %187 = vector.broadcast %cst_39 : f32 to vector<8x128xf32>
    %188 = arith.subf %187, %180 : vector<8x128xf32>
    %189 = arith.mulf %188, %186 : vector<8x128xf32>
    %190 = arith.mulf %180, %161 : vector<8x128xf32>
    %191 = arith.addf %189, %190 : vector<8x128xf32>
    %c40 = arith.constant 40 : index
    %c0_40 = arith.constant 0 : index
    %192 = vector.load %arg8[%c40, %c0_40] : memref<64x128xf32, #tpu.memory_space<vmem>>, vector<8x128xf32>
    tpu.vector_store %arg8[%c40, %c0_40], %191 {strides = array<i32>} : memref<64x128xf32, #tpu.memory_space<vmem>>, vector<8x128xf32>,
    %193 = arith.truncf %191 : vector<8x128xf32> to vector<8x128xbf16>
    %cst_41 = arith.constant dense<0.000000e+00> : vector<8x384xf32>
    %194 = tpu.matmul %193, %2, %cst_41 {dimension_numbers = #tpu.dot_dimension_numbers<[1], [0], [0], [1], [0, 0, 1, 1], [], []>} : vector<8x128xbf16>, vector<128x384xbf16>, vector<8x384xf32> -> vector<8x384xf32>
    %195 = vector.extract_strided_slice %10 {offsets = [48, 0], sizes = [8, 128], strides = [1, 1]} : vector<64x384xf32> to vector<8x128xf32>
    %196 = vector.extract_strided_slice %194 {offsets = [0, 0], sizes = [8, 128], strides = [1, 1]} : vector<8x384xf32> to vector<8x128xf32>
    %197 = arith.addf %195, %196 : vector<8x128xf32>
    %198 = arith.negf %197 : vector<8x128xf32>
    %199 = math.exp %198 : vector<8x128xf32>
    %cst_42 = arith.constant 1.000000e+00 : f32
    %200 = vector.broadcast %cst_42 : f32 to vector<8x128xf32>
    %201 = arith.addf %200, %199 : vector<8x128xf32>
    %202 = arith.divf %200, %201 : vector<8x128xf32>
    %203 = vector.extract_strided_slice %10 {offsets = [48, 128], sizes = [8, 128], strides = [1, 1]} : vector<64x384xf32> to vector<8x128xf32>
    %204 = vector.extract_strided_slice %194 {offsets = [0, 128], sizes = [8, 128], strides = [1, 1]} : vector<8x384xf32> to vector<8x128xf32>
    %205 = arith.addf %203, %204 : vector<8x128xf32>
    %206 = arith.negf %205 : vector<8x128xf32>
    %207 = math.exp %206 : vector<8x128xf32>
    %cst_43 = arith.constant 1.000000e+00 : f32
    %208 = vector.broadcast %cst_43 : f32 to vector<8x128xf32>
    %209 = arith.addf %208, %207 : vector<8x128xf32>
    %210 = arith.divf %208, %209 : vector<8x128xf32>
    %211 = vector.extract_strided_slice %10 {offsets = [48, 256], sizes = [8, 128], strides = [1, 1]} : vector<64x384xf32> to vector<8x128xf32>
    %212 = vector.extract_strided_slice %194 {offsets = [0, 256], sizes = [8, 128], strides = [1, 1]} : vector<8x384xf32> to vector<8x128xf32>
    %213 = arith.addf %212, %6 : vector<8x128xf32>
    %214 = arith.mulf %202, %213 : vector<8x128xf32>
    %215 = arith.addf %211, %214 : vector<8x128xf32>
    %216 = math.tanh %215 : vector<8x128xf32>
    %cst_44 = arith.constant 1.000000e+00 : f32
    %217 = vector.broadcast %cst_44 : f32 to vector<8x128xf32>
    %218 = arith.subf %217, %210 : vector<8x128xf32>
    %219 = arith.mulf %218, %216 : vector<8x128xf32>
    %220 = arith.mulf %210, %191 : vector<8x128xf32>
    %221 = arith.addf %219, %220 : vector<8x128xf32>
    %c48 = arith.constant 48 : index
    %c0_45 = arith.constant 0 : index
    %222 = vector.load %arg8[%c48, %c0_45] : memref<64x128xf32, #tpu.memory_space<vmem>>, vector<8x128xf32>
    tpu.vector_store %arg8[%c48, %c0_45], %221 {strides = array<i32>} : memref<64x128xf32, #tpu.memory_space<vmem>>, vector<8x128xf32>,
    %223 = arith.truncf %221 : vector<8x128xf32> to vector<8x128xbf16>
    %cst_46 = arith.constant dense<0.000000e+00> : vector<8x384xf32>
    %224 = tpu.matmul %223, %2, %cst_46 {dimension_numbers = #tpu.dot_dimension_numbers<[1], [0], [0], [1], [0, 0, 1, 1], [], []>} : vector<8x128xbf16>, vector<128x384xbf16>, vector<8x384xf32> -> vector<8x384xf32>
    %225 = vector.extract_strided_slice %10 {offsets = [56, 0], sizes = [8, 128], strides = [1, 1]} : vector<64x384xf32> to vector<8x128xf32>
    %226 = vector.extract_strided_slice %224 {offsets = [0, 0], sizes = [8, 128], strides = [1, 1]} : vector<8x384xf32> to vector<8x128xf32>
    %227 = arith.addf %225, %226 : vector<8x128xf32>
    %228 = arith.negf %227 : vector<8x128xf32>
    %229 = math.exp %228 : vector<8x128xf32>
    %cst_47 = arith.constant 1.000000e+00 : f32
    %230 = vector.broadcast %cst_47 : f32 to vector<8x128xf32>
    %231 = arith.addf %230, %229 : vector<8x128xf32>
    %232 = arith.divf %230, %231 : vector<8x128xf32>
    %233 = vector.extract_strided_slice %10 {offsets = [56, 128], sizes = [8, 128], strides = [1, 1]} : vector<64x384xf32> to vector<8x128xf32>
    %234 = vector.extract_strided_slice %224 {offsets = [0, 128], sizes = [8, 128], strides = [1, 1]} : vector<8x384xf32> to vector<8x128xf32>
    %235 = arith.addf %233, %234 : vector<8x128xf32>
    %236 = arith.negf %235 : vector<8x128xf32>
    %237 = math.exp %236 : vector<8x128xf32>
    %cst_48 = arith.constant 1.000000e+00 : f32
    %238 = vector.broadcast %cst_48 : f32 to vector<8x128xf32>
    %239 = arith.addf %238, %237 : vector<8x128xf32>
    %240 = arith.divf %238, %239 : vector<8x128xf32>
    %241 = vector.extract_strided_slice %10 {offsets = [56, 256], sizes = [8, 128], strides = [1, 1]} : vector<64x384xf32> to vector<8x128xf32>
    %242 = vector.extract_strided_slice %224 {offsets = [0, 256], sizes = [8, 128], strides = [1, 1]} : vector<8x384xf32> to vector<8x128xf32>
    %243 = arith.addf %242, %6 : vector<8x128xf32>
    %244 = arith.mulf %232, %243 : vector<8x128xf32>
    %245 = arith.addf %241, %244 : vector<8x128xf32>
    %246 = math.tanh %245 : vector<8x128xf32>
    %cst_49 = arith.constant 1.000000e+00 : f32
    %247 = vector.broadcast %cst_49 : f32 to vector<8x128xf32>
    %248 = arith.subf %247, %240 : vector<8x128xf32>
    %249 = arith.mulf %248, %246 : vector<8x128xf32>
    %250 = arith.mulf %240, %221 : vector<8x128xf32>
    %251 = arith.addf %249, %250 : vector<8x128xf32>
    %c56 = arith.constant 56 : index
    %c0_50 = arith.constant 0 : index
    %252 = vector.load %arg8[%c56, %c0_50] : memref<64x128xf32, #tpu.memory_space<vmem>>, vector<8x128xf32>
    tpu.vector_store %arg8[%c56, %c0_50], %251 {strides = array<i32>} : memref<64x128xf32, #tpu.memory_space<vmem>>, vector<8x128xf32>,
    %c0_51 = arith.constant 0 : index
    %c0_52 = arith.constant 0 : index
    %c0_53 = arith.constant 0 : index
    %253 = vector.load %arg7[%c0_51, %c0_52, %c0_53] : memref<2x8x128xf32, #tpu.memory_space<vmem>>, vector<1x8x128xf32>
    %254 = vector.shape_cast %253 : vector<1x8x128xf32> to vector<8x128xf32>
    %255 = vector.shape_cast %251 : vector<8x128xf32> to vector<1x8x128xf32>
    tpu.vector_store %arg7[%c0_51, %c0_52, %c0_53], %255 {strides = array<i32>} : memref<2x8x128xf32, #tpu.memory_space<vmem>>, vector<1x8x128xf32>,
    %c0_54 = arith.constant 0 : index
    %c0_55 = arith.constant 0 : index
    %256 = vector.load %arg8[%c0_54, %c0_55] : memref<64x128xf32, #tpu.memory_space<vmem>>, vector<64x128xf32>
    %c256 = arith.constant 256 : index
    %c0_56 = arith.constant 0 : index
    %257 = vector.load %arg3[%c256, %c0_56] : memref<512x384xbf16, #tpu.memory_space<vmem>>, vector<128x384xbf16>
    %c384 = arith.constant 384 : index
    %c0_57 = arith.constant 0 : index
    %258 = vector.load %arg3[%c384, %c0_57] : memref<512x384xbf16, #tpu.memory_space<vmem>>, vector<128x384xbf16>
    %c2 = arith.constant 2 : index
    %c0_58 = arith.constant 0 : index
    %259 = vector.load %arg4[%c2, %c0_58] : memref<8x384xf32, #tpu.memory_space<vmem>>, vector<1x384xf32>
    %c3 = arith.constant 3 : index
    %c0_59 = arith.constant 0 : index
    %260 = vector.load %arg4[%c3, %c0_59] : memref<8x384xf32, #tpu.memory_space<vmem>>, vector<1x128xf32>
    %261 = vector.shape_cast %260 : vector<1x128xf32> to vector<1x128xf32>
    %262 = vector.broadcast %261 : vector<1x128xf32> to vector<8x128xf32>
    %263 = arith.truncf %256 : vector<64x128xf32> to vector<64x128xbf16>
    %cst_60 = arith.constant dense<0.000000e+00> : vector<64x384xf32>
    %264 = tpu.matmul %263, %257, %cst_60 {dimension_numbers = #tpu.dot_dimension_numbers<[1], [0], [0], [1], [0, 0, 1, 1], [], []>} : vector<64x128xbf16>, vector<128x384xbf16>, vector<64x384xf32> -> vector<64x384xf32>
    %265 = vector.broadcast %259 : vector<1x384xf32> to vector<64x384xf32>
    %266 = arith.addf %264, %265 : vector<64x384xf32>
    %c1_61 = arith.constant 1 : index
    %c0_62 = arith.constant 0 : index
    %c0_63 = arith.constant 0 : index
    %267 = vector.load %arg2[%c1_61, %c0_62, %c0_63] : memref<2x8x128xf32, #tpu.memory_space<vmem>>, vector<1x8x128xf32>
    %268 = vector.shape_cast %267 : vector<1x8x128xf32> to vector<8x128xf32>
    %269 = arith.truncf %268 : vector<8x128xf32> to vector<8x128xbf16>
    %cst_64 = arith.constant dense<0.000000e+00> : vector<8x384xf32>
    %270 = tpu.matmul %269, %258, %cst_64 {dimension_numbers = #tpu.dot_dimension_numbers<[1], [0], [0], [1], [0, 0, 1, 1], [], []>} : vector<8x128xbf16>, vector<128x384xbf16>, vector<8x384xf32> -> vector<8x384xf32>
    %271 = vector.extract_strided_slice %266 {offsets = [0, 0], sizes = [8, 128], strides = [1, 1]} : vector<64x384xf32> to vector<8x128xf32>
    %272 = vector.extract_strided_slice %270 {offsets = [0, 0], sizes = [8, 128], strides = [1, 1]} : vector<8x384xf32> to vector<8x128xf32>
    %273 = arith.addf %271, %272 : vector<8x128xf32>
    %274 = arith.negf %273 : vector<8x128xf32>
    %275 = math.exp %274 : vector<8x128xf32>
    %cst_65 = arith.constant 1.000000e+00 : f32
    %276 = vector.broadcast %cst_65 : f32 to vector<8x128xf32>
    %277 = arith.addf %276, %275 : vector<8x128xf32>
    %278 = arith.divf %276, %277 : vector<8x128xf32>
    %279 = vector.extract_strided_slice %266 {offsets = [0, 128], sizes = [8, 128], strides = [1, 1]} : vector<64x384xf32> to vector<8x128xf32>
    %280 = vector.extract_strided_slice %270 {offsets = [0, 128], sizes = [8, 128], strides = [1, 1]} : vector<8x384xf32> to vector<8x128xf32>
    %281 = arith.addf %279, %280 : vector<8x128xf32>
    %282 = arith.negf %281 : vector<8x128xf32>
    %283 = math.exp %282 : vector<8x128xf32>
    %cst_66 = arith.constant 1.000000e+00 : f32
    %284 = vector.broadcast %cst_66 : f32 to vector<8x128xf32>
    %285 = arith.addf %284, %283 : vector<8x128xf32>
    %286 = arith.divf %284, %285 : vector<8x128xf32>
    %287 = vector.extract_strided_slice %266 {offsets = [0, 256], sizes = [8, 128], strides = [1, 1]} : vector<64x384xf32> to vector<8x128xf32>
    %288 = vector.extract_strided_slice %270 {offsets = [0, 256], sizes = [8, 128], strides = [1, 1]} : vector<8x384xf32> to vector<8x128xf32>
    %289 = arith.addf %288, %262 : vector<8x128xf32>
    %290 = arith.mulf %278, %289 : vector<8x128xf32>
    %291 = arith.addf %287, %290 : vector<8x128xf32>
    %292 = math.tanh %291 : vector<8x128xf32>
    %cst_67 = arith.constant 1.000000e+00 : f32
    %293 = vector.broadcast %cst_67 : f32 to vector<8x128xf32>
    %294 = arith.subf %293, %286 : vector<8x128xf32>
    %295 = arith.mulf %294, %292 : vector<8x128xf32>
    %296 = arith.mulf %286, %268 : vector<8x128xf32>
    %297 = arith.addf %295, %296 : vector<8x128xf32>
    %c0_68 = arith.constant 0 : index
    %c0_69 = arith.constant 0 : index
    %298 = vector.load %arg8[%c0_68, %c0_69] : memref<64x128xf32, #tpu.memory_space<vmem>>, vector<8x128xf32>
    tpu.vector_store %arg8[%c0_68, %c0_69], %297 {strides = array<i32>} : memref<64x128xf32, #tpu.memory_space<vmem>>, vector<8x128xf32>,
    %299 = arith.truncf %297 : vector<8x128xf32> to vector<8x128xbf16>
    %cst_70 = arith.constant dense<0.000000e+00> : vector<8x384xf32>
    %300 = tpu.matmul %299, %258, %cst_70 {dimension_numbers = #tpu.dot_dimension_numbers<[1], [0], [0], [1], [0, 0, 1, 1], [], []>} : vector<8x128xbf16>, vector<128x384xbf16>, vector<8x384xf32> -> vector<8x384xf32>
    %301 = vector.extract_strided_slice %266 {offsets = [8, 0], sizes = [8, 128], strides = [1, 1]} : vector<64x384xf32> to vector<8x128xf32>
    %302 = vector.extract_strided_slice %300 {offsets = [0, 0], sizes = [8, 128], strides = [1, 1]} : vector<8x384xf32> to vector<8x128xf32>
    %303 = arith.addf %301, %302 : vector<8x128xf32>
    %304 = arith.negf %303 : vector<8x128xf32>
    %305 = math.exp %304 : vector<8x128xf32>
    %cst_71 = arith.constant 1.000000e+00 : f32
    %306 = vector.broadcast %cst_71 : f32 to vector<8x128xf32>
    %307 = arith.addf %306, %305 : vector<8x128xf32>
    %308 = arith.divf %306, %307 : vector<8x128xf32>
    %309 = vector.extract_strided_slice %266 {offsets = [8, 128], sizes = [8, 128], strides = [1, 1]} : vector<64x384xf32> to vector<8x128xf32>
    %310 = vector.extract_strided_slice %300 {offsets = [0, 128], sizes = [8, 128], strides = [1, 1]} : vector<8x384xf32> to vector<8x128xf32>
    %311 = arith.addf %309, %310 : vector<8x128xf32>
    %312 = arith.negf %311 : vector<8x128xf32>
    %313 = math.exp %312 : vector<8x128xf32>
    %cst_72 = arith.constant 1.000000e+00 : f32
    %314 = vector.broadcast %cst_72 : f32 to vector<8x128xf32>
    %315 = arith.addf %314, %313 : vector<8x128xf32>
    %316 = arith.divf %314, %315 : vector<8x128xf32>
    %317 = vector.extract_strided_slice %266 {offsets = [8, 256], sizes = [8, 128], strides = [1, 1]} : vector<64x384xf32> to vector<8x128xf32>
    %318 = vector.extract_strided_slice %300 {offsets = [0, 256], sizes = [8, 128], strides = [1, 1]} : vector<8x384xf32> to vector<8x128xf32>
    %319 = arith.addf %318, %262 : vector<8x128xf32>
    %320 = arith.mulf %308, %319 : vector<8x128xf32>
    %321 = arith.addf %317, %320 : vector<8x128xf32>
    %322 = math.tanh %321 : vector<8x128xf32>
    %cst_73 = arith.constant 1.000000e+00 : f32
    %323 = vector.broadcast %cst_73 : f32 to vector<8x128xf32>
    %324 = arith.subf %323, %316 : vector<8x128xf32>
    %325 = arith.mulf %324, %322 : vector<8x128xf32>
    %326 = arith.mulf %316, %297 : vector<8x128xf32>
    %327 = arith.addf %325, %326 : vector<8x128xf32>
    %c8_74 = arith.constant 8 : index
    %c0_75 = arith.constant 0 : index
    %328 = vector.load %arg8[%c8_74, %c0_75] : memref<64x128xf32, #tpu.memory_space<vmem>>, vector<8x128xf32>
    tpu.vector_store %arg8[%c8_74, %c0_75], %327 {strides = array<i32>} : memref<64x128xf32, #tpu.memory_space<vmem>>, vector<8x128xf32>,
    %329 = arith.truncf %327 : vector<8x128xf32> to vector<8x128xbf16>
    %cst_76 = arith.constant dense<0.000000e+00> : vector<8x384xf32>
    %330 = tpu.matmul %329, %258, %cst_76 {dimension_numbers = #tpu.dot_dimension_numbers<[1], [0], [0], [1], [0, 0, 1, 1], [], []>} : vector<8x128xbf16>, vector<128x384xbf16>, vector<8x384xf32> -> vector<8x384xf32>
    %331 = vector.extract_strided_slice %266 {offsets = [16, 0], sizes = [8, 128], strides = [1, 1]} : vector<64x384xf32> to vector<8x128xf32>
    %332 = vector.extract_strided_slice %330 {offsets = [0, 0], sizes = [8, 128], strides = [1, 1]} : vector<8x384xf32> to vector<8x128xf32>
    %333 = arith.addf %331, %332 : vector<8x128xf32>
    %334 = arith.negf %333 : vector<8x128xf32>
    %335 = math.exp %334 : vector<8x128xf32>
    %cst_77 = arith.constant 1.000000e+00 : f32
    %336 = vector.broadcast %cst_77 : f32 to vector<8x128xf32>
    %337 = arith.addf %336, %335 : vector<8x128xf32>
    %338 = arith.divf %336, %337 : vector<8x128xf32>
    %339 = vector.extract_strided_slice %266 {offsets = [16, 128], sizes = [8, 128], strides = [1, 1]} : vector<64x384xf32> to vector<8x128xf32>
    %340 = vector.extract_strided_slice %330 {offsets = [0, 128], sizes = [8, 128], strides = [1, 1]} : vector<8x384xf32> to vector<8x128xf32>
    %341 = arith.addf %339, %340 : vector<8x128xf32>
    %342 = arith.negf %341 : vector<8x128xf32>
    %343 = math.exp %342 : vector<8x128xf32>
    %cst_78 = arith.constant 1.000000e+00 : f32
    %344 = vector.broadcast %cst_78 : f32 to vector<8x128xf32>
    %345 = arith.addf %344, %343 : vector<8x128xf32>
    %346 = arith.divf %344, %345 : vector<8x128xf32>
    %347 = vector.extract_strided_slice %266 {offsets = [16, 256], sizes = [8, 128], strides = [1, 1]} : vector<64x384xf32> to vector<8x128xf32>
    %348 = vector.extract_strided_slice %330 {offsets = [0, 256], sizes = [8, 128], strides = [1, 1]} : vector<8x384xf32> to vector<8x128xf32>
    %349 = arith.addf %348, %262 : vector<8x128xf32>
    %350 = arith.mulf %338, %349 : vector<8x128xf32>
    %351 = arith.addf %347, %350 : vector<8x128xf32>
    %352 = math.tanh %351 : vector<8x128xf32>
    %cst_79 = arith.constant 1.000000e+00 : f32
    %353 = vector.broadcast %cst_79 : f32 to vector<8x128xf32>
    %354 = arith.subf %353, %346 : vector<8x128xf32>
    %355 = arith.mulf %354, %352 : vector<8x128xf32>
    %356 = arith.mulf %346, %327 : vector<8x128xf32>
    %357 = arith.addf %355, %356 : vector<8x128xf32>
    %c16_80 = arith.constant 16 : index
    %c0_81 = arith.constant 0 : index
    %358 = vector.load %arg8[%c16_80, %c0_81] : memref<64x128xf32, #tpu.memory_space<vmem>>, vector<8x128xf32>
    tpu.vector_store %arg8[%c16_80, %c0_81], %357 {strides = array<i32>} : memref<64x128xf32, #tpu.memory_space<vmem>>, vector<8x128xf32>,
    %359 = arith.truncf %357 : vector<8x128xf32> to vector<8x128xbf16>
    %cst_82 = arith.constant dense<0.000000e+00> : vector<8x384xf32>
    %360 = tpu.matmul %359, %258, %cst_82 {dimension_numbers = #tpu.dot_dimension_numbers<[1], [0], [0], [1], [0, 0, 1, 1], [], []>} : vector<8x128xbf16>, vector<128x384xbf16>, vector<8x384xf32> -> vector<8x384xf32>
    %361 = vector.extract_strided_slice %266 {offsets = [24, 0], sizes = [8, 128], strides = [1, 1]} : vector<64x384xf32> to vector<8x128xf32>
    %362 = vector.extract_strided_slice %360 {offsets = [0, 0], sizes = [8, 128], strides = [1, 1]} : vector<8x384xf32> to vector<8x128xf32>
    %363 = arith.addf %361, %362 : vector<8x128xf32>
    %364 = arith.negf %363 : vector<8x128xf32>
    %365 = math.exp %364 : vector<8x128xf32>
    %cst_83 = arith.constant 1.000000e+00 : f32
    %366 = vector.broadcast %cst_83 : f32 to vector<8x128xf32>
    %367 = arith.addf %366, %365 : vector<8x128xf32>
    %368 = arith.divf %366, %367 : vector<8x128xf32>
    %369 = vector.extract_strided_slice %266 {offsets = [24, 128], sizes = [8, 128], strides = [1, 1]} : vector<64x384xf32> to vector<8x128xf32>
    %370 = vector.extract_strided_slice %360 {offsets = [0, 128], sizes = [8, 128], strides = [1, 1]} : vector<8x384xf32> to vector<8x128xf32>
    %371 = arith.addf %369, %370 : vector<8x128xf32>
    %372 = arith.negf %371 : vector<8x128xf32>
    %373 = math.exp %372 : vector<8x128xf32>
    %cst_84 = arith.constant 1.000000e+00 : f32
    %374 = vector.broadcast %cst_84 : f32 to vector<8x128xf32>
    %375 = arith.addf %374, %373 : vector<8x128xf32>
    %376 = arith.divf %374, %375 : vector<8x128xf32>
    %377 = vector.extract_strided_slice %266 {offsets = [24, 256], sizes = [8, 128], strides = [1, 1]} : vector<64x384xf32> to vector<8x128xf32>
    %378 = vector.extract_strided_slice %360 {offsets = [0, 256], sizes = [8, 128], strides = [1, 1]} : vector<8x384xf32> to vector<8x128xf32>
    %379 = arith.addf %378, %262 : vector<8x128xf32>
    %380 = arith.mulf %368, %379 : vector<8x128xf32>
    %381 = arith.addf %377, %380 : vector<8x128xf32>
    %382 = math.tanh %381 : vector<8x128xf32>
    %cst_85 = arith.constant 1.000000e+00 : f32
    %383 = vector.broadcast %cst_85 : f32 to vector<8x128xf32>
    %384 = arith.subf %383, %376 : vector<8x128xf32>
    %385 = arith.mulf %384, %382 : vector<8x128xf32>
    %386 = arith.mulf %376, %357 : vector<8x128xf32>
    %387 = arith.addf %385, %386 : vector<8x128xf32>
    %c24_86 = arith.constant 24 : index
    %c0_87 = arith.constant 0 : index
    %388 = vector.load %arg8[%c24_86, %c0_87] : memref<64x128xf32, #tpu.memory_space<vmem>>, vector<8x128xf32>
    tpu.vector_store %arg8[%c24_86, %c0_87], %387 {strides = array<i32>} : memref<64x128xf32, #tpu.memory_space<vmem>>, vector<8x128xf32>,
    %389 = arith.truncf %387 : vector<8x128xf32> to vector<8x128xbf16>
    %cst_88 = arith.constant dense<0.000000e+00> : vector<8x384xf32>
    %390 = tpu.matmul %389, %258, %cst_88 {dimension_numbers = #tpu.dot_dimension_numbers<[1], [0], [0], [1], [0, 0, 1, 1], [], []>} : vector<8x128xbf16>, vector<128x384xbf16>, vector<8x384xf32> -> vector<8x384xf32>
    %391 = vector.extract_strided_slice %266 {offsets = [32, 0], sizes = [8, 128], strides = [1, 1]} : vector<64x384xf32> to vector<8x128xf32>
    %392 = vector.extract_strided_slice %390 {offsets = [0, 0], sizes = [8, 128], strides = [1, 1]} : vector<8x384xf32> to vector<8x128xf32>
    %393 = arith.addf %391, %392 : vector<8x128xf32>
    %394 = arith.negf %393 : vector<8x128xf32>
    %395 = math.exp %394 : vector<8x128xf32>
    %cst_89 = arith.constant 1.000000e+00 : f32
    %396 = vector.broadcast %cst_89 : f32 to vector<8x128xf32>
    %397 = arith.addf %396, %395 : vector<8x128xf32>
    %398 = arith.divf %396, %397 : vector<8x128xf32>
    %399 = vector.extract_strided_slice %266 {offsets = [32, 128], sizes = [8, 128], strides = [1, 1]} : vector<64x384xf32> to vector<8x128xf32>
    %400 = vector.extract_strided_slice %390 {offsets = [0, 128], sizes = [8, 128], strides = [1, 1]} : vector<8x384xf32> to vector<8x128xf32>
    %401 = arith.addf %399, %400 : vector<8x128xf32>
    %402 = arith.negf %401 : vector<8x128xf32>
    %403 = math.exp %402 : vector<8x128xf32>
    %cst_90 = arith.constant 1.000000e+00 : f32
    %404 = vector.broadcast %cst_90 : f32 to vector<8x128xf32>
    %405 = arith.addf %404, %403 : vector<8x128xf32>
    %406 = arith.divf %404, %405 : vector<8x128xf32>
    %407 = vector.extract_strided_slice %266 {offsets = [32, 256], sizes = [8, 128], strides = [1, 1]} : vector<64x384xf32> to vector<8x128xf32>
    %408 = vector.extract_strided_slice %390 {offsets = [0, 256], sizes = [8, 128], strides = [1, 1]} : vector<8x384xf32> to vector<8x128xf32>
    %409 = arith.addf %408, %262 : vector<8x128xf32>
    %410 = arith.mulf %398, %409 : vector<8x128xf32>
    %411 = arith.addf %407, %410 : vector<8x128xf32>
    %412 = math.tanh %411 : vector<8x128xf32>
    %cst_91 = arith.constant 1.000000e+00 : f32
    %413 = vector.broadcast %cst_91 : f32 to vector<8x128xf32>
    %414 = arith.subf %413, %406 : vector<8x128xf32>
    %415 = arith.mulf %414, %412 : vector<8x128xf32>
    %416 = arith.mulf %406, %387 : vector<8x128xf32>
    %417 = arith.addf %415, %416 : vector<8x128xf32>
    %c32_92 = arith.constant 32 : index
    %c0_93 = arith.constant 0 : index
    %418 = vector.load %arg8[%c32_92, %c0_93] : memref<64x128xf32, #tpu.memory_space<vmem>>, vector<8x128xf32>
    tpu.vector_store %arg8[%c32_92, %c0_93], %417 {strides = array<i32>} : memref<64x128xf32, #tpu.memory_space<vmem>>, vector<8x128xf32>,
    %419 = arith.truncf %417 : vector<8x128xf32> to vector<8x128xbf16>
    %cst_94 = arith.constant dense<0.000000e+00> : vector<8x384xf32>
    %420 = tpu.matmul %419, %258, %cst_94 {dimension_numbers = #tpu.dot_dimension_numbers<[1], [0], [0], [1], [0, 0, 1, 1], [], []>} : vector<8x128xbf16>, vector<128x384xbf16>, vector<8x384xf32> -> vector<8x384xf32>
    %421 = vector.extract_strided_slice %266 {offsets = [40, 0], sizes = [8, 128], strides = [1, 1]} : vector<64x384xf32> to vector<8x128xf32>
    %422 = vector.extract_strided_slice %420 {offsets = [0, 0], sizes = [8, 128], strides = [1, 1]} : vector<8x384xf32> to vector<8x128xf32>
    %423 = arith.addf %421, %422 : vector<8x128xf32>
    %424 = arith.negf %423 : vector<8x128xf32>
    %425 = math.exp %424 : vector<8x128xf32>
    %cst_95 = arith.constant 1.000000e+00 : f32
    %426 = vector.broadcast %cst_95 : f32 to vector<8x128xf32>
    %427 = arith.addf %426, %425 : vector<8x128xf32>
    %428 = arith.divf %426, %427 : vector<8x128xf32>
    %429 = vector.extract_strided_slice %266 {offsets = [40, 128], sizes = [8, 128], strides = [1, 1]} : vector<64x384xf32> to vector<8x128xf32>
    %430 = vector.extract_strided_slice %420 {offsets = [0, 128], sizes = [8, 128], strides = [1, 1]} : vector<8x384xf32> to vector<8x128xf32>
    %431 = arith.addf %429, %430 : vector<8x128xf32>
    %432 = arith.negf %431 : vector<8x128xf32>
    %433 = math.exp %432 : vector<8x128xf32>
    %cst_96 = arith.constant 1.000000e+00 : f32
    %434 = vector.broadcast %cst_96 : f32 to vector<8x128xf32>
    %435 = arith.addf %434, %433 : vector<8x128xf32>
    %436 = arith.divf %434, %435 : vector<8x128xf32>
    %437 = vector.extract_strided_slice %266 {offsets = [40, 256], sizes = [8, 128], strides = [1, 1]} : vector<64x384xf32> to vector<8x128xf32>
    %438 = vector.extract_strided_slice %420 {offsets = [0, 256], sizes = [8, 128], strides = [1, 1]} : vector<8x384xf32> to vector<8x128xf32>
    %439 = arith.addf %438, %262 : vector<8x128xf32>
    %440 = arith.mulf %428, %439 : vector<8x128xf32>
    %441 = arith.addf %437, %440 : vector<8x128xf32>
    %442 = math.tanh %441 : vector<8x128xf32>
    %cst_97 = arith.constant 1.000000e+00 : f32
    %443 = vector.broadcast %cst_97 : f32 to vector<8x128xf32>
    %444 = arith.subf %443, %436 : vector<8x128xf32>
    %445 = arith.mulf %444, %442 : vector<8x128xf32>
    %446 = arith.mulf %436, %417 : vector<8x128xf32>
    %447 = arith.addf %445, %446 : vector<8x128xf32>
    %c40_98 = arith.constant 40 : index
    %c0_99 = arith.constant 0 : index
    %448 = vector.load %arg8[%c40_98, %c0_99] : memref<64x128xf32, #tpu.memory_space<vmem>>, vector<8x128xf32>
    tpu.vector_store %arg8[%c40_98, %c0_99], %447 {strides = array<i32>} : memref<64x128xf32, #tpu.memory_space<vmem>>, vector<8x128xf32>,
    %449 = arith.truncf %447 : vector<8x128xf32> to vector<8x128xbf16>
    %cst_100 = arith.constant dense<0.000000e+00> : vector<8x384xf32>
    %450 = tpu.matmul %449, %258, %cst_100 {dimension_numbers = #tpu.dot_dimension_numbers<[1], [0], [0], [1], [0, 0, 1, 1], [], []>} : vector<8x128xbf16>, vector<128x384xbf16>, vector<8x384xf32> -> vector<8x384xf32>
    %451 = vector.extract_strided_slice %266 {offsets = [48, 0], sizes = [8, 128], strides = [1, 1]} : vector<64x384xf32> to vector<8x128xf32>
    %452 = vector.extract_strided_slice %450 {offsets = [0, 0], sizes = [8, 128], strides = [1, 1]} : vector<8x384xf32> to vector<8x128xf32>
    %453 = arith.addf %451, %452 : vector<8x128xf32>
    %454 = arith.negf %453 : vector<8x128xf32>
    %455 = math.exp %454 : vector<8x128xf32>
    %cst_101 = arith.constant 1.000000e+00 : f32
    %456 = vector.broadcast %cst_101 : f32 to vector<8x128xf32>
    %457 = arith.addf %456, %455 : vector<8x128xf32>
    %458 = arith.divf %456, %457 : vector<8x128xf32>
    %459 = vector.extract_strided_slice %266 {offsets = [48, 128], sizes = [8, 128], strides = [1, 1]} : vector<64x384xf32> to vector<8x128xf32>
    %460 = vector.extract_strided_slice %450 {offsets = [0, 128], sizes = [8, 128], strides = [1, 1]} : vector<8x384xf32> to vector<8x128xf32>
    %461 = arith.addf %459, %460 : vector<8x128xf32>
    %462 = arith.negf %461 : vector<8x128xf32>
    %463 = math.exp %462 : vector<8x128xf32>
    %cst_102 = arith.constant 1.000000e+00 : f32
    %464 = vector.broadcast %cst_102 : f32 to vector<8x128xf32>
    %465 = arith.addf %464, %463 : vector<8x128xf32>
    %466 = arith.divf %464, %465 : vector<8x128xf32>
    %467 = vector.extract_strided_slice %266 {offsets = [48, 256], sizes = [8, 128], strides = [1, 1]} : vector<64x384xf32> to vector<8x128xf32>
    %468 = vector.extract_strided_slice %450 {offsets = [0, 256], sizes = [8, 128], strides = [1, 1]} : vector<8x384xf32> to vector<8x128xf32>
    %469 = arith.addf %468, %262 : vector<8x128xf32>
    %470 = arith.mulf %458, %469 : vector<8x128xf32>
    %471 = arith.addf %467, %470 : vector<8x128xf32>
    %472 = math.tanh %471 : vector<8x128xf32>
    %cst_103 = arith.constant 1.000000e+00 : f32
    %473 = vector.broadcast %cst_103 : f32 to vector<8x128xf32>
    %474 = arith.subf %473, %466 : vector<8x128xf32>
    %475 = arith.mulf %474, %472 : vector<8x128xf32>
    %476 = arith.mulf %466, %447 : vector<8x128xf32>
    %477 = arith.addf %475, %476 : vector<8x128xf32>
    %c48_104 = arith.constant 48 : index
    %c0_105 = arith.constant 0 : index
    %478 = vector.load %arg8[%c48_104, %c0_105] : memref<64x128xf32, #tpu.memory_space<vmem>>, vector<8x128xf32>
    tpu.vector_store %arg8[%c48_104, %c0_105], %477 {strides = array<i32>} : memref<64x128xf32, #tpu.memory_space<vmem>>, vector<8x128xf32>,
    %479 = arith.truncf %477 : vector<8x128xf32> to vector<8x128xbf16>
    %cst_106 = arith.constant dense<0.000000e+00> : vector<8x384xf32>
    %480 = tpu.matmul %479, %258, %cst_106 {dimension_numbers = #tpu.dot_dimension_numbers<[1], [0], [0], [1], [0, 0, 1, 1], [], []>} : vector<8x128xbf16>, vector<128x384xbf16>, vector<8x384xf32> -> vector<8x384xf32>
    %481 = vector.extract_strided_slice %266 {offsets = [56, 0], sizes = [8, 128], strides = [1, 1]} : vector<64x384xf32> to vector<8x128xf32>
    %482 = vector.extract_strided_slice %480 {offsets = [0, 0], sizes = [8, 128], strides = [1, 1]} : vector<8x384xf32> to vector<8x128xf32>
    %483 = arith.addf %481, %482 : vector<8x128xf32>
    %484 = arith.negf %483 : vector<8x128xf32>
    %485 = math.exp %484 : vector<8x128xf32>
    %cst_107 = arith.constant 1.000000e+00 : f32
    %486 = vector.broadcast %cst_107 : f32 to vector<8x128xf32>
    %487 = arith.addf %486, %485 : vector<8x128xf32>
    %488 = arith.divf %486, %487 : vector<8x128xf32>
    %489 = vector.extract_strided_slice %266 {offsets = [56, 128], sizes = [8, 128], strides = [1, 1]} : vector<64x384xf32> to vector<8x128xf32>
    %490 = vector.extract_strided_slice %480 {offsets = [0, 128], sizes = [8, 128], strides = [1, 1]} : vector<8x384xf32> to vector<8x128xf32>
    %491 = arith.addf %489, %490 : vector<8x128xf32>
    %492 = arith.negf %491 : vector<8x128xf32>
    %493 = math.exp %492 : vector<8x128xf32>
    %cst_108 = arith.constant 1.000000e+00 : f32
    %494 = vector.broadcast %cst_108 : f32 to vector<8x128xf32>
    %495 = arith.addf %494, %493 : vector<8x128xf32>
    %496 = arith.divf %494, %495 : vector<8x128xf32>
    %497 = vector.extract_strided_slice %266 {offsets = [56, 256], sizes = [8, 128], strides = [1, 1]} : vector<64x384xf32> to vector<8x128xf32>
    %498 = vector.extract_strided_slice %480 {offsets = [0, 256], sizes = [8, 128], strides = [1, 1]} : vector<8x384xf32> to vector<8x128xf32>
    %499 = arith.addf %498, %262 : vector<8x128xf32>
    %500 = arith.mulf %488, %499 : vector<8x128xf32>
    %501 = arith.addf %497, %500 : vector<8x128xf32>
    %502 = math.tanh %501 : vector<8x128xf32>
    %cst_109 = arith.constant 1.000000e+00 : f32
    %503 = vector.broadcast %cst_109 : f32 to vector<8x128xf32>
    %504 = arith.subf %503, %496 : vector<8x128xf32>
    %505 = arith.mulf %504, %502 : vector<8x128xf32>
    %506 = arith.mulf %496, %477 : vector<8x128xf32>
    %507 = arith.addf %505, %506 : vector<8x128xf32>
    %c56_110 = arith.constant 56 : index
    %c0_111 = arith.constant 0 : index
    %508 = vector.load %arg8[%c56_110, %c0_111] : memref<64x128xf32, #tpu.memory_space<vmem>>, vector<8x128xf32>
    tpu.vector_store %arg8[%c56_110, %c0_111], %507 {strides = array<i32>} : memref<64x128xf32, #tpu.memory_space<vmem>>, vector<8x128xf32>,
    %c1_112 = arith.constant 1 : index
    %c0_113 = arith.constant 0 : index
    %c0_114 = arith.constant 0 : index
    %509 = vector.load %arg7[%c1_112, %c0_113, %c0_114] : memref<2x8x128xf32, #tpu.memory_space<vmem>>, vector<1x8x128xf32>
    %510 = vector.shape_cast %509 : vector<1x8x128xf32> to vector<8x128xf32>
    %511 = vector.shape_cast %507 : vector<8x128xf32> to vector<1x8x128xf32>
    tpu.vector_store %arg7[%c1_112, %c0_113, %c0_114], %511 {strides = array<i32>} : memref<2x8x128xf32, #tpu.memory_space<vmem>>, vector<1x8x128xf32>,
    %c0_115 = arith.constant 0 : index
    %c0_116 = arith.constant 0 : index
    %512 = vector.load %arg8[%c0_115, %c0_116] : memref<64x128xf32, #tpu.memory_space<vmem>>, vector<64x128xf32>
    %c4 = arith.constant 4 : index
    %c0_117 = arith.constant 0 : index
    %513 = vector.load %arg4[%c4, %c0_117] : memref<8x384xf32, #tpu.memory_space<vmem>>, vector<1x128xf32>
    %c0_118 = arith.constant 0 : index
    %c0_119 = arith.constant 0 : index
    %514 = vector.load %arg5[%c0_118, %c0_119] : memref<128x128xf32, #tpu.memory_space<vmem>>, vector<128x128xf32>
    %cst_120 = arith.constant dense<0.000000e+00> : vector<64x128xf32>
    %515 = tpu.matmul %512, %514, %cst_120 {dimension_numbers = #tpu.dot_dimension_numbers<[1], [0], [0], [1], [0, 0, 1, 1], [], []>} : vector<64x128xf32>, vector<128x128xf32>, vector<64x128xf32> -> vector<64x128xf32>
    %516 = vector.broadcast %513 : vector<1x128xf32> to vector<64x128xf32>
    %517 = arith.addf %515, %516 : vector<64x128xf32>
    %c0_121 = arith.constant 0 : index
    %c0_122 = arith.constant 0 : index
    %518 = vector.load %arg6[%c0_121, %c0_122] : memref<64x128xf32, #tpu.memory_space<vmem>>, vector<64x128xf32>
    tpu.vector_store %arg6[%c0_121, %c0_122], %517 {strides = array<i32>} : memref<64x128xf32, #tpu.memory_space<vmem>>, vector<64x128xf32>,
    return
  }
  func.func @transform_0(%arg0: i32) -> (i32, i32) {
    %c0_i32 = arith.constant 0 : i32
    %c0_i32_0 = arith.constant 0 : i32
    %c0_i32_1 = arith.constant 0 : i32
    return %c0_i32, %c0_i32_0 : i32, i32
  }
  func.func @transform_1(%arg0: i32) -> (i32, i32, i32) {
    %c0_i32 = arith.constant 0 : i32
    %c0_i32_0 = arith.constant 0 : i32
    %c0_i32_1 = arith.constant 0 : i32
    %c0_i32_2 = arith.constant 0 : i32
    return %c0_i32, %c0_i32_0, %c0_i32_1 : i32, i32, i32
  }
  func.func @transform_2(%arg0: i32) -> (i32, i32) {
    %c0_i32 = arith.constant 0 : i32
    %c0_i32_0 = arith.constant 0 : i32
    %c0_i32_1 = arith.constant 0 : i32
    return %c0_i32, %c0_i32_0 : i32, i32
  }
  func.func @transform_3(%arg0: i32) -> (i32, i32) {
    %c0_i32 = arith.constant 0 : i32
    %c0_i32_0 = arith.constant 0 : i32
    %c0_i32_1 = arith.constant 0 : i32
    return %c0_i32, %c0_i32_0 : i32, i32
  }
  func.func @transform_4(%arg0: i32) -> (i32, i32) {
    %c0_i32 = arith.constant 0 : i32
    %c0_i32_0 = arith.constant 0 : i32
    %c0_i32_1 = arith.constant 0 : i32
    return %c0_i32, %c0_i32_0 : i32, i32
  }
  func.func @transform_5(%arg0: i32) -> (i32, i32) {
    %c0_i32 = arith.constant 0 : i32
    %c0_i32_0 = arith.constant 0 : i32
    %c0_i32_1 = arith.constant 0 : i32
    return %c0_i32, %c0_i32_0 : i32, i32
  }
  func.func @transform_6(%arg0: i32) -> (i32, i32, i32) {
    %c0_i32 = arith.constant 0 : i32
    %c0_i32_0 = arith.constant 0 : i32
    %c0_i32_1 = arith.constant 0 : i32
    %c0_i32_2 = arith.constant 0 : i32
    return %c0_i32, %c0_i32_0, %c0_i32_1 : i32, i32, i32
  }
}

</mosaic_0001>

<llo_original>
// kernel: gru_forward.1
$region0: #{gru_forward.1}
  #allocation0 [shape = 'u32[]', space=smem, size = 0x4, offset = 0x4, fixed_abs, tag = 'smem constant byte address 0x4 - core index']
  #allocation1 [shape = 'u32[144,128]{1,0:T(1,128)}', space=vmem, size = 0x12000, scoped, tag = 'internal scratch']
  #allocation2 [shape = 'f32[64,128]{1,0:T(8,128)}', space=vmem, size = 0x8000, scoped, tag = 'scratch operand']
  %s0 = inlined_call_operand.vmem [shape: f32[64,128], index: 0, kind: input, shape index: {}]
  %s1 = inlined_call_operand.vmem [shape: f32[2,8,128], index: 1, kind: input, shape index: {}]
  %s2 = inlined_call_operand.hbm [shape: bf16[512,384], index: 2, kind: input, shape index: {}]
  %s3 = inlined_call_operand.vmem [shape: f32[8,384], index: 3, kind: input, shape index: {}]
  %s4 = inlined_call_operand.hbm [shape: f32[128,128], index: 4, kind: input, shape index: {}]
  %s5 = inlined_call_operand.vmem [shape: f32[64,128], index: 5, kind: output, shape index: {0}]
  %s6 = inlined_call_operand.vmem [shape: f32[2,8,128], index: 6, kind: output, shape index: {1}]
  %7 = xla_tuple %s5, %s6
  %s8 = sld [smem:[#allocation0]]
  $region46: #{gru_forward.1} parent=0
    _
  %s10 = ssub.s32 1, %s8
  %s11 = scalar_select 0, %s10, %s8
  $region1: #{gru_forward.1} parent=0
    #allocation3 [shape = 'u8[393216]{0}', space=vmem, size = 0x60000, scoped, tag = 'input window, operand 2, single buffered']
    #allocation4 [shape = 's32[1]{0}', space=sflag, size = 0x4, scoped, tag = 'scoped memory for gru_forward.1']
    #allocation5 [shape = 'u8[65536]{0}', space=vmem, size = 0x10000, scoped, tag = 'input window, operand 4, single buffered']
    #allocation6 [shape = 's32[1]{0}', space=sflag, size = 0x4, scoped, tag = 'scoped memory for gru_forward.1']
    %12 = vsyncpa [#allocation4], 0
    %13 = vsyncpa [#allocation6], 0
    // Predicated region
    $region2: #{gru_forward.1} parent=1 // pred_check
      _
    $region3: #{gru_forward.1} parent=1 // pred_check_branch
      %15 = sbr.rel (0) target = $region5
    $region4: #{gru_forward.1} parent=1 // pred_region
      _
    $region5: #{gru_forward.1} parent=1 // pred_fallthru
      _
    // Predicated region
    $region6: #{gru_forward.1} parent=1 // pred_check
      _
    $region7: #{gru_forward.1} parent=1 // pred_check_branch
      %17 = sbr.rel (0) target = $region9
    $region8: #{gru_forward.1} parent=1 // pred_region
      _
    $region9: #{gru_forward.1} parent=1 // pred_fallthru
      _
    // Predicated region
    $region10: #{gru_forward.1} parent=1 // pred_check
      _
    $region11: #{gru_forward.1} parent=1 // pred_check_branch
      %19 = sbr.rel (0) target = $region13
    $region12: #{gru_forward.1} parent=1 // pred_region
      %s21 = ssub.s32 12288, 12288
      %22 = vsyncadd [#allocation4], %s21
      %s23 = sshll.u32 [#allocation3], 4
      %s24 = int_to_ptr.vmem [resolvable:$true] %s23
      %29 = dma.hbm_to_vmem [thread:$0]  %s2, 12288, %s24, [#allocation4], 192, 192, 12
    $region13: #{gru_forward.1} parent=1 // pred_fallthru
      _
    // Predicated region
    $region14: #{gru_forward.1} parent=1 // pred_check
      _
    $region15: #{gru_forward.1} parent=1 // pred_check_branch
      %31 = sbr.rel (0) target = $region17
    $region16: #{gru_forward.1} parent=1 // pred_region
      _
    $region17: #{gru_forward.1} parent=1 // pred_fallthru
      _
    // Predicated region
    $region18: #{gru_forward.1} parent=1 // pred_check
      _
    $region19: #{gru_forward.1} parent=1 // pred_check_branch
      %33 = sbr.rel (0) target = $region21
    $region20: #{gru_forward.1} parent=1 // pred_region
      %s35 = ssub.s32 2048, 2048
      %36 = vsyncadd [#allocation6], %s35
      %s37 = sshll.u32 [#allocation5], 4
      %s38 = int_to_ptr.vmem [resolvable:$true] %s37
      %43 = dma.hbm_to_vmem [thread:$0]  %s4, 2048, %s38, [#allocation6], 128, 128, 8
    $region21: #{gru_forward.1} parent=1 // pred_fallthru
      _
    // Predicated region
    $region22: #{gru_forward.1} parent=1 // pred_check
      _
    $region23: #{gru_forward.1} parent=1 // pred_check_branch
      %45 = sbr.rel (0) target = $region25
    $region24: #{gru_forward.1} parent=1 // pred_region
      %46 = dma.done [#allocation4], 12288
    $region25: #{gru_forward.1} parent=1 // pred_fallthru
      _
    // Predicated region
    $region26: #{gru_forward.1} parent=1 // pred_check
      _
    $region27: #{gru_forward.1} parent=1 // pred_check_branch
      %48 = sbr.rel (0) target = $region29
    $region28: #{gru_forward.1} parent=1 // pred_region
      %49 = dma.done [#allocation6], 2048
    $region29: #{gru_forward.1} parent=1 // pred_fallthru
      _
    %v51 = vld [vmem:[%s0] sm:$0xff]
    %v52 = vld [vmem:[%s0 + $0x8] sm:$0xff]
    %v53 = vld [vmem:[%s0 + $0x10] sm:$0xff]
    %v54 = vld [vmem:[%s0 + $0x18] sm:$0xff]
    %v55 = vld [vmem:[%s0 + $0x20] sm:$0xff]
    %v56 = vld [vmem:[%s0 + $0x28] sm:$0xff]
    %v57 = vld [vmem:[%s0 + $0x30] sm:$0xff]
    %v58 = vld [vmem:[%s0 + $0x38] sm:$0xff]
    %v59 = vld [vmem:[#allocation3] sm:$0xff]
    %v60 = vld [vmem:[#allocation3 + $0x8] sm:$0xf]
    %v61 = vld [vmem:[#allocation3 + $0xc] sm:$0xff]
    %v62 = vld [vmem:[#allocation3 + $0x14] sm:$0xf]
    %v63 = vld [vmem:[#allocation3 + $0x18] sm:$0xff]
    %v64 = vld [vmem:[#allocation3 + $0x20] sm:$0xf]
    %v65 = vld [vmem:[#allocation3 + $0x24] sm:$0xff]
    %v66 = vld [vmem:[#allocation3 + $0x2c] sm:$0xf]
    %v67 = vld [vmem:[#allocation3 + $0x30] sm:$0xff]
    %v68 = vld [vmem:[#allocation3 + $0x38] sm:$0xf]
    %v69 = vld [vmem:[#allocation3 + $0x3c] sm:$0xff]
    %v70 = vld [vmem:[#allocation3 + $0x44] sm:$0xf]
    %v71 = vld [vmem:[#allocation3 + $0x48] sm:$0xff]
    %v72 = vld [vmem:[#allocation3 + $0x50] sm:$0xf]
    %v73 = vld [vmem:[#allocation3 + $0x54] sm:$0xff]
    %v74 = vld [vmem:[#allocation3 + $0x5c] sm:$0xf]
    %v75 = vld [vmem:[#allocation3 + $0x60] sm:$0xff]
    %v76 = vld [vmem:[#allocation3 + $0x68] sm:$0xf]
    %v77 = vld [vmem:[#allocation3 + $0x6c] sm:$0xff]
    %v78 = vld [vmem:[#allocation3 + $0x74] sm:$0xf]
    %v79 = vld [vmem:[#allocation3 + $0x78] sm:$0xff]
    %v80 = vld [vmem:[#allocation3 + $0x80] sm:$0xf]
    %v81 = vld [vmem:[#allocation3 + $0x84] sm:$0xff]
    %v82 = vld [vmem:[#allocation3 + $0x8c] sm:$0xf]
    %v83 = vld [vmem:[#allocation3 + $0x90] sm:$0xff]
    %v84 = vld [vmem:[#allocation3 + $0x98] sm:$0xf]
    %v85 = vld [vmem:[#allocation3 + $0x9c] sm:$0xff]
    %v86 = vld [vmem:[#allocation3 + $0xa4] sm:$0xf]
    %v87 = vld [vmem:[#allocation3 + $0xa8] sm:$0xff]
    %v88 = vld [vmem:[#allocation3 + $0xb0] sm:$0xf]
    %v89 = vld [vmem:[#allocation3 + $0xb4] sm:$0xff]
    %v90 = vld [vmem:[#allocation3 + $0xbc] sm:$0xf]
    %v91 = vld [vmem:[#allocation3 + $0xc0] sm:$0xff]
    %v92 = vld [vmem:[#allocation3 + $0xc8] sm:$0xf]
    %v93 = vld [vmem:[#allocation3 + $0xcc] sm:$0xff]
    %v94 = vld [vmem:[#allocation3 + $0xd4] sm:$0xf]
    %v95 = vld [vmem:[#allocation3 + $0xd8] sm:$0xff]
    %v96 = vld [vmem:[#allocation3 + $0xe0] sm:$0xf]
    %v97 = vld [vmem:[#allocation3 + $0xe4] sm:$0xff]
    %v98 = vld [vmem:[#allocation3 + $0xec] sm:$0xf]
    %v99 = vld [vmem:[#allocation3 + $0xf0] sm:$0xff]
    %v100 = vld [vmem:[#allocation3 + $0xf8] sm:$0xf]
    %v101 = vld [vmem:[#allocation3 + $0xfc] sm:$0xff]
    %v102 = vld [vmem:[#allocation3 + $0x104] sm:$0xf]
    %v103 = vld [vmem:[#allocation3 + $0x108] sm:$0xff]
    %v104 = vld [vmem:[#allocation3 + $0x110] sm:$0xf]
    %v105 = vld [vmem:[#allocation3 + $0x114] sm:$0xff]
    %v106 = vld [vmem:[#allocation3 + $0x11c] sm:$0xf]
    %v107 = vld [vmem:[#allocation3 + $0x120] sm:$0xff]
    %v108 = vld [vmem:[#allocation3 + $0x128] sm:$0xf]
    %v109 = vld [vmem:[#allocation3 + $0x12c] sm:$0xff]
    %v110 = vld [vmem:[#allocation3 + $0x134] sm:$0xf]
    %v111 = vld [vmem:[#allocation3 + $0x138] sm:$0xff]
    %v112 = vld [vmem:[#allocation3 + $0x140] sm:$0xf]
    %v113 = vld [vmem:[#allocation3 + $0x144] sm:$0xff]
    %v114 = vld [vmem:[#allocation3 + $0x14c] sm:$0xf]
    %v115 = vld [vmem:[#allocation3 + $0x150] sm:$0xff]
    %v116 = vld [vmem:[#allocation3 + $0x158] sm:$0xf]
    %v117 = vld [vmem:[#allocation3 + $0x15c] sm:$0xff]
    %v118 = vld [vmem:[#allocation3 + $0x164] sm:$0xf]
    %v119 = vld [vmem:[#allocation3 + $0x168] sm:$0xff]
    %v120 = vld [vmem:[#allocation3 + $0x170] sm:$0xf]
    %v121 = vld [vmem:[#allocation3 + $0x174] sm:$0xff]
    %v122 = vld [vmem:[#allocation3 + $0x17c] sm:$0xf]
    %v123 = vld [vmem:[%s3] ss:$8 sm:$0x7]
    %v124 = vld [vmem:[%s3 + $0x1] ss:$0 sm:$0xff]
    %v125 = vpack.c.bf16 %v52, %v51
    %v126 = vpack.c.bf16 %v54, %v53
    %v127 = vpack.c.bf16 %v56, %v55
    %v128 = vpack.c.bf16 %v58, %v57
    %v130 = vlaneseq
    %v131 = vshrl.u32 %v130, 7
    %v132 = vsub.s32 0, %v131
    %v133 = vrot.slane %v123, %v132
    %v134 = vlaneseq
    %v135 = vshrl.u32 %v134, 7
    %v136 = vsub.s32 1, %v135
    %v137 = vrot.slane %v123, %v136
    %v138 = vlaneseq
    %v139 = vshrl.u32 %v138, 7
    %v140 = vsub.s32 2, %v139
    %v141 = vrot.slane %v123, %v140
    %v177 = vunpack.c.l.b16 %v59
    %v178 = vunpack.c.h.b16 %v59
    %v179 = vunpack.c.l.b16 %v60
    %v180 = vunpack.c.l.b16 %v61
    %v181 = vunpack.c.h.b16 %v61
    %v182 = vunpack.c.l.b16 %v62
    %v183 = vunpack.c.l.b16 %v63
    %v184 = vunpack.c.h.b16 %v63
    %v185 = vunpack.c.l.b16 %v64
    %v186 = vunpack.c.l.b16 %v65
    %v187 = vunpack.c.h.b16 %v65
    %v188 = vunpack.c.l.b16 %v66
    %v189 = vunpack.c.l.b16 %v67
    %v190 = vunpack.c.h.b16 %v67
    %v191 = vunpack.c.l.b16 %v68
    %v192 = vunpack.c.l.b16 %v69
    %v193 = vunpack.c.h.b16 %v69
    %v194 = vunpack.c.l.b16 %v70
    %v195 = vunpack.c.l.b16 %v71
    %v196 = vunpack.c.h.b16 %v71
    %v197 = vunpack.c.l.b16 %v72
    %v198 = vunpack.c.l.b16 %v73
    %v199 = vunpack.c.h.b16 %v73
    %v200 = vunpack.c.l.b16 %v74
    %v201 = vunpack.c.l.b16 %v75
    %v202 = vunpack.c.h.b16 %v75
    %v203 = vunpack.c.l.b16 %v76
    %v204 = vunpack.c.l.b16 %v77
    %v205 = vunpack.c.h.b16 %v77
    %v206 = vunpack.c.l.b16 %v78
    %v207 = vunpack.c.l.b16 %v79
    %v208 = vunpack.c.h.b16 %v79
    %v209 = vunpack.c.l.b16 %v80
    %v210 = vunpack.c.l.b16 %v81
    %v211 = vunpack.c.h.b16 %v81
    %v212 = vunpack.c.l.b16 %v82
    %v213 = vunpack.c.l.b16 %v83
    %v214 = vunpack.c.h.b16 %v83
    %v215 = vunpack.c.l.b16 %v84
    %v216 = vunpack.c.l.b16 %v85
    %v217 = vunpack.c.h.b16 %v85
    %v218 = vunpack.c.l.b16 %v86
    %v219 = vunpack.c.l.b16 %v87
    %v220 = vunpack.c.h.b16 %v87
    %v221 = vunpack.c.l.b16 %v88
    %v222 = vunpack.c.l.b16 %v89
    %v223 = vunpack.c.h.b16 %v89
    %v224 = vunpack.c.l.b16 %v90
    %v225 = vpack.c.b16 %v180, %v177
    %v226 = vpack.c.b16 %v181, %v178
    %v227 = vpack.c.b16 %v182, %v179
    %v228 = vpack.c.b16 %v186, %v183
    %v229 = vpack.c.b16 %v187, %v184
    %v230 = vpack.c.b16 %v188, %v185
    %v231 = vpack.c.b16 %v192, %v189
    %v232 = vpack.c.b16 %v193, %v190
    %v233 = vpack.c.b16 %v194, %v191
    %v234 = vpack.c.b16 %v198, %v195
    %v235 = vpack.c.b16 %v199, %v196
    %v236 = vpack.c.b16 %v200, %v197
    %v237 = vpack.c.b16 %v204, %v201
    %v238 = vpack.c.b16 %v205, %v202
    %v239 = vpack.c.b16 %v206, %v203
    %v240 = vpack.c.b16 %v210, %v207
    %v241 = vpack.c.b16 %v211, %v208
    %v242 = vpack.c.b16 %v212, %v209
    %v243 = vpack.c.b16 %v216, %v213
    %v244 = vpack.c.b16 %v217, %v214
    %v245 = vpack.c.b16 %v218, %v215
    %v246 = vpack.c.b16 %v222, %v219
    %v247 = vpack.c.b16 %v223, %v220
    %v248 = vpack.c.b16 %v224, %v221
    %273 = vmatprep.subr.bf16.mxu0 %v247
    %274 = vmatpush1.bf16.msra.mxu0 %v246
    %275 = vmatprep.subr.bf16.mxu0 %v244
    %276 = vmatpush1.bf16.msra.mxu0 %v243
    %277 = vmatprep.subr.bf16.mxu0 %v241
    %278 = vmatpush1.bf16.msra.mxu0 %v240
    %279 = vmatprep.subr.bf16.mxu0 %v238
    %280 = vmatpush1.bf16.msra.mxu0 %v237
    %281 = vmatprep.subr.bf16.mxu0 %v235
    %282 = vmatpush1.bf16.msra.mxu0 %v234
    %283 = vmatprep.subr.bf16.mxu0 %v232
    %284 = vmatpush1.bf16.msra.mxu0 %v231
    %285 = vmatprep.subr.bf16.mxu0 %v229
    %286 = vmatpush1.bf16.msra.mxu0 %v228
    %287 = vmatprep.subr.bf16.mxu0 %v226
    %288 = vmatpush1.bf16.msra.mxu0 %v225
    %289 = vmatprep.subr.bf16.mxu0 0
    %290 = vmatpush2.bf16.msra.mxu0 0
    %291 = vmatprep.subr.bf16.mxu0 0
    %292 = vmatpush2.bf16.msra.mxu0 0
    %293 = vmatprep.subr.bf16.mxu0 0
    %294 = vmatpush2.bf16.msra.mxu0 0
    %295 = vmatprep.subr.bf16.mxu0 0
    %296 = vmatpush2.bf16.msra.mxu0 0
    %297 = vmatprep.subr.bf16.mxu0 0
    %298 = vmatpush2.bf16.msra.mxu0 0
    %299 = vmatprep.subr.bf16.mxu0 0
    %300 = vmatpush2.bf16.msra.mxu0 0
    %301 = vmatprep.subr.bf16.mxu0 0
    %302 = vmatpush2.bf16.msra.mxu0 0
    %303 = vmatprep.subr.bf16.mxu0 0
    %304 = vmatpush2.bf16.msra.mxu0 0
    %305 = vmatprep.mubr.bf16.mxu0 0
    %306 = vmatmul.mubr.bf16.gmra.mxu0 %v125
    %v307 = vpop.f32.mrf.mxu0
    %v308 = vadd.f32 %v133, %v307
    %v309 = vpop.f32.mrf.mxu0
    %v310 = vadd.f32 %v137, %v309
    %v311 = vpop.f32.mrf.mxu0
    %v312 = vadd.f32 %v133, %v311
    %v313 = vpop.f32.mrf.mxu0
    %v314 = vadd.f32 %v137, %v313
    %315 = vmatprep.mubr.bf16.mxu0 0
    %316 = vmatmul.mubr.bf16.gmra.mxu0 %v126
    %v317 = vpop.f32.mrf.mxu0
    %v318 = vadd.f32 %v133, %v317
    %v319 = vpop.f32.mrf.mxu0
    %v320 = vadd.f32 %v137, %v319
    %v321 = vpop.f32.mrf.mxu0
    %v322 = vadd.f32 %v133, %v321
    %v323 = vpop.f32.mrf.mxu0
    %v324 = vadd.f32 %v137, %v323
    %325 = vmatprep.mubr.bf16.mxu0 0
    %326 = vmatmul.mubr.bf16.gmra.mxu0 %v127
    %v327 = vpop.f32.mrf.mxu0
    %v328 = vadd.f32 %v133, %v327
    %v329 = vpop.f32.mrf.mxu0
    %v330 = vadd.f32 %v137, %v329
    %v331 = vpop.f32.mrf.mxu0
    %v332 = vadd.f32 %v133, %v331
    %v333 = vpop.f32.mrf.mxu0
    %v334 = vadd.f32 %v137, %v333
    %335 = vmatprep.mubr.bf16.mxu0 0
    %336 = vmatmul.mubr.bf16.gmra.mxu0 %v128
    %v337 = vpop.f32.mrf.mxu0
    %v338 = vadd.f32 %v133, %v337
    %v339 = vpop.f32.mrf.mxu0
    %v340 = vadd.f32 %v137, %v339
    %v341 = vpop.f32.mrf.mxu0
    %v342 = vadd.f32 %v133, %v341
    %v343 = vpop.f32.mrf.mxu0
    %v344 = vadd.f32 %v137, %v343
    %345 = vdwg.mxu0
    %346 = vmatprep.subr.bf16.mxu0 0
    %347 = vmatpush1.bf16.msra.mxu0 %v248
    %348 = vmatprep.subr.bf16.mxu0 0
    %349 = vmatpush1.bf16.msra.mxu0 %v245
    %350 = vmatprep.subr.bf16.mxu0 0
    %351 = vmatpush1.bf16.msra.mxu0 %v242
    %352 = vmatprep.subr.bf16.mxu0 0
    %353 = vmatpush1.bf16.msra.mxu0 %v239
    %354 = vmatprep.subr.bf16.mxu0 0
    %355 = vmatpush1.bf16.msra.mxu0 %v236
    %356 = vmatprep.subr.bf16.mxu0 0
    %357 = vmatpush1.bf16.msra.mxu0 %v233
    %358 = vmatprep.subr.bf16.mxu0 0
    %359 = vmatpush1.bf16.msra.mxu0 %v230
    %360 = vmatprep.subr.bf16.mxu0 0
    %361 = vmatpush1.bf16.msra.mxu0 %v227
    %362 = vmatprep.subr.bf16.mxu0 0
    %363 = vmatpush2.bf16.msra.mxu0 0
    %364 = vmatprep.subr.bf16.mxu0 0
    %365 = vmatpush2.bf16.msra.mxu0 0
    %366 = vmatprep.subr.bf16.mxu0 0
    %367 = vmatpush2.bf16.msra.mxu0 0
    %368 = vmatprep.subr.bf16.mxu0 0
    %369 = vmatpush2.bf16.msra.mxu0 0
    %370 = vmatprep.subr.bf16.mxu0 0
    %371 = vmatpush2.bf16.msra.mxu0 0
    %372 = vmatprep.subr.bf16.mxu0 0
    %373 = vmatpush2.bf16.msra.mxu0 0
    %374 = vmatprep.subr.bf16.mxu0 0
    %375 = vmatpush2.bf16.msra.mxu0 0
    %376 = vmatprep.subr.bf16.mxu0 0
    %377 = vmatpush2.bf16.msra.mxu0 0
    %378 = vmatprep.mubr.bf16.mxu0 0
    %379 = vmatmul.mubr.bf16.gmra.mxu0 %v125
    %v380 = vpop.f32.mrf.mxu0
    %v381 = vadd.f32 %v141, %v380
    %v382 = vpop.f32.mrf.mxu0
    %v383 = vpop.f32.mrf.mxu0
    %v384 = vadd.f32 %v141, %v383
    %v385 = vpop.f32.mrf.mxu0
    %386 = vmatprep.mubr.bf16.mxu0 0
    %387 = vmatmul.mubr.bf16.gmra.mxu0 %v126
    %v388 = vpop.f32.mrf.mxu0
    %v389 = vadd.f32 %v141, %v388
    %v390 = vpop.f32.mrf.mxu0
    %v391 = vpop.f32.mrf.mxu0
    %v392 = vadd.f32 %v141, %v391
    %v393 = vpop.f32.mrf.mxu0
    %394 = vmatprep.mubr.bf16.mxu0 0
    %395 = vmatmul.mubr.bf16.gmra.mxu0 %v127
    %v396 = vpop.f32.mrf.mxu0
    %v397 = vadd.f32 %v141, %v396
    %v398 = vpop.f32.mrf.mxu0
    %v399 = vpop.f32.mrf.mxu0
    %v400 = vadd.f32 %v141, %v399
    %v401 = vpop.f32.mrf.mxu0
    %402 = vmatprep.mubr.bf16.mxu0 0
    %403 = vmatmul.mubr.bf16.gmra.mxu0 %v128
    %v404 = vpop.f32.mrf.mxu0
    %v405 = vadd.f32 %v141, %v404
    %v406 = vpop.f32.mrf.mxu0
    %v407 = vpop.f32.mrf.mxu0
    %v408 = vadd.f32 %v141, %v407
    %v409 = vpop.f32.mrf.mxu0
    %410 = vdwg.mxu0
    %v411 = vld [vmem:[%s1] sm:$0xff]
    %v412 = vpack.c.bf16 %v411, %v411
    %v445 = vunpack.c.l.b16 %v91
    %v446 = vunpack.c.h.b16 %v91
    %v447 = vunpack.c.l.b16 %v92
    %v448 = vunpack.c.l.b16 %v93
    %v449 = vunpack.c.h.b16 %v93
    %v450 = vunpack.c.l.b16 %v94
    %v451 = vunpack.c.l.b16 %v95
    %v452 = vunpack.c.h.b16 %v95
    %v453 = vunpack.c.l.b16 %v96
    %v454 = vunpack.c.l.b16 %v97
    %v455 = vunpack.c.h.b16 %v97
    %v456 = vunpack.c.l.b16 %v98
    %v457 = vunpack.c.l.b16 %v99
    %v458 = vunpack.c.h.b16 %v99
    %v459 = vunpack.c.l.b16 %v100
    %v460 = vunpack.c.l.b16 %v101
    %v461 = vunpack.c.h.b16 %v101
    %v462 = vunpack.c.l.b16 %v102
    %v463 = vunpack.c.l.b16 %v103
    %v464 = vunpack.c.h.b16 %v103
    %v465 = vunpack.c.l.b16 %v104
    %v466 = vunpack.c.l.b16 %v105
    %v467 = vunpack.c.h.b16 %v105
    %v468 = vunpack.c.l.b16 %v106
    %v469 = vunpack.c.l.b16 %v107
    %v470 = vunpack.c.h.b16 %v107
    %v471 = vunpack.c.l.b16 %v108
    %v472 = vunpack.c.l.b16 %v109
    %v473 = vunpack.c.h.b16 %v109
    %v474 = vunpack.c.l.b16 %v110
    %v475 = vunpack.c.l.b16 %v111
    %v476 = vunpack.c.h.b16 %v111
    %v477 = vunpack.c.l.b16 %v112
    %v478 = vunpack.c.l.b16 %v113
    %v479 = vunpack.c.h.b16 %v113
    %v480 = vunpack.c.l.b16 %v114
    %v481 = vunpack.c.l.b16 %v115
    %v482 = vunpack.c.h.b16 %v115
    %v483 = vunpack.c.l.b16 %v116
    %v484 = vunpack.c.l.b16 %v117
    %v485 = vunpack.c.h.b16 %v117
    %v486 = vunpack.c.l.b16 %v118
    %v487 = vunpack.c.l.b16 %v119
    %v488 = vunpack.c.h.b16 %v119
    %v489 = vunpack.c.l.b16 %v120
    %v490 = vunpack.c.l.b16 %v121
    %v491 = vunpack.c.h.b16 %v121
    %v492 = vunpack.c.l.b16 %v122
    %v493 = vpack.c.b16 %v448, %v445
    %v494 = vpack.c.b16 %v449, %v446
    %v495 = vpack.c.b16 %v450, %v447
    %v496 = vpack.c.b16 %v454, %v451
    %v497 = vpack.c.b16 %v455, %v452
    %v498 = vpack.c.b16 %v456, %v453
    %v499 = vpack.c.b16 %v460, %v457
    %v500 = vpack.c.b16 %v461, %v458
    %v501 = vpack.c.b16 %v462, %v459
    %v502 = vpack.c.b16 %v466, %v463
    %v503 = vpack.c.b16 %v467, %v464
    %v504 = vpack.c.b16 %v468, %v465
    %v505 = vpack.c.b16 %v472, %v469
    %v506 = vpack.c.b16 %v473, %v470
    %v507 = vpack.c.b16 %v474, %v471
    %v508 = vpack.c.b16 %v478, %v475
    %v509 = vpack.c.b16 %v479, %v476
    %v510 = vpack.c.b16 %v480, %v477
    %v511 = vpack.c.b16 %v484, %v481
    %v512 = vpack.c.b16 %v485, %v482
    %v513 = vpack.c.b16 %v486, %v483
    %v514 = vpack.c.b16 %v490, %v487
    %v515 = vpack.c.b16 %v491, %v488
    %v516 = vpack.c.b16 %v492, %v489
    %541 = vmatprep.subr.bf16.mxu0 %v515
    %542 = vmatpush1.bf16.msra.mxu0 %v514
    %543 = vmatprep.subr.bf16.mxu0 %v512
    %544 = vmatpush1.bf16.msra.mxu0 %v511
    %545 = vmatprep.subr.bf16.mxu0 %v509
    %546 = vmatpush1.bf16.msra.mxu0 %v508
    %547 = vmatprep.subr.bf16.mxu0 %v506
    %548 = vmatpush1.bf16.msra.mxu0 %v505
    %549 = vmatprep.subr.bf16.mxu0 %v503
    %550 = vmatpush1.bf16.msra.mxu0 %v502
    %551 = vmatprep.subr.bf16.mxu0 %v500
    %552 = vmatpush1.bf16.msra.mxu0 %v499
    %553 = vmatprep.subr.bf16.mxu0 %v497
    %554 = vmatpush1.bf16.msra.mxu0 %v496
    %555 = vmatprep.subr.bf16.mxu0 %v494
    %556 = vmatpush1.bf16.msra.mxu0 %v493
    %557 = vmatprep.subr.bf16.mxu0 0
    %558 = vmatpush2.bf16.msra.mxu0 0
    %559 = vmatprep.subr.bf16.mxu0 0
    %560 = vmatpush2.bf16.msra.mxu0 0
    %561 = vmatprep.subr.bf16.mxu0 0
    %562 = vmatpush2.bf16.msra.mxu0 0
    %563 = vmatprep.subr.bf16.mxu0 0
    %564 = vmatpush2.bf16.msra.mxu0 0
    %565 = vmatprep.subr.bf16.mxu0 0
    %566 = vmatpush2.bf16.msra.mxu0 0
    %567 = vmatprep.subr.bf16.mxu0 0
    %568 = vmatpush2.bf16.msra.mxu0 0
    %569 = vmatprep.subr.bf16.mxu0 0
    %570 = vmatpush2.bf16.msra.mxu0 0
    %571 = vmatprep.subr.bf16.mxu0 0
    %572 = vmatpush2.bf16.msra.mxu0 0
    %573 = vmatprep.mubr.bf16.mxu0 0
    %574 = vmatmul.mubr.bf16.gmra.mxu0 %v412
    %v575 = vpop.f32.mrf.mxu0
    %v576 = vadd.f32 0.0, %v575
    %v577 = vpop.f32.mrf.mxu0
    %v578 = vadd.f32 0.0, %v577
    %v579 = vpop.f32.mrf.mxu0
    %v580 = vpop.f32.mrf.mxu0
    %581 = vdwg.mxu0
    %582 = vmatprep.subr.bf16.mxu0 0
    %583 = vmatpush1.bf16.msra.mxu0 %v516
    %584 = vmatprep.subr.bf16.mxu0 0
    %585 = vmatpush1.bf16.msra.mxu0 %v513
    %586 = vmatprep.subr.bf16.mxu0 0
    %587 = vmatpush1.bf16.msra.mxu0 %v510
    %588 = vmatprep.subr.bf16.mxu0 0
    %589 = vmatpush1.bf16.msra.mxu0 %v507
    %590 = vmatprep.subr.bf16.mxu0 0
    %591 = vmatpush1.bf16.msra.mxu0 %v504
    %592 = vmatprep.subr.bf16.mxu0 0
    %593 = vmatpush1.bf16.msra.mxu0 %v501
    %594 = vmatprep.subr.bf16.mxu0 0
    %595 = vmatpush1.bf16.msra.mxu0 %v498
    %596 = vmatprep.subr.bf16.mxu0 0
    %597 = vmatpush1.bf16.msra.mxu0 %v495
    %598 = vmatprep.subr.bf16.mxu0 0
    %599 = vmatpush2.bf16.msra.mxu0 0
    %600 = vmatprep.subr.bf16.mxu0 0
    %601 = vmatpush2.bf16.msra.mxu0 0
    %602 = vmatprep.subr.bf16.mxu0 0
    %603 = vmatpush2.bf16.msra.mxu0 0
    %604 = vmatprep.subr.bf16.mxu0 0
    %605 = vmatpush2.bf16.msra.mxu0 0
    %606 = vmatprep.subr.bf16.mxu0 0
    %607 = vmatpush2.bf16.msra.mxu0 0
    %608 = vmatprep.subr.bf16.mxu0 0
    %609 = vmatpush2.bf16.msra.mxu0 0
    %610 = vmatprep.subr.bf16.mxu0 0
    %611 = vmatpush2.bf16.msra.mxu0 0
    %612 = vmatprep.subr.bf16.mxu0 0
    %613 = vmatpush2.bf16.msra.mxu0 0
    %614 = vmatprep.mubr.bf16.mxu0 0
    %615 = vmatmul.mubr.bf16.gmra.mxu0 %v412
    %v616 = vpop.f32.mrf.mxu0
    %v617 = vadd.f32 0.0, %v616
    %v618 = vpop.f32.mrf.mxu0
    %v619 = vpop.f32.mrf.mxu0
    %v620 = vpop.f32.mrf.mxu0
    %621 = vdwg.mxu0
    %v622 = vadd.f32 %v308, %v576
    %v623 = vxor.u32 %v622, 2147483648
    %v624 = vmul.f32 %v623, 1.442695
    %v625 = vpow.pop %v624
    %v626 = vadd.f32 %v625, 1.0
    %v627 = vrcp.pop %v626
    %v628 = vmul.f32 1.0, %v627
    %v629 = vadd.f32 %v310, %v578
    %v630 = vxor.u32 %v629, 2147483648
    %v631 = vmul.f32 %v630, 1.442695
    %v632 = vpow.pop %v631
    %v633 = vadd.f32 %v632, 1.0
    %v634 = vrcp.pop %v633
    %v635 = vmul.f32 1.0, %v634
    %v636 = vadd.f32 %v617, %v124
    %v637 = vmul.f32 %v628, %v636
    %v638 = vadd.f32 %v381, %v637
    %v639 = vtanh.pop %v638
    %v640 = vsub.f32 1.0, %v635
    %v641 = vmul.f32 %v640, %v639
    %v642 = vmul.f32 %v635, %v411
    %v643 = vadd.f32 %v641, %v642
    %644 = vst [vmem:[#allocation2] sm:$0xff] %v643
    %v645 = vpack.c.bf16 %v643, %v643
    %646 = vmatprep.subr.bf16.mxu0 %v515
    %647 = vmatpush1.bf16.msra.mxu0 %v514
    %648 = vmatprep.subr.bf16.mxu0 %v512
    %649 = vmatpush1.bf16.msra.mxu0 %v511
    %650 = vmatprep.subr.bf16.mxu0 %v509
    %651 = vmatpush1.bf16.msra.mxu0 %v508
    %652 = vmatprep.subr.bf16.mxu0 %v506
    %653 = vmatpush1.bf16.msra.mxu0 %v505
    %654 = vmatprep.subr.bf16.mxu0 %v503
    %655 = vmatpush1.bf16.msra.mxu0 %v502
    %656 = vmatprep.subr.bf16.mxu0 %v500
    %657 = vmatpush1.bf16.msra.mxu0 %v499
    %658 = vmatprep.subr.bf16.mxu0 %v497
    %659 = vmatpush1.bf16.msra.mxu0 %v496
    %660 = vmatprep.subr.bf16.mxu0 %v494
    %661 = vmatpush1.bf16.msra.mxu0 %v493
    %662 = vmatprep.subr.bf16.mxu0 0
    %663 = vmatpush2.bf16.msra.mxu0 0
    %664 = vmatprep.subr.bf16.mxu0 0
    %665 = vmatpush2.bf16.msra.mxu0 0
    %666 = vmatprep.subr.bf16.mxu0 0
    %667 = vmatpush2.bf16.msra.mxu0 0
    %668 = vmatprep.subr.bf16.mxu0 0
    %669 = vmatpush2.bf16.msra.mxu0 0
    %670 = vmatprep.subr.bf16.mxu0 0
    %671 = vmatpush2.bf16.msra.mxu0 0
    %672 = vmatprep.subr.bf16.mxu0 0
    %673 = vmatpush2.bf16.msra.mxu0 0
    %674 = vmatprep.subr.bf16.mxu0 0
    %675 = vmatpush2.bf16.msra.mxu0 0
    %676 = vmatprep.subr.bf16.mxu0 0
    %677 = vmatpush2.bf16.msra.mxu0 0
    %678 = vmatprep.mubr.bf16.mxu0 0
    %679 = vmatmul.mubr.bf16.gmra.mxu0 %v645
    %v680 = vpop.f32.mrf.mxu0
    %v681 = vadd.f32 0.0, %v680
    %v682 = vpop.f32.mrf.mxu0
    %v683 = vadd.f32 0.0, %v682
    %v684 = vpop.f32.mrf.mxu0
    %v685 = vpop.f32.mrf.mxu0
    %686 = vdwg.mxu0
    %687 = vmatprep.subr.bf16.mxu0 0
    %688 = vmatpush1.bf16.msra.mxu0 %v516
    %689 = vmatprep.subr.bf16.mxu0 0
    %690 = vmatpush1.bf16.msra.mxu0 %v513
    %691 = vmatprep.subr.bf16.mxu0 0
    %692 = vmatpush1.bf16.msra.mxu0 %v510
    %693 = vmatprep.subr.bf16.mxu0 0
    %694 = vmatpush1.bf16.msra.mxu0 %v507
    %695 = vmatprep.subr.bf16.mxu0 0
    %696 = vmatpush1.bf16.msra.mxu0 %v504
    %697 = vmatprep.subr.bf16.mxu0 0
    %698 = vmatpush1.bf16.msra.mxu0 %v501
    %699 = vmatprep.subr.bf16.mxu0 0
    %700 = vmatpush1.bf16.msra.mxu0 %v498
    %701 = vmatprep.subr.bf16.mxu0 0
    %702 = vmatpush1.bf16.msra.mxu0 %v495
    %703 = vmatprep.subr.bf16.mxu0 0
    %704 = vmatpush2.bf16.msra.mxu0 0
    %705 = vmatprep.subr.bf16.mxu0 0
    %706 = vmatpush2.bf16.msra.mxu0 0
    %707 = vmatprep.subr.bf16.mxu0 0
    %708 = vmatpush2.bf16.msra.mxu0 0
    %709 = vmatprep.subr.bf16.mxu0 0
    %710 = vmatpush2.bf16.msra.mxu0 0
    %711 = vmatprep.subr.bf16.mxu0 0
    %712 = vmatpush2.bf16.msra.mxu0 0
    %713 = vmatprep.subr.bf16.mxu0 0
    %714 = vmatpush2.bf16.msra.mxu0 0
    %715 = vmatprep.subr.bf16.mxu0 0
    %716 = vmatpush2.bf16.msra.mxu0 0
    %717 = vmatprep.subr.bf16.mxu0 0
    %718 = vmatpush2.bf16.msra.mxu0 0
    %719 = vmatprep.mubr.bf16.mxu0 0
    %720 = vmatmul.mubr.bf16.gmra.mxu0 %v645
    %v721 = vpop.f32.mrf.mxu0
    %v722 = vadd.f32 0.0, %v721
    %v723 = vpop.f32.mrf.mxu0
    %v724 = vpop.f32.mrf.mxu0
    %v725 = vpop.f32.mrf.mxu0
    %726 = vdwg.mxu0
    %v727 = vadd.f32 %v312, %v681
    %v728 = vxor.u32 %v727, 2147483648
    %v729 = vmul.f32 %v728, 1.442695
    %v730 = vpow.pop %v729
    %v731 = vadd.f32 %v730, 1.0
    %v732 = vrcp.pop %v731
    %v733 = vmul.f32 1.0, %v732
    %v734 = vadd.f32 %v314, %v683
    %v735 = vxor.u32 %v734, 2147483648
    %v736 = vmul.f32 %v735, 1.442695
    %v737 = vpow.pop %v736
    %v738 = vadd.f32 %v737, 1.0
    %v739 = vrcp.pop %v738
    %v740 = vmul.f32 1.0, %v739
    %v741 = vadd.f32 %v722, %v124
    %v742 = vmul.f32 %v733, %v741
    %v743 = vadd.f32 %v384, %v742
    %v744 = vtanh.pop %v743
    %v745 = vsub.f32 1.0, %v740
    %v746 = vmul.f32 %v745, %v744
    %v747 = vmul.f32 %v740, %v643
    %v748 = vadd.f32 %v746, %v747
    %749 = vst [vmem:[#allocation2 + $0x8] sm:$0xff] %v748
    %v750 = vpack.c.bf16 %v748, %v748
    %751 = vmatprep.subr.bf16.mxu0 %v515
    %752 = vmatpush1.bf16.msra.mxu0 %v514
    %753 = vmatprep.subr.bf16.mxu0 %v512
    %754 = vmatpush1.bf16.msra.mxu0 %v511
    %755 = vmatprep.subr.bf16.mxu0 %v509
    %756 = vmatpush1.bf16.msra.mxu0 %v508
    %757 = vmatprep.subr.bf16.mxu0 %v506
    %758 = vmatpush1.bf16.msra.mxu0 %v505
    %759 = vmatprep.subr.bf16.mxu0 %v503
    %760 = vmatpush1.bf16.msra.mxu0 %v502
    %761 = vmatprep.subr.bf16.mxu0 %v500
    %762 = vmatpush1.bf16.msra.mxu0 %v499
    %763 = vmatprep.subr.bf16.mxu0 %v497
    %764 = vmatpush1.bf16.msra.mxu0 %v496
    %765 = vmatprep.subr.bf16.mxu0 %v494
    %766 = vmatpush1.bf16.msra.mxu0 %v493
    %767 = vmatprep.subr.bf16.mxu0 0
    %768 = vmatpush2.bf16.msra.mxu0 0
    %769 = vmatprep.subr.bf16.mxu0 0
    %770 = vmatpush2.bf16.msra.mxu0 0
    %771 = vmatprep.subr.bf16.mxu0 0
    %772 = vmatpush2.bf16.msra.mxu0 0
    %773 = vmatprep.subr.bf16.mxu0 0
    %774 = vmatpush2.bf16.msra.mxu0 0
    %775 = vmatprep.subr.bf16.mxu0 0
    %776 = vmatpush2.bf16.msra.mxu0 0
    %777 = vmatprep.subr.bf16.mxu0 0
    %778 = vmatpush2.bf16.msra.mxu0 0
    %779 = vmatprep.subr.bf16.mxu0 0
    %780 = vmatpush2.bf16.msra.mxu0 0
    %781 = vmatprep.subr.bf16.mxu0 0
    %782 = vmatpush2.bf16.msra.mxu0 0
    %783 = vmatprep.mubr.bf16.mxu0 0
    %784 = vmatmul.mubr.bf16.gmra.mxu0 %v750
    %v785 = vpop.f32.mrf.mxu0
    %v786 = vadd.f32 0.0, %v785
    %v787 = vpop.f32.mrf.mxu0
    %v788 = vadd.f32 0.0, %v787
    %v789 = vpop.f32.mrf.mxu0
    %v790 = vpop.f32.mrf.mxu0
    %791 = vdwg.mxu0
    %792 = vmatprep.subr.bf16.mxu0 0
    %793 = vmatpush1.bf16.msra.mxu0 %v516
    %794 = vmatprep.subr.bf16.mxu0 0
    %795 = vmatpush1.bf16.msra.mxu0 %v513
    %796 = vmatprep.subr.bf16.mxu0 0
    %797 = vmatpush1.bf16.msra.mxu0 %v510
    %798 = vmatprep.subr.bf16.mxu0 0
    %799 = vmatpush1.bf16.msra.mxu0 %v507
    %800 = vmatprep.subr.bf16.mxu0 0
    %801 = vmatpush1.bf16.msra.mxu0 %v504
    %802 = vmatprep.subr.bf16.mxu0 0
    %803 = vmatpush1.bf16.msra.mxu0 %v501
    %804 = vmatprep.subr.bf16.mxu0 0
    %805 = vmatpush1.bf16.msra.mxu0 %v498
    %806 = vmatprep.subr.bf16.mxu0 0
    %807 = vmatpush1.bf16.msra.mxu0 %v495
    %808 = vmatprep.subr.bf16.mxu0 0
    %809 = vmatpush2.bf16.msra.mxu0 0
    %810 = vmatprep.subr.bf16.mxu0 0
    %811 = vmatpush2.bf16.msra.mxu0 0
    %812 = vmatprep.subr.bf16.mxu0 0
    %813 = vmatpush2.bf16.msra.mxu0 0
    %814 = vmatprep.subr.bf16.mxu0 0
    %815 = vmatpush2.bf16.msra.mxu0 0
    %816 = vmatprep.subr.bf16.mxu0 0
    %817 = vmatpush2.bf16.msra.mxu0 0
    %818 = vmatprep.subr.bf16.mxu0 0
    %819 = vmatpush2.bf16.msra.mxu0 0
    %820 = vmatprep.subr.bf16.mxu0 0
    %821 = vmatpush2.bf16.msra.mxu0 0
    %822 = vmatprep.subr.bf16.mxu0 0
    %823 = vmatpush2.bf16.msra.mxu0 0
    %824 = vmatprep.mubr.bf16.mxu0 0
    %825 = vmatmul.mubr.bf16.gmra.mxu0 %v750
    %v826 = vpop.f32.mrf.mxu0
    %v827 = vadd.f32 0.0, %v826
    %v828 = vpop.f32.mrf.mxu0
    %v829 = vpop.f32.mrf.mxu0
    %v830 = vpop.f32.mrf.mxu0
    %831 = vdwg.mxu0
    %v832 = vadd.f32 %v318, %v786
    %v833 = vxor.u32 %v832, 2147483648
    %v834 = vmul.f32 %v833, 1.442695
    %v835 = vpow.pop %v834
    %v836 = vadd.f32 %v835, 1.0
    %v837 = vrcp.pop %v836
    %v838 = vmul.f32 1.0, %v837
    %v839 = vadd.f32 %v320, %v788
    %v840 = vxor.u32 %v839, 2147483648
    %v841 = vmul.f32 %v840, 1.442695
    %v842 = vpow.pop %v841
    %v843 = vadd.f32 %v842, 1.0
    %v844 = vrcp.pop %v843
    %v845 = vmul.f32 1.0, %v844
    %v846 = vadd.f32 %v827, %v124
    %v847 = vmul.f32 %v838, %v846
    %v848 = vadd.f32 %v389, %v847
    %v849 = vtanh.pop %v848
    %v850 = vsub.f32 1.0, %v845
    %v851 = vmul.f32 %v850, %v849
    %v852 = vmul.f32 %v845, %v748
    %v853 = vadd.f32 %v851, %v852
    %854 = vst [vmem:[#allocation2 + $0x10] sm:$0xff] %v853
    %v855 = vpack.c.bf16 %v853, %v853
    %856 = vmatprep.subr.bf16.mxu0 %v515
    %857 = vmatpush1.bf16.msra.mxu0 %v514
    %858 = vmatprep.subr.bf16.mxu0 %v512
    %859 = vmatpush1.bf16.msra.mxu0 %v511
    %860 = vmatprep.subr.bf16.mxu0 %v509
    %861 = vmatpush1.bf16.msra.mxu0 %v508
    %862 = vmatprep.subr.bf16.mxu0 %v506
    %863 = vmatpush1.bf16.msra.mxu0 %v505
    %864 = vmatprep.subr.bf16.mxu0 %v503
    %865 = vmatpush1.bf16.msra.mxu0 %v502
    %866 = vmatprep.subr.bf16.mxu0 %v500
    %867 = vmatpush1.bf16.msra.mxu0 %v499
    %868 = vmatprep.subr.bf16.mxu0 %v497
    %869 = vmatpush1.bf16.msra.mxu0 %v496
    %870 = vmatprep.subr.bf16.mxu0 %v494
    %871 = vmatpush1.bf16.msra.mxu0 %v493
    %872 = vmatprep.subr.bf16.mxu0 0
    %873 = vmatpush2.bf16.msra.mxu0 0
    %874 = vmatprep.subr.bf16.mxu0 0
    %875 = vmatpush2.bf16.msra.mxu0 0
    %876 = vmatprep.subr.bf16.mxu0 0
    %877 = vmatpush2.bf16.msra.mxu0 0
    %878 = vmatprep.subr.bf16.mxu0 0
    %879 = vmatpush2.bf16.msra.mxu0 0
    %880 = vmatprep.subr.bf16.mxu0 0
    %881 = vmatpush2.bf16.msra.mxu0 0
    %882 = vmatprep.subr.bf16.mxu0 0
    %883 = vmatpush2.bf16.msra.mxu0 0
    %884 = vmatprep.subr.bf16.mxu0 0
    %885 = vmatpush2.bf16.msra.mxu0 0
    %886 = vmatprep.subr.bf16.mxu0 0
    %887 = vmatpush2.bf16.msra.mxu0 0
    %888 = vmatprep.mubr.bf16.mxu0 0
    %889 = vmatmul.mubr.bf16.gmra.mxu0 %v855
    %v890 = vpop.f32.mrf.mxu0
    %v891 = vadd.f32 0.0, %v890
    %v892 = vpop.f32.mrf.mxu0
    %v893 = vadd.f32 0.0, %v892
    %v894 = vpop.f32.mrf.mxu0
    %v895 = vpop.f32.mrf.mxu0
    %896 = vdwg.mxu0
    %897 = vmatprep.subr.bf16.mxu0 0
    %898 = vmatpush1.bf16.msra.mxu0 %v516
    %899 = vmatprep.subr.bf16.mxu0 0
    %900 = vmatpush1.bf16.msra.mxu0 %v513
    %901 = vmatprep.subr.bf16.mxu0 0
    %902 = vmatpush1.bf16.msra.mxu0 %v510
    %903 = vmatprep.subr.bf16.mxu0 0
    %904 = vmatpush1.bf16.msra.mxu0 %v507
    %905 = vmatprep.subr.bf16.mxu0 0
    %906 = vmatpush1.bf16.msra.mxu0 %v504
    %907 = vmatprep.subr.bf16.mxu0 0
    %908 = vmatpush1.bf16.msra.mxu0 %v501
    %909 = vmatprep.subr.bf16.mxu0 0
    %910 = vmatpush1.bf16.msra.mxu0 %v498
    %911 = vmatprep.subr.bf16.mxu0 0
    %912 = vmatpush1.bf16.msra.mxu0 %v495
    %913 = vmatprep.subr.bf16.mxu0 0
    %914 = vmatpush2.bf16.msra.mxu0 0
    %915 = vmatprep.subr.bf16.mxu0 0
    %916 = vmatpush2.bf16.msra.mxu0 0
    %917 = vmatprep.subr.bf16.mxu0 0
    %918 = vmatpush2.bf16.msra.mxu0 0
    %919 = vmatprep.subr.bf16.mxu0 0
    %920 = vmatpush2.bf16.msra.mxu0 0
    %921 = vmatprep.subr.bf16.mxu0 0
    %922 = vmatpush2.bf16.msra.mxu0 0
    %923 = vmatprep.subr.bf16.mxu0 0
    %924 = vmatpush2.bf16.msra.mxu0 0
    %925 = vmatprep.subr.bf16.mxu0 0
    %926 = vmatpush2.bf16.msra.mxu0 0
    %927 = vmatprep.subr.bf16.mxu0 0
    %928 = vmatpush2.bf16.msra.mxu0 0
    %929 = vmatprep.mubr.bf16.mxu0 0
    %930 = vmatmul.mubr.bf16.gmra.mxu0 %v855
    %v931 = vpop.f32.mrf.mxu0
    %v932 = vadd.f32 0.0, %v931
    %v933 = vpop.f32.mrf.mxu0
    %v934 = vpop.f32.mrf.mxu0
    %v935 = vpop.f32.mrf.mxu0
    %936 = vdwg.mxu0
    %v937 = vadd.f32 %v322, %v891
    %v938 = vxor.u32 %v937, 2147483648
    %v939 = vmul.f32 %v938, 1.442695
    %v940 = vpow.pop %v939
    %v941 = vadd.f32 %v940, 1.0
    %v942 = vrcp.pop %v941
    %v943 = vmul.f32 1.0, %v942
    %v944 = vadd.f32 %v324, %v893
    %v945 = vxor.u32 %v944, 2147483648
    %v946 = vmul.f32 %v945, 1.442695
    %v947 = vpow.pop %v946
    %v948 = vadd.f32 %v947, 1.0
    %v949 = vrcp.pop %v948
    %v950 = vmul.f32 1.0, %v949
    %v951 = vadd.f32 %v932, %v124
    %v952 = vmul.f32 %v943, %v951
    %v953 = vadd.f32 %v392, %v952
    %v954 = vtanh.pop %v953
    %v955 = vsub.f32 1.0, %v950
    %v956 = vmul.f32 %v955, %v954
    %v957 = vmul.f32 %v950, %v853
    %v958 = vadd.f32 %v956, %v957
    %959 = vst [vmem:[#allocation2 + $0x18] sm:$0xff] %v958
    %v960 = vpack.c.bf16 %v958, %v958
    %961 = vmatprep.subr.bf16.mxu0 %v515
    %962 = vmatpush1.bf16.msra.mxu0 %v514
    %963 = vmatprep.subr.bf16.mxu0 %v512
    %964 = vmatpush1.bf16.msra.mxu0 %v511
    %965 = vmatprep.subr.bf16.mxu0 %v509
    %966 = vmatpush1.bf16.msra.mxu0 %v508
    %967 = vmatprep.subr.bf16.mxu0 %v506
    %968 = vmatpush1.bf16.msra.mxu0 %v505
    %969 = vmatprep.subr.bf16.mxu0 %v503
    %970 = vmatpush1.bf16.msra.mxu0 %v502
    %971 = vmatprep.subr.bf16.mxu0 %v500
    %972 = vmatpush1.bf16.msra.mxu0 %v499
    %973 = vmatprep.subr.bf16.mxu0 %v497
    %974 = vmatpush1.bf16.msra.mxu0 %v496
    %975 = vmatprep.subr.bf16.mxu0 %v494
    %976 = vmatpush1.bf16.msra.mxu0 %v493
    %977 = vmatprep.subr.bf16.mxu0 0
    %978 = vmatpush2.bf16.msra.mxu0 0
    %979 = vmatprep.subr.bf16.mxu0 0
    %980 = vmatpush2.bf16.msra.mxu0 0
    %981 = vmatprep.subr.bf16.mxu0 0
    %982 = vmatpush2.bf16.msra.mxu0 0
    %983 = vmatprep.subr.bf16.mxu0 0
    %984 = vmatpush2.bf16.msra.mxu0 0
    %985 = vmatprep.subr.bf16.mxu0 0
    %986 = vmatpush2.bf16.msra.mxu0 0
    %987 = vmatprep.subr.bf16.mxu0 0
    %988 = vmatpush2.bf16.msra.mxu0 0
    %989 = vmatprep.subr.bf16.mxu0 0
    %990 = vmatpush2.bf16.msra.mxu0 0
    %991 = vmatprep.subr.bf16.mxu0 0
    %992 = vmatpush2.bf16.msra.mxu0 0
    %993 = vmatprep.mubr.bf16.mxu0 0
    %994 = vmatmul.mubr.bf16.gmra.mxu0 %v960
    %v995 = vpop.f32.mrf.mxu0
    %v996 = vadd.f32 0.0, %v995
    %v997 = vpop.f32.mrf.mxu0
    %v998 = vadd.f32 0.0, %v997
    %v999 = vpop.f32.mrf.mxu0
    %v1000 = vpop.f32.mrf.mxu0
    %1001 = vdwg.mxu0
    %1002 = vmatprep.subr.bf16.mxu0 0
    %1003 = vmatpush1.bf16.msra.mxu0 %v516
    %1004 = vmatprep.subr.bf16.mxu0 0
    %1005 = vmatpush1.bf16.msra.mxu0 %v513
    %1006 = vmatprep.subr.bf16.mxu0 0
    %1007 = vmatpush1.bf16.msra.mxu0 %v510
    %1008 = vmatprep.subr.bf16.mxu0 0
    %1009 = vmatpush1.bf16.msra.mxu0 %v507
    %1010 = vmatprep.subr.bf16.mxu0 0
    %1011 = vmatpush1.bf16.msra.mxu0 %v504
    %1012 = vmatprep.subr.bf16.mxu0 0
    %1013 = vmatpush1.bf16.msra.mxu0 %v501
    %1014 = vmatprep.subr.bf16.mxu0 0
    %1015 = vmatpush1.bf16.msra.mxu0 %v498
    %1016 = vmatprep.subr.bf16.mxu0 0
    %1017 = vmatpush1.bf16.msra.mxu0 %v495
    %1018 = vmatprep.subr.bf16.mxu0 0
    %1019 = vmatpush2.bf16.msra.mxu0 0
    %1020 = vmatprep.subr.bf16.mxu0 0
    %1021 = vmatpush2.bf16.msra.mxu0 0
    %1022 = vmatprep.subr.bf16.mxu0 0
    %1023 = vmatpush2.bf16.msra.mxu0 0
    %1024 = vmatprep.subr.bf16.mxu0 0
    %1025 = vmatpush2.bf16.msra.mxu0 0
    %1026 = vmatprep.subr.bf16.mxu0 0
    %1027 = vmatpush2.bf16.msra.mxu0 0
    %1028 = vmatprep.subr.bf16.mxu0 0
    %1029 = vmatpush2.bf16.msra.mxu0 0
    %1030 = vmatprep.subr.bf16.mxu0 0
    %1031 = vmatpush2.bf16.msra.mxu0 0
    %1032 = vmatprep.subr.bf16.mxu0 0
    %1033 = vmatpush2.bf16.msra.mxu0 0
    %1034 = vmatprep.mubr.bf16.mxu0 0
    %1035 = vmatmul.mubr.bf16.gmra.mxu0 %v960
    %v1036 = vpop.f32.mrf.mxu0
    %v1037 = vadd.f32 0.0, %v1036
    %v1038 = vpop.f32.mrf.mxu0
    %v1039 = vpop.f32.mrf.mxu0
    %v1040 = vpop.f32.mrf.mxu0
    %1041 = vdwg.mxu0
    %v1042 = vadd.f32 %v328, %v996
    %v1043 = vxor.u32 %v1042, 2147483648
    %v1044 = vmul.f32 %v1043, 1.442695
    %v1045 = vpow.pop %v1044
    %v1046 = vadd.f32 %v1045, 1.0
    %v1047 = vrcp.pop %v1046
    %v1048 = vmul.f32 1.0, %v1047
    %v1049 = vadd.f32 %v330, %v998
    %v1050 = vxor.u32 %v1049, 2147483648
    %v1051 = vmul.f32 %v1050, 1.442695
    %v1052 = vpow.pop %v1051
    %v1053 = vadd.f32 %v1052, 1.0
    %v1054 = vrcp.pop %v1053
    %v1055 = vmul.f32 1.0, %v1054
    %v1056 = vadd.f32 %v1037, %v124
    %v1057 = vmul.f32 %v1048, %v1056
    %v1058 = vadd.f32 %v397, %v1057
    %v1059 = vtanh.pop %v1058
    %v1060 = vsub.f32 1.0, %v1055
    %v1061 = vmul.f32 %v1060, %v1059
    %v1062 = vmul.f32 %v1055, %v958
    %v1063 = vadd.f32 %v1061, %v1062
    %1064 = vst [vmem:[#allocation2 + $0x20] sm:$0xff] %v1063
    %v1065 = vpack.c.bf16 %v1063, %v1063
    %1066 = vmatprep.subr.bf16.mxu0 %v515
    %1067 = vmatpush1.bf16.msra.mxu0 %v514
    %1068 = vmatprep.subr.bf16.mxu0 %v512
    %1069 = vmatpush1.bf16.msra.mxu0 %v511
    %1070 = vmatprep.subr.bf16.mxu0 %v509
    %1071 = vmatpush1.bf16.msra.mxu0 %v508
    %1072 = vmatprep.subr.bf16.mxu0 %v506
    %1073 = vmatpush1.bf16.msra.mxu0 %v505
    %1074 = vmatprep.subr.bf16.mxu0 %v503
    %1075 = vmatpush1.bf16.msra.mxu0 %v502
    %1076 = vmatprep.subr.bf16.mxu0 %v500
    %1077 = vmatpush1.bf16.msra.mxu0 %v499
    %1078 = vmatprep.subr.bf16.mxu0 %v497
    %1079 = vmatpush1.bf16.msra.mxu0 %v496
    %1080 = vmatprep.subr.bf16.mxu0 %v494
    %1081 = vmatpush1.bf16.msra.mxu0 %v493
    %1082 = vmatprep.subr.bf16.mxu0 0
    %1083 = vmatpush2.bf16.msra.mxu0 0
    %1084 = vmatprep.subr.bf16.mxu0 0
    %1085 = vmatpush2.bf16.msra.mxu0 0
    %1086 = vmatprep.subr.bf16.mxu0 0
    %1087 = vmatpush2.bf16.msra.mxu0 0
    %1088 = vmatprep.subr.bf16.mxu0 0
    %1089 = vmatpush2.bf16.msra.mxu0 0
    %1090 = vmatprep.subr.bf16.mxu0 0
    %1091 = vmatpush2.bf16.msra.mxu0 0
    %1092 = vmatprep.subr.bf16.mxu0 0
    %1093 = vmatpush2.bf16.msra.mxu0 0
    %1094 = vmatprep.subr.bf16.mxu0 0
    %1095 = vmatpush2.bf16.msra.mxu0 0
    %1096 = vmatprep.subr.bf16.mxu0 0
    %1097 = vmatpush2.bf16.msra.mxu0 0
    %1098 = vmatprep.mubr.bf16.mxu0 0
    %1099 = vmatmul.mubr.bf16.gmra.mxu0 %v1065
    %v1100 = vpop.f32.mrf.mxu0
    %v1101 = vadd.f32 0.0, %v1100
    %v1102 = vpop.f32.mrf.mxu0
    %v1103 = vadd.f32 0.0, %v1102
    %v1104 = vpop.f32.mrf.mxu0
    %v1105 = vpop.f32.mrf.mxu0
    %1106 = vdwg.mxu0
    %1107 = vmatprep.subr.bf16.mxu0 0
    %1108 = vmatpush1.bf16.msra.mxu0 %v516
    %1109 = vmatprep.subr.bf16.mxu0 0
    %1110 = vmatpush1.bf16.msra.mxu0 %v513
    %1111 = vmatprep.subr.bf16.mxu0 0
    %1112 = vmatpush1.bf16.msra.mxu0 %v510
    %1113 = vmatprep.subr.bf16.mxu0 0
    %1114 = vmatpush1.bf16.msra.mxu0 %v507
    %1115 = vmatprep.subr.bf16.mxu0 0
    %1116 = vmatpush1.bf16.msra.mxu0 %v504
    %1117 = vmatprep.subr.bf16.mxu0 0
    %1118 = vmatpush1.bf16.msra.mxu0 %v501
    %1119 = vmatprep.subr.bf16.mxu0 0
    %1120 = vmatpush1.bf16.msra.mxu0 %v498
    %1121 = vmatprep.subr.bf16.mxu0 0
    %1122 = vmatpush1.bf16.msra.mxu0 %v495
    %1123 = vmatprep.subr.bf16.mxu0 0
    %1124 = vmatpush2.bf16.msra.mxu0 0
    %1125 = vmatprep.subr.bf16.mxu0 0
    %1126 = vmatpush2.bf16.msra.mxu0 0
    %1127 = vmatprep.subr.bf16.mxu0 0
    %1128 = vmatpush2.bf16.msra.mxu0 0
    %1129 = vmatprep.subr.bf16.mxu0 0
    %1130 = vmatpush2.bf16.msra.mxu0 0
    %1131 = vmatprep.subr.bf16.mxu0 0
    %1132 = vmatpush2.bf16.msra.mxu0 0
    %1133 = vmatprep.subr.bf16.mxu0 0
    %1134 = vmatpush2.bf16.msra.mxu0 0
    %1135 = vmatprep.subr.bf16.mxu0 0
    %1136 = vmatpush2.bf16.msra.mxu0 0
    %1137 = vmatprep.subr.bf16.mxu0 0
    %1138 = vmatpush2.bf16.msra.mxu0 0
    %1139 = vmatprep.mubr.bf16.mxu0 0
    %1140 = vmatmul.mubr.bf16.gmra.mxu0 %v1065
    %v1141 = vpop.f32.mrf.mxu0
    %v1142 = vadd.f32 0.0, %v1141
    %v1143 = vpop.f32.mrf.mxu0
    %v1144 = vpop.f32.mrf.mxu0
    %v1145 = vpop.f32.mrf.mxu0
    %1146 = vdwg.mxu0
    %v1147 = vadd.f32 %v332, %v1101
    %v1148 = vxor.u32 %v1147, 2147483648
    %v1149 = vmul.f32 %v1148, 1.442695
    %v1150 = vpow.pop %v1149
    %v1151 = vadd.f32 %v1150, 1.0
    %v1152 = vrcp.pop %v1151
    %v1153 = vmul.f32 1.0, %v1152
    %v1154 = vadd.f32 %v334, %v1103
    %v1155 = vxor.u32 %v1154, 2147483648
    %v1156 = vmul.f32 %v1155, 1.442695
    %v1157 = vpow.pop %v1156
    %v1158 = vadd.f32 %v1157, 1.0
    %v1159 = vrcp.pop %v1158
    %v1160 = vmul.f32 1.0, %v1159
    %v1161 = vadd.f32 %v1142, %v124
    %v1162 = vmul.f32 %v1153, %v1161
    %v1163 = vadd.f32 %v400, %v1162
    %v1164 = vtanh.pop %v1163
    %v1165 = vsub.f32 1.0, %v1160
    %v1166 = vmul.f32 %v1165, %v1164
    %v1167 = vmul.f32 %v1160, %v1063
    %v1168 = vadd.f32 %v1166, %v1167
    %1169 = vst [vmem:[#allocation2 + $0x28] sm:$0xff] %v1168
    %v1170 = vpack.c.bf16 %v1168, %v1168
    %1171 = vmatprep.subr.bf16.mxu0 %v515
    %1172 = vmatpush1.bf16.msra.mxu0 %v514
    %1173 = vmatprep.subr.bf16.mxu0 %v512
    %1174 = vmatpush1.bf16.msra.mxu0 %v511
    %1175 = vmatprep.subr.bf16.mxu0 %v509
    %1176 = vmatpush1.bf16.msra.mxu0 %v508
    %1177 = vmatprep.subr.bf16.mxu0 %v506
    %1178 = vmatpush1.bf16.msra.mxu0 %v505
    %1179 = vmatprep.subr.bf16.mxu0 %v503
    %1180 = vmatpush1.bf16.msra.mxu0 %v502
    %1181 = vmatprep.subr.bf16.mxu0 %v500
    %1182 = vmatpush1.bf16.msra.mxu0 %v499
    %1183 = vmatprep.subr.bf16.mxu0 %v497
    %1184 = vmatpush1.bf16.msra.mxu0 %v496
    %1185 = vmatprep.subr.bf16.mxu0 %v494
    %1186 = vmatpush1.bf16.msra.mxu0 %v493
    %1187 = vmatprep.subr.bf16.mxu0 0
    %1188 = vmatpush2.bf16.msra.mxu0 0
    %1189 = vmatprep.subr.bf16.mxu0 0
    %1190 = vmatpush2.bf16.msra.mxu0 0
    %1191 = vmatprep.subr.bf16.mxu0 0
    %1192 = vmatpush2.bf16.msra.mxu0 0
    %1193 = vmatprep.subr.bf16.mxu0 0
    %1194 = vmatpush2.bf16.msra.mxu0 0
    %1195 = vmatprep.subr.bf16.mxu0 0
    %1196 = vmatpush2.bf16.msra.mxu0 0
    %1197 = vmatprep.subr.bf16.mxu0 0
    %1198 = vmatpush2.bf16.msra.mxu0 0
    %1199 = vmatprep.subr.bf16.mxu0 0
    %1200 = vmatpush2.bf16.msra.mxu0 0
    %1201 = vmatprep.subr.bf16.mxu0 0
    %1202 = vmatpush2.bf16.msra.mxu0 0
    %1203 = vmatprep.mubr.bf16.mxu0 0
    %1204 = vmatmul.mubr.bf16.gmra.mxu0 %v1170
    %v1205 = vpop.f32.mrf.mxu0
    %v1206 = vadd.f32 0.0, %v1205
    %v1207 = vpop.f32.mrf.mxu0
    %v1208 = vadd.f32 0.0, %v1207
    %v1209 = vpop.f32.mrf.mxu0
    %v1210 = vpop.f32.mrf.mxu0
    %1211 = vdwg.mxu0
    %1212 = vmatprep.subr.bf16.mxu0 0
    %1213 = vmatpush1.bf16.msra.mxu0 %v516
    %1214 = vmatprep.subr.bf16.mxu0 0
    %1215 = vmatpush1.bf16.msra.mxu0 %v513
    %1216 = vmatprep.subr.bf16.mxu0 0
    %1217 = vmatpush1.bf16.msra.mxu0 %v510
    %1218 = vmatprep.subr.bf16.mxu0 0
    %1219 = vmatpush1.bf16.msra.mxu0 %v507
    %1220 = vmatprep.subr.bf16.mxu0 0
    %1221 = vmatpush1.bf16.msra.mxu0 %v504
    %1222 = vmatprep.subr.bf16.mxu0 0
    %1223 = vmatpush1.bf16.msra.mxu0 %v501
    %1224 = vmatprep.subr.bf16.mxu0 0
    %1225 = vmatpush1.bf16.msra.mxu0 %v498
    %1226 = vmatprep.subr.bf16.mxu0 0
    %1227 = vmatpush1.bf16.msra.mxu0 %v495
    %1228 = vmatprep.subr.bf16.mxu0 0
    %1229 = vmatpush2.bf16.msra.mxu0 0
    %1230 = vmatprep.subr.bf16.mxu0 0
    %1231 = vmatpush2.bf16.msra.mxu0 0
    %1232 = vmatprep.subr.bf16.mxu0 0
    %1233 = vmatpush2.bf16.msra.mxu0 0
    %1234 = vmatprep.subr.bf16.mxu0 0
    %1235 = vmatpush2.bf16.msra.mxu0 0
    %1236 = vmatprep.subr.bf16.mxu0 0
    %1237 = vmatpush2.bf16.msra.mxu0 0
    %1238 = vmatprep.subr.bf16.mxu0 0
    %1239 = vmatpush2.bf16.msra.mxu0 0
    %1240 = vmatprep.subr.bf16.mxu0 0
    %1241 = vmatpush2.bf16.msra.mxu0 0
    %1242 = vmatprep.subr.bf16.mxu0 0
    %1243 = vmatpush2.bf16.msra.mxu0 0
    %1244 = vmatprep.mubr.bf16.mxu0 0
    %1245 = vmatmul.mubr.bf16.gmra.mxu0 %v1170
    %v1246 = vpop.f32.mrf.mxu0
    %v1247 = vadd.f32 0.0, %v1246
    %v1248 = vpop.f32.mrf.mxu0
    %v1249 = vpop.f32.mrf.mxu0
    %v1250 = vpop.f32.mrf.mxu0
    %1251 = vdwg.mxu0
    %v1252 = vadd.f32 %v338, %v1206
    %v1253 = vxor.u32 %v1252, 2147483648
    %v1254 = vmul.f32 %v1253, 1.442695
    %v1255 = vpow.pop %v1254
    %v1256 = vadd.f32 %v1255, 1.0
    %v1257 = vrcp.pop %v1256
    %v1258 = vmul.f32 1.0, %v1257
    %v1259 = vadd.f32 %v340, %v1208
    %v1260 = vxor.u32 %v1259, 2147483648
    %v1261 = vmul.f32 %v1260, 1.442695
    %v1262 = vpow.pop %v1261
    %v1263 = vadd.f32 %v1262, 1.0
    %v1264 = vrcp.pop %v1263
    %v1265 = vmul.f32 1.0, %v1264
    %v1266 = vadd.f32 %v1247, %v124
    %v1267 = vmul.f32 %v1258, %v1266
    %v1268 = vadd.f32 %v405, %v1267
    %v1269 = vtanh.pop %v1268
    %v1270 = vsub.f32 1.0, %v1265
    %v1271 = vmul.f32 %v1270, %v1269
    %v1272 = vmul.f32 %v1265, %v1168
    %v1273 = vadd.f32 %v1271, %v1272
    %1274 = vst [vmem:[#allocation2 + $0x30] sm:$0xff] %v1273
    %v1275 = vpack.c.bf16 %v1273, %v1273
    %1276 = vmatprep.subr.bf16.mxu0 %v515
    %1277 = vmatpush1.bf16.msra.mxu0 %v514
    %1278 = vmatprep.subr.bf16.mxu0 %v512
    %1279 = vmatpush1.bf16.msra.mxu0 %v511
    %1280 = vmatprep.subr.bf16.mxu0 %v509
    %1281 = vmatpush1.bf16.msra.mxu0 %v508
    %1282 = vmatprep.subr.bf16.mxu0 %v506
    %1283 = vmatpush1.bf16.msra.mxu0 %v505
    %1284 = vmatprep.subr.bf16.mxu0 %v503
    %1285 = vmatpush1.bf16.msra.mxu0 %v502
    %1286 = vmatprep.subr.bf16.mxu0 %v500
    %1287 = vmatpush1.bf16.msra.mxu0 %v499
    %1288 = vmatprep.subr.bf16.mxu0 %v497
    %1289 = vmatpush1.bf16.msra.mxu0 %v496
    %1290 = vmatprep.subr.bf16.mxu0 %v494
    %1291 = vmatpush1.bf16.msra.mxu0 %v493
    %1292 = vmatprep.subr.bf16.mxu0 0
    %1293 = vmatpush2.bf16.msra.mxu0 0
    %1294 = vmatprep.subr.bf16.mxu0 0
    %1295 = vmatpush2.bf16.msra.mxu0 0
    %1296 = vmatprep.subr.bf16.mxu0 0
    %1297 = vmatpush2.bf16.msra.mxu0 0
    %1298 = vmatprep.subr.bf16.mxu0 0
    %1299 = vmatpush2.bf16.msra.mxu0 0
    %1300 = vmatprep.subr.bf16.mxu0 0
    %1301 = vmatpush2.bf16.msra.mxu0 0
    %1302 = vmatprep.subr.bf16.mxu0 0
    %1303 = vmatpush2.bf16.msra.mxu0 0
    %1304 = vmatprep.subr.bf16.mxu0 0
    %1305 = vmatpush2.bf16.msra.mxu0 0
    %1306 = vmatprep.subr.bf16.mxu0 0
    %1307 = vmatpush2.bf16.msra.mxu0 0
    %1308 = vmatprep.mubr.bf16.mxu0 0
    %1309 = vmatmul.mubr.bf16.gmra.mxu0 %v1275
    %v1310 = vpop.f32.mrf.mxu0
    %v1311 = vadd.f32 0.0, %v1310
    %v1312 = vpop.f32.mrf.mxu0
    %v1313 = vadd.f32 0.0, %v1312
    %v1314 = vpop.f32.mrf.mxu0
    %v1315 = vpop.f32.mrf.mxu0
    %1316 = vdwg.mxu0
    %1317 = vmatprep.subr.bf16.mxu0 0
    %1318 = vmatpush1.bf16.msra.mxu0 %v516
    %1319 = vmatprep.subr.bf16.mxu0 0
    %1320 = vmatpush1.bf16.msra.mxu0 %v513
    %1321 = vmatprep.subr.bf16.mxu0 0
    %1322 = vmatpush1.bf16.msra.mxu0 %v510
    %1323 = vmatprep.subr.bf16.mxu0 0
    %1324 = vmatpush1.bf16.msra.mxu0 %v507
    %1325 = vmatprep.subr.bf16.mxu0 0
    %1326 = vmatpush1.bf16.msra.mxu0 %v504
    %1327 = vmatprep.subr.bf16.mxu0 0
    %1328 = vmatpush1.bf16.msra.mxu0 %v501
    %1329 = vmatprep.subr.bf16.mxu0 0
    %1330 = vmatpush1.bf16.msra.mxu0 %v498
    %1331 = vmatprep.subr.bf16.mxu0 0
    %1332 = vmatpush1.bf16.msra.mxu0 %v495
    %1333 = vmatprep.subr.bf16.mxu0 0
    %1334 = vmatpush2.bf16.msra.mxu0 0
    %1335 = vmatprep.subr.bf16.mxu0 0
    %1336 = vmatpush2.bf16.msra.mxu0 0
    %1337 = vmatprep.subr.bf16.mxu0 0
    %1338 = vmatpush2.bf16.msra.mxu0 0
    %1339 = vmatprep.subr.bf16.mxu0 0
    %1340 = vmatpush2.bf16.msra.mxu0 0
    %1341 = vmatprep.subr.bf16.mxu0 0
    %1342 = vmatpush2.bf16.msra.mxu0 0
    %1343 = vmatprep.subr.bf16.mxu0 0
    %1344 = vmatpush2.bf16.msra.mxu0 0
    %1345 = vmatprep.subr.bf16.mxu0 0
    %1346 = vmatpush2.bf16.msra.mxu0 0
    %1347 = vmatprep.subr.bf16.mxu0 0
    %1348 = vmatpush2.bf16.msra.mxu0 0
    %1349 = vmatprep.mubr.bf16.mxu0 0
    %1350 = vmatmul.mubr.bf16.gmra.mxu0 %v1275
    %v1351 = vpop.f32.mrf.mxu0
    %v1352 = vadd.f32 0.0, %v1351
    %v1353 = vpop.f32.mrf.mxu0
    %v1354 = vpop.f32.mrf.mxu0
    %v1355 = vpop.f32.mrf.mxu0
    %1356 = vdwg.mxu0
    %v1357 = vadd.f32 %v342, %v1311
    %v1358 = vxor.u32 %v1357, 2147483648
    %v1359 = vmul.f32 %v1358, 1.442695
    %v1360 = vpow.pop %v1359
    %v1361 = vadd.f32 %v1360, 1.0
    %v1362 = vrcp.pop %v1361
    %v1363 = vmul.f32 1.0, %v1362
    %v1364 = vadd.f32 %v344, %v1313
    %v1365 = vxor.u32 %v1364, 2147483648
    %v1366 = vmul.f32 %v1365, 1.442695
    %v1367 = vpow.pop %v1366
    %v1368 = vadd.f32 %v1367, 1.0
    %v1369 = vrcp.pop %v1368
    %v1370 = vmul.f32 1.0, %v1369
    %v1371 = vadd.f32 %v1352, %v124
    %v1372 = vmul.f32 %v1363, %v1371
    %v1373 = vadd.f32 %v408, %v1372
    %v1374 = vtanh.pop %v1373
    %v1375 = vsub.f32 1.0, %v1370
    %v1376 = vmul.f32 %v1375, %v1374
    %v1377 = vmul.f32 %v1370, %v1273
    %v1378 = vadd.f32 %v1376, %v1377
    %1379 = vst [vmem:[#allocation2 + $0x38] sm:$0xff] %v1378
    %1380 = vst [vmem:[%s6] sm:$0xff] %v1378
    %v1381 = vld [vmem:[#allocation2] sm:$0xff]
    %v1382 = vld [vmem:[#allocation2 + $0x8] sm:$0xff]
    %v1383 = vld [vmem:[#allocation2 + $0x10] sm:$0xff]
    %v1384 = vld [vmem:[#allocation2 + $0x18] sm:$0xff]
    %v1385 = vld [vmem:[#allocation2 + $0x20] sm:$0xff]
    %v1386 = vld [vmem:[#allocation2 + $0x28] sm:$0xff]
    %v1387 = vld [vmem:[#allocation2 + $0x30] sm:$0xff]
    %v1388 = vld [vmem:[#allocation2 + $0x38] sm:$0xff]
    %v1389 = vld [vmem:[#allocation3 + $0x180] sm:$0xff]
    %v1390 = vld [vmem:[#allocation3 + $0x188] sm:$0xf]
    %v1391 = vld [vmem:[#allocation3 + $0x18c] sm:$0xff]
    %v1392 = vld [vmem:[#allocation3 + $0x194] sm:$0xf]
    %v1393 = vld [vmem:[#allocation3 + $0x198] sm:$0xff]
    %v1394 = vld [vmem:[#allocation3 + $0x1a0] sm:$0xf]
    %v1395 = vld [vmem:[#allocation3 + $0x1a4] sm:$0xff]
    %v1396 = vld [vmem:[#allocation3 + $0x1ac] sm:$0xf]
    %v1397 = vld [vmem:[#allocation3 + $0x1b0] sm:$0xff]
    %v1398 = vld [vmem:[#allocation3 + $0x1b8] sm:$0xf]
    %v1399 = vld [vmem:[#allocation3 + $0x1bc] sm:$0xff]
    %v1400 = vld [vmem:[#allocation3 + $0x1c4] sm:$0xf]
    %v1401 = vld [vmem:[#allocation3 + $0x1c8] sm:$0xff]
    %v1402 = vld [vmem:[#allocation3 + $0x1d0] sm:$0xf]
    %v1403 = vld [vmem:[#allocation3 + $0x1d4] sm:$0xff]
    %v1404 = vld [vmem:[#allocation3 + $0x1dc] sm:$0xf]
    %v1405 = vld [vmem:[#allocation3 + $0x1e0] sm:$0xff]
    %v1406 = vld [vmem:[#allocation3 + $0x1e8] sm:$0xf]
    %v1407 = vld [vmem:[#allocation3 + $0x1ec] sm:$0xff]
    %v1408 = vld [vmem:[#allocation3 + $0x1f4] sm:$0xf]
    %v1409 = vld [vmem:[#allocation3 + $0x1f8] sm:$0xff]
    %v1410 = vld [vmem:[#allocation3 + $0x200] sm:$0xf]
    %v1411 = vld [vmem:[#allocation3 + $0x204] sm:$0xff]
    %v1412 = vld [vmem:[#allocation3 + $0x20c] sm:$0xf]
    %v1413 = vld [vmem:[#allocation3 + $0x210] sm:$0xff]
    %v1414 = vld [vmem:[#allocation3 + $0x218] sm:$0xf]
    %v1415 = vld [vmem:[#allocation3 + $0x21c] sm:$0xff]
    %v1416 = vld [vmem:[#allocation3 + $0x224] sm:$0xf]
    %v1417 = vld [vmem:[#allocation3 + $0x228] sm:$0xff]
    %v1418 = vld [vmem:[#allocation3 + $0x230] sm:$0xf]
    %v1419 = vld [vmem:[#allocation3 + $0x234] sm:$0xff]
    %v1420 = vld [vmem:[#allocation3 + $0x23c] sm:$0xf]
    %v1421 = vld [vmem:[#allocation3 + $0x240] sm:$0xff]
    %v1422 = vld [vmem:[#allocation3 + $0x248] sm:$0xf]
    %v1423 = vld [vmem:[#allocation3 + $0x24c] sm:$0xff]
    %v1424 = vld [vmem:[#allocation3 + $0x254] sm:$0xf]
    %v1425 = vld [vmem:[#allocation3 + $0x258] sm:$0xff]
    %v1426 = vld [vmem:[#allocation3 + $0x260] sm:$0xf]
    %v1427 = vld [vmem:[#allocation3 + $0x264] sm:$0xff]
    %v1428 = vld [vmem:[#allocation3 + $0x26c] sm:$0xf]
    %v1429 = vld [vmem:[#allocation3 + $0x270] sm:$0xff]
    %v1430 = vld [vmem:[#allocation3 + $0x278] sm:$0xf]
    %v1431 = vld [vmem:[#allocation3 + $0x27c] sm:$0xff]
    %v1432 = vld [vmem:[#allocation3 + $0x284] sm:$0xf]
    %v1433 = vld [vmem:[#allocation3 + $0x288] sm:$0xff]
    %v1434 = vld [vmem:[#allocation3 + $0x290] sm:$0xf]
    %v1435 = vld [vmem:[#allocation3 + $0x294] sm:$0xff]
    %v1436 = vld [vmem:[#allocation3 + $0x29c] sm:$0xf]
    %v1437 = vld [vmem:[#allocation3 + $0x2a0] sm:$0xff]
    %v1438 = vld [vmem:[#allocation3 + $0x2a8] sm:$0xf]
    %v1439 = vld [vmem:[#allocation3 + $0x2ac] sm:$0xff]
    %v1440 = vld [vmem:[#allocation3 + $0x2b4] sm:$0xf]
    %v1441 = vld [vmem:[#allocation3 + $0x2b8] sm:$0xff]
    %v1442 = vld [vmem:[#allocation3 + $0x2c0] sm:$0xf]
    %v1443 = vld [vmem:[#allocation3 + $0x2c4] sm:$0xff]
    %v1444 = vld [vmem:[#allocation3 + $0x2cc] sm:$0xf]
    %v1445 = vld [vmem:[#allocation3 + $0x2d0] sm:$0xff]
    %v1446 = vld [vmem:[#allocation3 + $0x2d8] sm:$0xf]
    %v1447 = vld [vmem:[#allocation3 + $0x2dc] sm:$0xff]
    %v1448 = vld [vmem:[#allocation3 + $0x2e4] sm:$0xf]
    %v1449 = vld [vmem:[#allocation3 + $0x2e8] sm:$0xff]
    %v1450 = vld [vmem:[#allocation3 + $0x2f0] sm:$0xf]
    %v1451 = vld [vmem:[#allocation3 + $0x2f4] sm:$0xff]
    %v1452 = vld [vmem:[#allocation3 + $0x2fc] sm:$0xf]
    %s1453 = scalar_lea.vmem %s3, 2
    %v1454 = vld [vmem:[%s1453] ss:$8 sm:$0x7]
    %v1455 = vld [vmem:[%s3 + $0x3] ss:$0 sm:$0xff]
    %v1456 = vpack.c.bf16 %v1382, %v1381
    %v1457 = vpack.c.bf16 %v1384, %v1383
    %v1458 = vpack.c.bf16 %v1386, %v1385
    %v1459 = vpack.c.bf16 %v1388, %v1387
    %v1461 = vlaneseq
    %v1462 = vshrl.u32 %v1461, 7
    %v1463 = vsub.s32 0, %v1462
    %v1464 = vrot.slane %v1454, %v1463
    %v1465 = vlaneseq
    %v1466 = vshrl.u32 %v1465, 7
    %v1467 = vsub.s32 1, %v1466
    %v1468 = vrot.slane %v1454, %v1467
    %v1469 = vlaneseq
    %v1470 = vshrl.u32 %v1469, 7
    %v1471 = vsub.s32 2, %v1470
    %v1472 = vrot.slane %v1454, %v1471
    %v1508 = vunpack.c.l.b16 %v1389
    %v1509 = vunpack.c.h.b16 %v1389
    %v1510 = vunpack.c.l.b16 %v1390
    %v1511 = vunpack.c.l.b16 %v1391
    %v1512 = vunpack.c.h.b16 %v1391
    %v1513 = vunpack.c.l.b16 %v1392
    %v1514 = vunpack.c.l.b16 %v1393
    %v1515 = vunpack.c.h.b16 %v1393
    %v1516 = vunpack.c.l.b16 %v1394
    %v1517 = vunpack.c.l.b16 %v1395
    %v1518 = vunpack.c.h.b16 %v1395
    %v1519 = vunpack.c.l.b16 %v1396
    %v1520 = vunpack.c.l.b16 %v1397
    %v1521 = vunpack.c.h.b16 %v1397
    %v1522 = vunpack.c.l.b16 %v1398
    %v1523 = vunpack.c.l.b16 %v1399
    %v1524 = vunpack.c.h.b16 %v1399
    %v1525 = vunpack.c.l.b16 %v1400
    %v1526 = vunpack.c.l.b16 %v1401
    %v1527 = vunpack.c.h.b16 %v1401
    %v1528 = vunpack.c.l.b16 %v1402
    %v1529 = vunpack.c.l.b16 %v1403
    %v1530 = vunpack.c.h.b16 %v1403
    %v1531 = vunpack.c.l.b16 %v1404
    %v1532 = vunpack.c.l.b16 %v1405
    %v1533 = vunpack.c.h.b16 %v1405
    %v1534 = vunpack.c.l.b16 %v1406
    %v1535 = vunpack.c.l.b16 %v1407
    %v1536 = vunpack.c.h.b16 %v1407
    %v1537 = vunpack.c.l.b16 %v1408
    %v1538 = vunpack.c.l.b16 %v1409
    %v1539 = vunpack.c.h.b16 %v1409
    %v1540 = vunpack.c.l.b16 %v1410
    %v1541 = vunpack.c.l.b16 %v1411
    %v1542 = vunpack.c.h.b16 %v1411
    %v1543 = vunpack.c.l.b16 %v1412
    %v1544 = vunpack.c.l.b16 %v1413
    %v1545 = vunpack.c.h.b16 %v1413
    %v1546 = vunpack.c.l.b16 %v1414
    %v1547 = vunpack.c.l.b16 %v1415
    %v1548 = vunpack.c.h.b16 %v1415
    %v1549 = vunpack.c.l.b16 %v1416
    %v1550 = vunpack.c.l.b16 %v1417
    %v1551 = vunpack.c.h.b16 %v1417
    %v1552 = vunpack.c.l.b16 %v1418
    %v1553 = vunpack.c.l.b16 %v1419
    %v1554 = vunpack.c.h.b16 %v1419
    %v1555 = vunpack.c.l.b16 %v1420
    %v1556 = vpack.c.b16 %v1511, %v1508
    %v1557 = vpack.c.b16 %v1512, %v1509
    %v1558 = vpack.c.b16 %v1513, %v1510
    %v1559 = vpack.c.b16 %v1517, %v1514
    %v1560 = vpack.c.b16 %v1518, %v1515
    %v1561 = vpack.c.b16 %v1519, %v1516
    %v1562 = vpack.c.b16 %v1523, %v1520
    %v1563 = vpack.c.b16 %v1524, %v1521
    %v1564 = vpack.c.b16 %v1525, %v1522
    %v1565 = vpack.c.b16 %v1529, %v1526
    %v1566 = vpack.c.b16 %v1530, %v1527
    %v1567 = vpack.c.b16 %v1531, %v1528
    %v1568 = vpack.c.b16 %v1535, %v1532
    %v1569 = vpack.c.b16 %v1536, %v1533
    %v1570 = vpack.c.b16 %v1537, %v1534
    %v1571 = vpack.c.b16 %v1541, %v1538
    %v1572 = vpack.c.b16 %v1542, %v1539
    %v1573 = vpack.c.b16 %v1543, %v1540
    %v1574 = vpack.c.b16 %v1547, %v1544
    %v1575 = vpack.c.b16 %v1548, %v1545
    %v1576 = vpack.c.b16 %v1549, %v1546
    %v1577 = vpack.c.b16 %v1553, %v1550
    %v1578 = vpack.c.b16 %v1554, %v1551
    %v1579 = vpack.c.b16 %v1555, %v1552
    %1604 = vmatprep.subr.bf16.mxu0 %v1578
    %1605 = vmatpush1.bf16.msra.mxu0 %v1577
    %1606 = vmatprep.subr.bf16.mxu0 %v1575
    %1607 = vmatpush1.bf16.msra.mxu0 %v1574
    %1608 = vmatprep.subr.bf16.mxu0 %v1572
    %1609 = vmatpush1.bf16.msra.mxu0 %v1571
    %1610 = vmatprep.subr.bf16.mxu0 %v1569
    %1611 = vmatpush1.bf16.msra.mxu0 %v1568
    %1612 = vmatprep.subr.bf16.mxu0 %v1566
    %1613 = vmatpush1.bf16.msra.mxu0 %v1565
    %1614 = vmatprep.subr.bf16.mxu0 %v1563
    %1615 = vmatpush1.bf16.msra.mxu0 %v1562
    %1616 = vmatprep.subr.bf16.mxu0 %v1560
    %1617 = vmatpush1.bf16.msra.mxu0 %v1559
    %1618 = vmatprep.subr.bf16.mxu0 %v1557
    %1619 = vmatpush1.bf16.msra.mxu0 %v1556
    %1620 = vmatprep.subr.bf16.mxu0 0
    %1621 = vmatpush2.bf16.msra.mxu0 0
    %1622 = vmatprep.subr.bf16.mxu0 0
    %1623 = vmatpush2.bf16.msra.mxu0 0
    %1624 = vmatprep.subr.bf16.mxu0 0
    %1625 = vmatpush2.bf16.msra.mxu0 0
    %1626 = vmatprep.subr.bf16.mxu0 0
    %1627 = vmatpush2.bf16.msra.mxu0 0
    %1628 = vmatprep.subr.bf16.mxu0 0
    %1629 = vmatpush2.bf16.msra.mxu0 0
    %1630 = vmatprep.subr.bf16.mxu0 0
    %1631 = vmatpush2.bf16.msra.mxu0 0
    %1632 = vmatprep.subr.bf16.mxu0 0
    %1633 = vmatpush2.bf16.msra.mxu0 0
    %1634 = vmatprep.subr.bf16.mxu0 0
    %1635 = vmatpush2.bf16.msra.mxu0 0
    %1636 = vmatprep.mubr.bf16.mxu0 0
    %1637 = vmatmul.mubr.bf16.gmra.mxu0 %v1456
    %v1638 = vpop.f32.mrf.mxu0
    %v1639 = vadd.f32 %v1464, %v1638
    %v1640 = vpop.f32.mrf.mxu0
    %v1641 = vadd.f32 %v1468, %v1640
    %v1642 = vpop.f32.mrf.mxu0
    %v1643 = vadd.f32 %v1464, %v1642
    %v1644 = vpop.f32.mrf.mxu0
    %v1645 = vadd.f32 %v1468, %v1644
    %1646 = vmatprep.mubr.bf16.mxu0 0
    %1647 = vmatmul.mubr.bf16.gmra.mxu0 %v1457
    %v1648 = vpop.f32.mrf.mxu0
    %v1649 = vadd.f32 %v1464, %v1648
    %v1650 = vpop.f32.mrf.mxu0
    %v1651 = vadd.f32 %v1468, %v1650
    %v1652 = vpop.f32.mrf.mxu0
    %v1653 = vadd.f32 %v1464, %v1652
    %v1654 = vpop.f32.mrf.mxu0
    %v1655 = vadd.f32 %v1468, %v1654
    %1656 = vmatprep.mubr.bf16.mxu0 0
    %1657 = vmatmul.mubr.bf16.gmra.mxu0 %v1458
    %v1658 = vpop.f32.mrf.mxu0
    %v1659 = vadd.f32 %v1464, %v1658
    %v1660 = vpop.f32.mrf.mxu0
    %v1661 = vadd.f32 %v1468, %v1660
    %v1662 = vpop.f32.mrf.mxu0
    %v1663 = vadd.f32 %v1464, %v1662
    %v1664 = vpop.f32.mrf.mxu0
    %v1665 = vadd.f32 %v1468, %v1664
    %1666 = vmatprep.mubr.bf16.mxu0 0
    %1667 = vmatmul.mubr.bf16.gmra.mxu0 %v1459
    %v1668 = vpop.f32.mrf.mxu0
    %v1669 = vadd.f32 %v1464, %v1668
    %v1670 = vpop.f32.mrf.mxu0
    %v1671 = vadd.f32 %v1468, %v1670
    %v1672 = vpop.f32.mrf.mxu0
    %v1673 = vadd.f32 %v1464, %v1672
    %v1674 = vpop.f32.mrf.mxu0
    %v1675 = vadd.f32 %v1468, %v1674
    %1676 = vdwg.mxu0
    %1677 = vmatprep.subr.bf16.mxu0 0
    %1678 = vmatpush1.bf16.msra.mxu0 %v1579
    %1679 = vmatprep.subr.bf16.mxu0 0
    %1680 = vmatpush1.bf16.msra.mxu0 %v1576
    %1681 = vmatprep.subr.bf16.mxu0 0
    %1682 = vmatpush1.bf16.msra.mxu0 %v1573
    %1683 = vmatprep.subr.bf16.mxu0 0
    %1684 = vmatpush1.bf16.msra.mxu0 %v1570
    %1685 = vmatprep.subr.bf16.mxu0 0
    %1686 = vmatpush1.bf16.msra.mxu0 %v1567
    %1687 = vmatprep.subr.bf16.mxu0 0
    %1688 = vmatpush1.bf16.msra.mxu0 %v1564
    %1689 = vmatprep.subr.bf16.mxu0 0
    %1690 = vmatpush1.bf16.msra.mxu0 %v1561
    %1691 = vmatprep.subr.bf16.mxu0 0
    %1692 = vmatpush1.bf16.msra.mxu0 %v1558
    %1693 = vmatprep.subr.bf16.mxu0 0
    %1694 = vmatpush2.bf16.msra.mxu0 0
    %1695 = vmatprep.subr.bf16.mxu0 0
    %1696 = vmatpush2.bf16.msra.mxu0 0
    %1697 = vmatprep.subr.bf16.mxu0 0
    %1698 = vmatpush2.bf16.msra.mxu0 0
    %1699 = vmatprep.subr.bf16.mxu0 0
    %1700 = vmatpush2.bf16.msra.mxu0 0
    %1701 = vmatprep.subr.bf16.mxu0 0
    %1702 = vmatpush2.bf16.msra.mxu0 0
    %1703 = vmatprep.subr.bf16.mxu0 0
    %1704 = vmatpush2.bf16.msra.mxu0 0
    %1705 = vmatprep.subr.bf16.mxu0 0
    %1706 = vmatpush2.bf16.msra.mxu0 0
    %1707 = vmatprep.subr.bf16.mxu0 0
    %1708 = vmatpush2.bf16.msra.mxu0 0
    %1709 = vmatprep.mubr.bf16.mxu0 0
    %1710 = vmatmul.mubr.bf16.gmra.mxu0 %v1456
    %v1711 = vpop.f32.mrf.mxu0
    %v1712 = vadd.f32 %v1472, %v1711
    %v1713 = vpop.f32.mrf.mxu0
    %v1714 = vpop.f32.mrf.mxu0
    %v1715 = vadd.f32 %v1472, %v1714
    %v1716 = vpop.f32.mrf.mxu0
    %1717 = vmatprep.mubr.bf16.mxu0 0
    %1718 = vmatmul.mubr.bf16.gmra.mxu0 %v1457
    %v1719 = vpop.f32.mrf.mxu0
    %v1720 = vadd.f32 %v1472, %v1719
    %v1721 = vpop.f32.mrf.mxu0
    %v1722 = vpop.f32.mrf.mxu0
    %v1723 = vadd.f32 %v1472, %v1722
    %v1724 = vpop.f32.mrf.mxu0
    %1725 = vmatprep.mubr.bf16.mxu0 0
    %1726 = vmatmul.mubr.bf16.gmra.mxu0 %v1458
    %v1727 = vpop.f32.mrf.mxu0
    %v1728 = vadd.f32 %v1472, %v1727
    %v1729 = vpop.f32.mrf.mxu0
    %v1730 = vpop.f32.mrf.mxu0
    %v1731 = vadd.f32 %v1472, %v1730
    %v1732 = vpop.f32.mrf.mxu0
    %1733 = vmatprep.mubr.bf16.mxu0 0
    %1734 = vmatmul.mubr.bf16.gmra.mxu0 %v1459
    %v1735 = vpop.f32.mrf.mxu0
    %v1736 = vadd.f32 %v1472, %v1735
    %v1737 = vpop.f32.mrf.mxu0
    %v1738 = vpop.f32.mrf.mxu0
    %v1739 = vadd.f32 %v1472, %v1738
    %v1740 = vpop.f32.mrf.mxu0
    %1741 = vdwg.mxu0
    %s1742 = scalar_lea.vmem %s1, 8
    %v1743 = vld [vmem:[%s1742] sm:$0xff]
    %v1744 = vpack.c.bf16 %v1743, %v1743
    %v1777 = vunpack.c.l.b16 %v1421
    %v1778 = vunpack.c.h.b16 %v1421
    %v1779 = vunpack.c.l.b16 %v1422
    %v1780 = vunpack.c.l.b16 %v1423
    %v1781 = vunpack.c.h.b16 %v1423
    %v1782 = vunpack.c.l.b16 %v1424
    %v1783 = vunpack.c.l.b16 %v1425
    %v1784 = vunpack.c.h.b16 %v1425
    %v1785 = vunpack.c.l.b16 %v1426
    %v1786 = vunpack.c.l.b16 %v1427
    %v1787 = vunpack.c.h.b16 %v1427
    %v1788 = vunpack.c.l.b16 %v1428
    %v1789 = vunpack.c.l.b16 %v1429
    %v1790 = vunpack.c.h.b16 %v1429
    %v1791 = vunpack.c.l.b16 %v1430
    %v1792 = vunpack.c.l.b16 %v1431
    %v1793 = vunpack.c.h.b16 %v1431
    %v1794 = vunpack.c.l.b16 %v1432
    %v1795 = vunpack.c.l.b16 %v1433
    %v1796 = vunpack.c.h.b16 %v1433
    %v1797 = vunpack.c.l.b16 %v1434
    %v1798 = vunpack.c.l.b16 %v1435
    %v1799 = vunpack.c.h.b16 %v1435
    %v1800 = vunpack.c.l.b16 %v1436
    %v1801 = vunpack.c.l.b16 %v1437
    %v1802 = vunpack.c.h.b16 %v1437
    %v1803 = vunpack.c.l.b16 %v1438
    %v1804 = vunpack.c.l.b16 %v1439
    %v1805 = vunpack.c.h.b16 %v1439
    %v1806 = vunpack.c.l.b16 %v1440
    %v1807 = vunpack.c.l.b16 %v1441
    %v1808 = vunpack.c.h.b16 %v1441
    %v1809 = vunpack.c.l.b16 %v1442
    %v1810 = vunpack.c.l.b16 %v1443
    %v1811 = vunpack.c.h.b16 %v1443
    %v1812 = vunpack.c.l.b16 %v1444
    %v1813 = vunpack.c.l.b16 %v1445
    %v1814 = vunpack.c.h.b16 %v1445
    %v1815 = vunpack.c.l.b16 %v1446
    %v1816 = vunpack.c.l.b16 %v1447
    %v1817 = vunpack.c.h.b16 %v1447
    %v1818 = vunpack.c.l.b16 %v1448
    %v1819 = vunpack.c.l.b16 %v1449
    %v1820 = vunpack.c.h.b16 %v1449
    %v1821 = vunpack.c.l.b16 %v1450
    %v1822 = vunpack.c.l.b16 %v1451
    %v1823 = vunpack.c.h.b16 %v1451
    %v1824 = vunpack.c.l.b16 %v1452
    %v1825 = vpack.c.b16 %v1780, %v1777
    %v1826 = vpack.c.b16 %v1781, %v1778
    %v1827 = vpack.c.b16 %v1782, %v1779
    %v1828 = vpack.c.b16 %v1786, %v1783
    %v1829 = vpack.c.b16 %v1787, %v1784
    %v1830 = vpack.c.b16 %v1788, %v1785
    %v1831 = vpack.c.b16 %v1792, %v1789
    %v1832 = vpack.c.b16 %v1793, %v1790
    %v1833 = vpack.c.b16 %v1794, %v1791
    %v1834 = vpack.c.b16 %v1798, %v1795
    %v1835 = vpack.c.b16 %v1799, %v1796
    %v1836 = vpack.c.b16 %v1800, %v1797
    %v1837 = vpack.c.b16 %v1804, %v1801
    %v1838 = vpack.c.b16 %v1805, %v1802
    %v1839 = vpack.c.b16 %v1806, %v1803
    %v1840 = vpack.c.b16 %v1810, %v1807
    %v1841 = vpack.c.b16 %v1811, %v1808
    %v1842 = vpack.c.b16 %v1812, %v1809
    %v1843 = vpack.c.b16 %v1816, %v1813
    %v1844 = vpack.c.b16 %v1817, %v1814
    %v1845 = vpack.c.b16 %v1818, %v1815
    %v1846 = vpack.c.b16 %v1822, %v1819
    %v1847 = vpack.c.b16 %v1823, %v1820
    %v1848 = vpack.c.b16 %v1824, %v1821
    %1873 = vmatprep.subr.bf16.mxu0 %v1847
    %1874 = vmatpush1.bf16.msra.mxu0 %v1846
    %1875 = vmatprep.subr.bf16.mxu0 %v1844
    %1876 = vmatpush1.bf16.msra.mxu0 %v1843
    %1877 = vmatprep.subr.bf16.mxu0 %v1841
    %1878 = vmatpush1.bf16.msra.mxu0 %v1840
    %1879 = vmatprep.subr.bf16.mxu0 %v1838
    %1880 = vmatpush1.bf16.msra.mxu0 %v1837
    %1881 = vmatprep.subr.bf16.mxu0 %v1835
    %1882 = vmatpush1.bf16.msra.mxu0 %v1834
    %1883 = vmatprep.subr.bf16.mxu0 %v1832
    %1884 = vmatpush1.bf16.msra.mxu0 %v1831
    %1885 = vmatprep.subr.bf16.mxu0 %v1829
    %1886 = vmatpush1.bf16.msra.mxu0 %v1828
    %1887 = vmatprep.subr.bf16.mxu0 %v1826
    %1888 = vmatpush1.bf16.msra.mxu0 %v1825
    %1889 = vmatprep.subr.bf16.mxu0 0
    %1890 = vmatpush2.bf16.msra.mxu0 0
    %1891 = vmatprep.subr.bf16.mxu0 0
    %1892 = vmatpush2.bf16.msra.mxu0 0
    %1893 = vmatprep.subr.bf16.mxu0 0
    %1894 = vmatpush2.bf16.msra.mxu0 0
    %1895 = vmatprep.subr.bf16.mxu0 0
    %1896 = vmatpush2.bf16.msra.mxu0 0
    %1897 = vmatprep.subr.bf16.mxu0 0
    %1898 = vmatpush2.bf16.msra.mxu0 0
    %1899 = vmatprep.subr.bf16.mxu0 0
    %1900 = vmatpush2.bf16.msra.mxu0 0
    %1901 = vmatprep.subr.bf16.mxu0 0
    %1902 = vmatpush2.bf16.msra.mxu0 0
    %1903 = vmatprep.subr.bf16.mxu0 0
    %1904 = vmatpush2.bf16.msra.mxu0 0
    %1905 = vmatprep.mubr.bf16.mxu0 0
    %1906 = vmatmul.mubr.bf16.gmra.mxu0 %v1744
    %v1907 = vpop.f32.mrf.mxu0
    %v1908 = vadd.f32 0.0, %v1907
    %v1909 = vpop.f32.mrf.mxu0
    %v1910 = vadd.f32 0.0, %v1909
    %v1911 = vpop.f32.mrf.mxu0
    %v1912 = vpop.f32.mrf.mxu0
    %1913 = vdwg.mxu0
    %1914 = vmatprep.subr.bf16.mxu0 0
    %1915 = vmatpush1.bf16.msra.mxu0 %v1848
    %1916 = vmatprep.subr.bf16.mxu0 0
    %1917 = vmatpush1.bf16.msra.mxu0 %v1845
    %1918 = vmatprep.subr.bf16.mxu0 0
    %1919 = vmatpush1.bf16.msra.mxu0 %v1842
    %1920 = vmatprep.subr.bf16.mxu0 0
    %1921 = vmatpush1.bf16.msra.mxu0 %v1839
    %1922 = vmatprep.subr.bf16.mxu0 0
    %1923 = vmatpush1.bf16.msra.mxu0 %v1836
    %1924 = vmatprep.subr.bf16.mxu0 0
    %1925 = vmatpush1.bf16.msra.mxu0 %v1833
    %1926 = vmatprep.subr.bf16.mxu0 0
    %1927 = vmatpush1.bf16.msra.mxu0 %v1830
    %1928 = vmatprep.subr.bf16.mxu0 0
    %1929 = vmatpush1.bf16.msra.mxu0 %v1827
    %1930 = vmatprep.subr.bf16.mxu0 0
    %1931 = vmatpush2.bf16.msra.mxu0 0
    %1932 = vmatprep.subr.bf16.mxu0 0
    %1933 = vmatpush2.bf16.msra.mxu0 0
    %1934 = vmatprep.subr.bf16.mxu0 0
    %1935 = vmatpush2.bf16.msra.mxu0 0
    %1936 = vmatprep.subr.bf16.mxu0 0
    %1937 = vmatpush2.bf16.msra.mxu0 0
    %1938 = vmatprep.subr.bf16.mxu0 0
    %1939 = vmatpush2.bf16.msra.mxu0 0
    %1940 = vmatprep.subr.bf16.mxu0 0
    %1941 = vmatpush2.bf16.msra.mxu0 0
    %1942 = vmatprep.subr.bf16.mxu0 0
    %1943 = vmatpush2.bf16.msra.mxu0 0
    %1944 = vmatprep.subr.bf16.mxu0 0
    %1945 = vmatpush2.bf16.msra.mxu0 0
    %1946 = vmatprep.mubr.bf16.mxu0 0
    %1947 = vmatmul.mubr.bf16.gmra.mxu0 %v1744
    %v1948 = vpop.f32.mrf.mxu0
    %v1949 = vadd.f32 0.0, %v1948
    %v1950 = vpop.f32.mrf.mxu0
    %v1951 = vpop.f32.mrf.mxu0
    %v1952 = vpop.f32.mrf.mxu0
    %1953 = vdwg.mxu0
    %v1954 = vadd.f32 %v1639, %v1908
    %v1955 = vxor.u32 %v1954, 2147483648
    %v1956 = vmul.f32 %v1955, 1.442695
    %v1957 = vpow.pop %v1956
    %v1958 = vadd.f32 %v1957, 1.0
    %v1959 = vrcp.pop %v1958
    %v1960 = vmul.f32 1.0, %v1959
    %v1961 = vadd.f32 %v1641, %v1910
    %v1962 = vxor.u32 %v1961, 2147483648
    %v1963 = vmul.f32 %v1962, 1.442695
    %v1964 = vpow.pop %v1963
    %v1965 = vadd.f32 %v1964, 1.0
    %v1966 = vrcp.pop %v1965
    %v1967 = vmul.f32 1.0, %v1966
    %v1968 = vadd.f32 %v1949, %v1455
    %v1969 = vmul.f32 %v1960, %v1968
    %v1970 = vadd.f32 %v1712, %v1969
    %v1971 = vtanh.pop %v1970
    %v1972 = vsub.f32 1.0, %v1967
    %v1973 = vmul.f32 %v1972, %v1971
    %v1974 = vmul.f32 %v1967, %v1743
    %v1975 = vadd.f32 %v1973, %v1974
    %1976 = vst [vmem:[#allocation2] sm:$0xff] %v1975
    %v1977 = vpack.c.bf16 %v1975, %v1975
    %1978 = vmatprep.subr.bf16.mxu0 %v1847
    %1979 = vmatpush1.bf16.msra.mxu0 %v1846
    %1980 = vmatprep.subr.bf16.mxu0 %v1844
    %1981 = vmatpush1.bf16.msra.mxu0 %v1843
    %1982 = vmatprep.subr.bf16.mxu0 %v1841
    %1983 = vmatpush1.bf16.msra.mxu0 %v1840
    %1984 = vmatprep.subr.bf16.mxu0 %v1838
    %1985 = vmatpush1.bf16.msra.mxu0 %v1837
    %1986 = vmatprep.subr.bf16.mxu0 %v1835
    %1987 = vmatpush1.bf16.msra.mxu0 %v1834
    %1988 = vmatprep.subr.bf16.mxu0 %v1832
    %1989 = vmatpush1.bf16.msra.mxu0 %v1831
    %1990 = vmatprep.subr.bf16.mxu0 %v1829
    %1991 = vmatpush1.bf16.msra.mxu0 %v1828
    %1992 = vmatprep.subr.bf16.mxu0 %v1826
    %1993 = vmatpush1.bf16.msra.mxu0 %v1825
    %1994 = vmatprep.subr.bf16.mxu0 0
    %1995 = vmatpush2.bf16.msra.mxu0 0
    %1996 = vmatprep.subr.bf16.mxu0 0
    %1997 = vmatpush2.bf16.msra.mxu0 0
    %1998 = vmatprep.subr.bf16.mxu0 0
    %1999 = vmatpush2.bf16.msra.mxu0 0
    %2000 = vmatprep.subr.bf16.mxu0 0
    %2001 = vmatpush2.bf16.msra.mxu0 0
    %2002 = vmatprep.subr.bf16.mxu0 0
    %2003 = vmatpush2.bf16.msra.mxu0 0
    %2004 = vmatprep.subr.bf16.mxu0 0
    %2005 = vmatpush2.bf16.msra.mxu0 0
    %2006 = vmatprep.subr.bf16.mxu0 0
    %2007 = vmatpush2.bf16.msra.mxu0 0
    %2008 = vmatprep.subr.bf16.mxu0 0
    %2009 = vmatpush2.bf16.msra.mxu0 0
    %2010 = vmatprep.mubr.bf16.mxu0 0
    %2011 = vmatmul.mubr.bf16.gmra.mxu0 %v1977
    %v2012 = vpop.f32.mrf.mxu0
    %v2013 = vadd.f32 0.0, %v2012
    %v2014 = vpop.f32.mrf.mxu0
    %v2015 = vadd.f32 0.0, %v2014
    %v2016 = vpop.f32.mrf.mxu0
    %v2017 = vpop.f32.mrf.mxu0
    %2018 = vdwg.mxu0
    %2019 = vmatprep.subr.bf16.mxu0 0
    %2020 = vmatpush1.bf16.msra.mxu0 %v1848
    %2021 = vmatprep.subr.bf16.mxu0 0
    %2022 = vmatpush1.bf16.msra.mxu0 %v1845
    %2023 = vmatprep.subr.bf16.mxu0 0
    %2024 = vmatpush1.bf16.msra.mxu0 %v1842
    %2025 = vmatprep.subr.bf16.mxu0 0
    %2026 = vmatpush1.bf16.msra.mxu0 %v1839
    %2027 = vmatprep.subr.bf16.mxu0 0
    %2028 = vmatpush1.bf16.msra.mxu0 %v1836
    %2029 = vmatprep.subr.bf16.mxu0 0
    %2030 = vmatpush1.bf16.msra.mxu0 %v1833
    %2031 = vmatprep.subr.bf16.mxu0 0
    %2032 = vmatpush1.bf16.msra.mxu0 %v1830
    %2033 = vmatprep.subr.bf16.mxu0 0
    %2034 = vmatpush1.bf16.msra.mxu0 %v1827
    %2035 = vmatprep.subr.bf16.mxu0 0
    %2036 = vmatpush2.bf16.msra.mxu0 0
    %2037 = vmatprep.subr.bf16.mxu0 0
    %2038 = vmatpush2.bf16.msra.mxu0 0
    %2039 = vmatprep.subr.bf16.mxu0 0
    %2040 = vmatpush2.bf16.msra.mxu0 0
    %2041 = vmatprep.subr.bf16.mxu0 0
    %2042 = vmatpush2.bf16.msra.mxu0 0
    %2043 = vmatprep.subr.bf16.mxu0 0
    %2044 = vmatpush2.bf16.msra.mxu0 0
    %2045 = vmatprep.subr.bf16.mxu0 0
    %2046 = vmatpush2.bf16.msra.mxu0 0
    %2047 = vmatprep.subr.bf16.mxu0 0
    %2048 = vmatpush2.bf16.msra.mxu0 0
    %2049 = vmatprep.subr.bf16.mxu0 0
    %2050 = vmatpush2.bf16.msra.mxu0 0
    %2051 = vmatprep.mubr.bf16.mxu0 0
    %2052 = vmatmul.mubr.bf16.gmra.mxu0 %v1977
    %v2053 = vpop.f32.mrf.mxu0
    %v2054 = vadd.f32 0.0, %v2053
    %v2055 = vpop.f32.mrf.mxu0
    %v2056 = vpop.f32.mrf.mxu0
    %v2057 = vpop.f32.mrf.mxu0
    %2058 = vdwg.mxu0
    %v2059 = vadd.f32 %v1643, %v2013
    %v2060 = vxor.u32 %v2059, 2147483648
    %v2061 = vmul.f32 %v2060, 1.442695
    %v2062 = vpow.pop %v2061
    %v2063 = vadd.f32 %v2062, 1.0
    %v2064 = vrcp.pop %v2063
    %v2065 = vmul.f32 1.0, %v2064
    %v2066 = vadd.f32 %v1645, %v2015
    %v2067 = vxor.u32 %v2066, 2147483648
    %v2068 = vmul.f32 %v2067, 1.442695
    %v2069 = vpow.pop %v2068
    %v2070 = vadd.f32 %v2069, 1.0
    %v2071 = vrcp.pop %v2070
    %v2072 = vmul.f32 1.0, %v2071
    %v2073 = vadd.f32 %v2054, %v1455
    %v2074 = vmul.f32 %v2065, %v2073
    %v2075 = vadd.f32 %v1715, %v2074
    %v2076 = vtanh.pop %v2075
    %v2077 = vsub.f32 1.0, %v2072
    %v2078 = vmul.f32 %v2077, %v2076
    %v2079 = vmul.f32 %v2072, %v1975
    %v2080 = vadd.f32 %v2078, %v2079
    %2081 = vst [vmem:[#allocation2 + $0x8] sm:$0xff] %v2080
    %v2082 = vpack.c.bf16 %v2080, %v2080
    %2083 = vmatprep.subr.bf16.mxu0 %v1847
    %2084 = vmatpush1.bf16.msra.mxu0 %v1846
    %2085 = vmatprep.subr.bf16.mxu0 %v1844
    %2086 = vmatpush1.bf16.msra.mxu0 %v1843
    %2087 = vmatprep.subr.bf16.mxu0 %v1841
    %2088 = vmatpush1.bf16.msra.mxu0 %v1840
    %2089 = vmatprep.subr.bf16.mxu0 %v1838
    %2090 = vmatpush1.bf16.msra.mxu0 %v1837
    %2091 = vmatprep.subr.bf16.mxu0 %v1835
    %2092 = vmatpush1.bf16.msra.mxu0 %v1834
    %2093 = vmatprep.subr.bf16.mxu0 %v1832
    %2094 = vmatpush1.bf16.msra.mxu0 %v1831
    %2095 = vmatprep.subr.bf16.mxu0 %v1829
    %2096 = vmatpush1.bf16.msra.mxu0 %v1828
    %2097 = vmatprep.subr.bf16.mxu0 %v1826
    %2098 = vmatpush1.bf16.msra.mxu0 %v1825
    %2099 = vmatprep.subr.bf16.mxu0 0
    %2100 = vmatpush2.bf16.msra.mxu0 0
    %2101 = vmatprep.subr.bf16.mxu0 0
    %2102 = vmatpush2.bf16.msra.mxu0 0
    %2103 = vmatprep.subr.bf16.mxu0 0
    %2104 = vmatpush2.bf16.msra.mxu0 0
    %2105 = vmatprep.subr.bf16.mxu0 0
    %2106 = vmatpush2.bf16.msra.mxu0 0
    %2107 = vmatprep.subr.bf16.mxu0 0
    %2108 = vmatpush2.bf16.msra.mxu0 0
    %2109 = vmatprep.subr.bf16.mxu0 0
    %2110 = vmatpush2.bf16.msra.mxu0 0
    %2111 = vmatprep.subr.bf16.mxu0 0
    %2112 = vmatpush2.bf16.msra.mxu0 0
    %2113 = vmatprep.subr.bf16.mxu0 0
    %2114 = vmatpush2.bf16.msra.mxu0 0
    %2115 = vmatprep.mubr.bf16.mxu0 0
    %2116 = vmatmul.mubr.bf16.gmra.mxu0 %v2082
    %v2117 = vpop.f32.mrf.mxu0
    %v2118 = vadd.f32 0.0, %v2117
    %v2119 = vpop.f32.mrf.mxu0
    %v2120 = vadd.f32 0.0, %v2119
    %v2121 = vpop.f32.mrf.mxu0
    %v2122 = vpop.f32.mrf.mxu0
    %2123 = vdwg.mxu0
    %2124 = vmatprep.subr.bf16.mxu0 0
    %2125 = vmatpush1.bf16.msra.mxu0 %v1848
    %2126 = vmatprep.subr.bf16.mxu0 0
    %2127 = vmatpush1.bf16.msra.mxu0 %v1845
    %2128 = vmatprep.subr.bf16.mxu0 0
    %2129 = vmatpush1.bf16.msra.mxu0 %v1842
    %2130 = vmatprep.subr.bf16.mxu0 0
    %2131 = vmatpush1.bf16.msra.mxu0 %v1839
    %2132 = vmatprep.subr.bf16.mxu0 0
    %2133 = vmatpush1.bf16.msra.mxu0 %v1836
    %2134 = vmatprep.subr.bf16.mxu0 0
    %2135 = vmatpush1.bf16.msra.mxu0 %v1833
    %2136 = vmatprep.subr.bf16.mxu0 0
    %2137 = vmatpush1.bf16.msra.mxu0 %v1830
    %2138 = vmatprep.subr.bf16.mxu0 0
    %2139 = vmatpush1.bf16.msra.mxu0 %v1827
    %2140 = vmatprep.subr.bf16.mxu0 0
    %2141 = vmatpush2.bf16.msra.mxu0 0
    %2142 = vmatprep.subr.bf16.mxu0 0
    %2143 = vmatpush2.bf16.msra.mxu0 0
    %2144 = vmatprep.subr.bf16.mxu0 0
    %2145 = vmatpush2.bf16.msra.mxu0 0
    %2146 = vmatprep.subr.bf16.mxu0 0
    %2147 = vmatpush2.bf16.msra.mxu0 0
    %2148 = vmatprep.subr.bf16.mxu0 0
    %2149 = vmatpush2.bf16.msra.mxu0 0
    %2150 = vmatprep.subr.bf16.mxu0 0
    %2151 = vmatpush2.bf16.msra.mxu0 0
    %2152 = vmatprep.subr.bf16.mxu0 0
    %2153 = vmatpush2.bf16.msra.mxu0 0
    %2154 = vmatprep.subr.bf16.mxu0 0
    %2155 = vmatpush2.bf16.msra.mxu0 0
    %2156 = vmatprep.mubr.bf16.mxu0 0
    %2157 = vmatmul.mubr.bf16.gmra.mxu0 %v2082
    %v2158 = vpop.f32.mrf.mxu0
    %v2159 = vadd.f32 0.0, %v2158
    %v2160 = vpop.f32.mrf.mxu0
    %v2161 = vpop.f32.mrf.mxu0
    %v2162 = vpop.f32.mrf.mxu0
    %2163 = vdwg.mxu0
    %v2164 = vadd.f32 %v1649, %v2118
    %v2165 = vxor.u32 %v2164, 2147483648
    %v2166 = vmul.f32 %v2165, 1.442695
    %v2167 = vpow.pop %v2166
    %v2168 = vadd.f32 %v2167, 1.0
    %v2169 = vrcp.pop %v2168
    %v2170 = vmul.f32 1.0, %v2169
    %v2171 = vadd.f32 %v1651, %v2120
    %v2172 = vxor.u32 %v2171, 2147483648
    %v2173 = vmul.f32 %v2172, 1.442695
    %v2174 = vpow.pop %v2173
    %v2175 = vadd.f32 %v2174, 1.0
    %v2176 = vrcp.pop %v2175
    %v2177 = vmul.f32 1.0, %v2176
    %v2178 = vadd.f32 %v2159, %v1455
    %v2179 = vmul.f32 %v2170, %v2178
    %v2180 = vadd.f32 %v1720, %v2179
    %v2181 = vtanh.pop %v2180
    %v2182 = vsub.f32 1.0, %v2177
    %v2183 = vmul.f32 %v2182, %v2181
    %v2184 = vmul.f32 %v2177, %v2080
    %v2185 = vadd.f32 %v2183, %v2184
    %2186 = vst [vmem:[#allocation2 + $0x10] sm:$0xff] %v2185
    %v2187 = vpack.c.bf16 %v2185, %v2185
    %2188 = vmatprep.subr.bf16.mxu0 %v1847
    %2189 = vmatpush1.bf16.msra.mxu0 %v1846
    %2190 = vmatprep.subr.bf16.mxu0 %v1844
    %2191 = vmatpush1.bf16.msra.mxu0 %v1843
    %2192 = vmatprep.subr.bf16.mxu0 %v1841
    %2193 = vmatpush1.bf16.msra.mxu0 %v1840
    %2194 = vmatprep.subr.bf16.mxu0 %v1838
    %2195 = vmatpush1.bf16.msra.mxu0 %v1837
    %2196 = vmatprep.subr.bf16.mxu0 %v1835
    %2197 = vmatpush1.bf16.msra.mxu0 %v1834
    %2198 = vmatprep.subr.bf16.mxu0 %v1832
    %2199 = vmatpush1.bf16.msra.mxu0 %v1831
    %2200 = vmatprep.subr.bf16.mxu0 %v1829
    %2201 = vmatpush1.bf16.msra.mxu0 %v1828
    %2202 = vmatprep.subr.bf16.mxu0 %v1826
    %2203 = vmatpush1.bf16.msra.mxu0 %v1825
    %2204 = vmatprep.subr.bf16.mxu0 0
    %2205 = vmatpush2.bf16.msra.mxu0 0
    %2206 = vmatprep.subr.bf16.mxu0 0
    %2207 = vmatpush2.bf16.msra.mxu0 0
    %2208 = vmatprep.subr.bf16.mxu0 0
    %2209 = vmatpush2.bf16.msra.mxu0 0
    %2210 = vmatprep.subr.bf16.mxu0 0
    %2211 = vmatpush2.bf16.msra.mxu0 0
    %2212 = vmatprep.subr.bf16.mxu0 0
    %2213 = vmatpush2.bf16.msra.mxu0 0
    %2214 = vmatprep.subr.bf16.mxu0 0
    %2215 = vmatpush2.bf16.msra.mxu0 0
    %2216 = vmatprep.subr.bf16.mxu0 0
    %2217 = vmatpush2.bf16.msra.mxu0 0
    %2218 = vmatprep.subr.bf16.mxu0 0
    %2219 = vmatpush2.bf16.msra.mxu0 0
    %2220 = vmatprep.mubr.bf16.mxu0 0
    %2221 = vmatmul.mubr.bf16.gmra.mxu0 %v2187
    %v2222 = vpop.f32.mrf.mxu0
    %v2223 = vadd.f32 0.0, %v2222
    %v2224 = vpop.f32.mrf.mxu0
    %v2225 = vadd.f32 0.0, %v2224
    %v2226 = vpop.f32.mrf.mxu0
    %v2227 = vpop.f32.mrf.mxu0
    %2228 = vdwg.mxu0
    %2229 = vmatprep.subr.bf16.mxu0 0
    %2230 = vmatpush1.bf16.msra.mxu0 %v1848
    %2231 = vmatprep.subr.bf16.mxu0 0
    %2232 = vmatpush1.bf16.msra.mxu0 %v1845
    %2233 = vmatprep.subr.bf16.mxu0 0
    %2234 = vmatpush1.bf16.msra.mxu0 %v1842
    %2235 = vmatprep.subr.bf16.mxu0 0
    %2236 = vmatpush1.bf16.msra.mxu0 %v1839
    %2237 = vmatprep.subr.bf16.mxu0 0
    %2238 = vmatpush1.bf16.msra.mxu0 %v1836
    %2239 = vmatprep.subr.bf16.mxu0 0
    %2240 = vmatpush1.bf16.msra.mxu0 %v1833
    %2241 = vmatprep.subr.bf16.mxu0 0
    %2242 = vmatpush1.bf16.msra.mxu0 %v1830
    %2243 = vmatprep.subr.bf16.mxu0 0
    %2244 = vmatpush1.bf16.msra.mxu0 %v1827
    %2245 = vmatprep.subr.bf16.mxu0 0
    %2246 = vmatpush2.bf16.msra.mxu0 0
    %2247 = vmatprep.subr.bf16.mxu0 0
    %2248 = vmatpush2.bf16.msra.mxu0 0
    %2249 = vmatprep.subr.bf16.mxu0 0
    %2250 = vmatpush2.bf16.msra.mxu0 0
    %2251 = vmatprep.subr.bf16.mxu0 0
    %2252 = vmatpush2.bf16.msra.mxu0 0
    %2253 = vmatprep.subr.bf16.mxu0 0
    %2254 = vmatpush2.bf16.msra.mxu0 0
    %2255 = vmatprep.subr.bf16.mxu0 0
    %2256 = vmatpush2.bf16.msra.mxu0 0
    %2257 = vmatprep.subr.bf16.mxu0 0
    %2258 = vmatpush2.bf16.msra.mxu0 0
    %2259 = vmatprep.subr.bf16.mxu0 0
    %2260 = vmatpush2.bf16.msra.mxu0 0
    %2261 = vmatprep.mubr.bf16.mxu0 0
    %2262 = vmatmul.mubr.bf16.gmra.mxu0 %v2187
    %v2263 = vpop.f32.mrf.mxu0
    %v2264 = vadd.f32 0.0, %v2263
    %v2265 = vpop.f32.mrf.mxu0
    %v2266 = vpop.f32.mrf.mxu0
    %v2267 = vpop.f32.mrf.mxu0
    %2268 = vdwg.mxu0
    %v2269 = vadd.f32 %v1653, %v2223
    %v2270 = vxor.u32 %v2269, 2147483648
    %v2271 = vmul.f32 %v2270, 1.442695
    %v2272 = vpow.pop %v2271
    %v2273 = vadd.f32 %v2272, 1.0
    %v2274 = vrcp.pop %v2273
    %v2275 = vmul.f32 1.0, %v2274
    %v2276 = vadd.f32 %v1655, %v2225
    %v2277 = vxor.u32 %v2276, 2147483648
    %v2278 = vmul.f32 %v2277, 1.442695
    %v2279 = vpow.pop %v2278
    %v2280 = vadd.f32 %v2279, 1.0
    %v2281 = vrcp.pop %v2280
    %v2282 = vmul.f32 1.0, %v2281
    %v2283 = vadd.f32 %v2264, %v1455
    %v2284 = vmul.f32 %v2275, %v2283
    %v2285 = vadd.f32 %v1723, %v2284
    %v2286 = vtanh.pop %v2285
    %v2287 = vsub.f32 1.0, %v2282
    %v2288 = vmul.f32 %v2287, %v2286
    %v2289 = vmul.f32 %v2282, %v2185
    %v2290 = vadd.f32 %v2288, %v2289
    %2291 = vst [vmem:[#allocation2 + $0x18] sm:$0xff] %v2290
    %v2292 = vpack.c.bf16 %v2290, %v2290
    %2293 = vmatprep.subr.bf16.mxu0 %v1847
    %2294 = vmatpush1.bf16.msra.mxu0 %v1846
    %2295 = vmatprep.subr.bf16.mxu0 %v1844
    %2296 = vmatpush1.bf16.msra.mxu0 %v1843
    %2297 = vmatprep.subr.bf16.mxu0 %v1841
    %2298 = vmatpush1.bf16.msra.mxu0 %v1840
    %2299 = vmatprep.subr.bf16.mxu0 %v1838
    %2300 = vmatpush1.bf16.msra.mxu0 %v1837
    %2301 = vmatprep.subr.bf16.mxu0 %v1835
    %2302 = vmatpush1.bf16.msra.mxu0 %v1834
    %2303 = vmatprep.subr.bf16.mxu0 %v1832
    %2304 = vmatpush1.bf16.msra.mxu0 %v1831
    %2305 = vmatprep.subr.bf16.mxu0 %v1829
    %2306 = vmatpush1.bf16.msra.mxu0 %v1828
    %2307 = vmatprep.subr.bf16.mxu0 %v1826
    %2308 = vmatpush1.bf16.msra.mxu0 %v1825
    %2309 = vmatprep.subr.bf16.mxu0 0
    %2310 = vmatpush2.bf16.msra.mxu0 0
    %2311 = vmatprep.subr.bf16.mxu0 0
    %2312 = vmatpush2.bf16.msra.mxu0 0
    %2313 = vmatprep.subr.bf16.mxu0 0
    %2314 = vmatpush2.bf16.msra.mxu0 0
    %2315 = vmatprep.subr.bf16.mxu0 0
    %2316 = vmatpush2.bf16.msra.mxu0 0
    %2317 = vmatprep.subr.bf16.mxu0 0
    %2318 = vmatpush2.bf16.msra.mxu0 0
    %2319 = vmatprep.subr.bf16.mxu0 0
    %2320 = vmatpush2.bf16.msra.mxu0 0
    %2321 = vmatprep.subr.bf16.mxu0 0
    %2322 = vmatpush2.bf16.msra.mxu0 0
    %2323 = vmatprep.subr.bf16.mxu0 0
    %2324 = vmatpush2.bf16.msra.mxu0 0
    %2325 = vmatprep.mubr.bf16.mxu0 0
    %2326 = vmatmul.mubr.bf16.gmra.mxu0 %v2292
    %v2327 = vpop.f32.mrf.mxu0
    %v2328 = vadd.f32 0.0, %v2327
    %v2329 = vpop.f32.mrf.mxu0
    %v2330 = vadd.f32 0.0, %v2329
    %v2331 = vpop.f32.mrf.mxu0
    %v2332 = vpop.f32.mrf.mxu0
    %2333 = vdwg.mxu0
    %2334 = vmatprep.subr.bf16.mxu0 0
    %2335 = vmatpush1.bf16.msra.mxu0 %v1848
    %2336 = vmatprep.subr.bf16.mxu0 0
    %2337 = vmatpush1.bf16.msra.mxu0 %v1845
    %2338 = vmatprep.subr.bf16.mxu0 0
    %2339 = vmatpush1.bf16.msra.mxu0 %v1842
    %2340 = vmatprep.subr.bf16.mxu0 0
    %2341 = vmatpush1.bf16.msra.mxu0 %v1839
    %2342 = vmatprep.subr.bf16.mxu0 0
    %2343 = vmatpush1.bf16.msra.mxu0 %v1836
    %2344 = vmatprep.subr.bf16.mxu0 0
    %2345 = vmatpush1.bf16.msra.mxu0 %v1833
    %2346 = vmatprep.subr.bf16.mxu0 0
    %2347 = vmatpush1.bf16.msra.mxu0 %v1830
    %2348 = vmatprep.subr.bf16.mxu0 0
    %2349 = vmatpush1.bf16.msra.mxu0 %v1827
    %2350 = vmatprep.subr.bf16.mxu0 0
    %2351 = vmatpush2.bf16.msra.mxu0 0
    %2352 = vmatprep.subr.bf16.mxu0 0
    %2353 = vmatpush2.bf16.msra.mxu0 0
    %2354 = vmatprep.subr.bf16.mxu0 0
    %2355 = vmatpush2.bf16.msra.mxu0 0
    %2356 = vmatprep.subr.bf16.mxu0 0
    %2357 = vmatpush2.bf16.msra.mxu0 0
    %2358 = vmatprep.subr.bf16.mxu0 0
    %2359 = vmatpush2.bf16.msra.mxu0 0
    %2360 = vmatprep.subr.bf16.mxu0 0
    %2361 = vmatpush2.bf16.msra.mxu0 0
    %2362 = vmatprep.subr.bf16.mxu0 0
    %2363 = vmatpush2.bf16.msra.mxu0 0
    %2364 = vmatprep.subr.bf16.mxu0 0
    %2365 = vmatpush2.bf16.msra.mxu0 0
    %2366 = vmatprep.mubr.bf16.mxu0 0
    %2367 = vmatmul.mubr.bf16.gmra.mxu0 %v2292
    %v2368 = vpop.f32.mrf.mxu0
    %v2369 = vadd.f32 0.0, %v2368
    %v2370 = vpop.f32.mrf.mxu0
    %v2371 = vpop.f32.mrf.mxu0
    %v2372 = vpop.f32.mrf.mxu0
    %2373 = vdwg.mxu0
    %v2374 = vadd.f32 %v1659, %v2328
    %v2375 = vxor.u32 %v2374, 2147483648
    %v2376 = vmul.f32 %v2375, 1.442695
    %v2377 = vpow.pop %v2376
    %v2378 = vadd.f32 %v2377, 1.0
    %v2379 = vrcp.pop %v2378
    %v2380 = vmul.f32 1.0, %v2379
    %v2381 = vadd.f32 %v1661, %v2330
    %v2382 = vxor.u32 %v2381, 2147483648
    %v2383 = vmul.f32 %v2382, 1.442695
    %v2384 = vpow.pop %v2383
    %v2385 = vadd.f32 %v2384, 1.0
    %v2386 = vrcp.pop %v2385
    %v2387 = vmul.f32 1.0, %v2386
    %v2388 = vadd.f32 %v2369, %v1455
    %v2389 = vmul.f32 %v2380, %v2388
    %v2390 = vadd.f32 %v1728, %v2389
    %v2391 = vtanh.pop %v2390
    %v2392 = vsub.f32 1.0, %v2387
    %v2393 = vmul.f32 %v2392, %v2391
    %v2394 = vmul.f32 %v2387, %v2290
    %v2395 = vadd.f32 %v2393, %v2394
    %2396 = vst [vmem:[#allocation2 + $0x20] sm:$0xff] %v2395
    %v2397 = vpack.c.bf16 %v2395, %v2395
    %2398 = vmatprep.subr.bf16.mxu0 %v1847
    %2399 = vmatpush1.bf16.msra.mxu0 %v1846
    %2400 = vmatprep.subr.bf16.mxu0 %v1844
    %2401 = vmatpush1.bf16.msra.mxu0 %v1843
    %2402 = vmatprep.subr.bf16.mxu0 %v1841
    %2403 = vmatpush1.bf16.msra.mxu0 %v1840
    %2404 = vmatprep.subr.bf16.mxu0 %v1838
    %2405 = vmatpush1.bf16.msra.mxu0 %v1837
    %2406 = vmatprep.subr.bf16.mxu0 %v1835
    %2407 = vmatpush1.bf16.msra.mxu0 %v1834
    %2408 = vmatprep.subr.bf16.mxu0 %v1832
    %2409 = vmatpush1.bf16.msra.mxu0 %v1831
    %2410 = vmatprep.subr.bf16.mxu0 %v1829
    %2411 = vmatpush1.bf16.msra.mxu0 %v1828
    %2412 = vmatprep.subr.bf16.mxu0 %v1826
    %2413 = vmatpush1.bf16.msra.mxu0 %v1825
    %2414 = vmatprep.subr.bf16.mxu0 0
    %2415 = vmatpush2.bf16.msra.mxu0 0
    %2416 = vmatprep.subr.bf16.mxu0 0
    %2417 = vmatpush2.bf16.msra.mxu0 0
    %2418 = vmatprep.subr.bf16.mxu0 0
    %2419 = vmatpush2.bf16.msra.mxu0 0
    %2420 = vmatprep.subr.bf16.mxu0 0
    %2421 = vmatpush2.bf16.msra.mxu0 0
    %2422 = vmatprep.subr.bf16.mxu0 0
    %2423 = vmatpush2.bf16.msra.mxu0 0
    %2424 = vmatprep.subr.bf16.mxu0 0
    %2425 = vmatpush2.bf16.msra.mxu0 0
    %2426 = vmatprep.subr.bf16.mxu0 0
    %2427 = vmatpush2.bf16.msra.mxu0 0
    %2428 = vmatprep.subr.bf16.mxu0 0
    %2429 = vmatpush2.bf16.msra.mxu0 0
    %2430 = vmatprep.mubr.bf16.mxu0 0
    %2431 = vmatmul.mubr.bf16.gmra.mxu0 %v2397
    %v2432 = vpop.f32.mrf.mxu0
    %v2433 = vadd.f32 0.0, %v2432
    %v2434 = vpop.f32.mrf.mxu0
    %v2435 = vadd.f32 0.0, %v2434
    %v2436 = vpop.f32.mrf.mxu0
    %v2437 = vpop.f32.mrf.mxu0
    %2438 = vdwg.mxu0
    %2439 = vmatprep.subr.bf16.mxu0 0
    %2440 = vmatpush1.bf16.msra.mxu0 %v1848
    %2441 = vmatprep.subr.bf16.mxu0 0
    %2442 = vmatpush1.bf16.msra.mxu0 %v1845
    %2443 = vmatprep.subr.bf16.mxu0 0
    %2444 = vmatpush1.bf16.msra.mxu0 %v1842
    %2445 = vmatprep.subr.bf16.mxu0 0
    %2446 = vmatpush1.bf16.msra.mxu0 %v1839
    %2447 = vmatprep.subr.bf16.mxu0 0
    %2448 = vmatpush1.bf16.msra.mxu0 %v1836
    %2449 = vmatprep.subr.bf16.mxu0 0
    %2450 = vmatpush1.bf16.msra.mxu0 %v1833
    %2451 = vmatprep.subr.bf16.mxu0 0
    %2452 = vmatpush1.bf16.msra.mxu0 %v1830
    %2453 = vmatprep.subr.bf16.mxu0 0
    %2454 = vmatpush1.bf16.msra.mxu0 %v1827
    %2455 = vmatprep.subr.bf16.mxu0 0
    %2456 = vmatpush2.bf16.msra.mxu0 0
    %2457 = vmatprep.subr.bf16.mxu0 0
    %2458 = vmatpush2.bf16.msra.mxu0 0
    %2459 = vmatprep.subr.bf16.mxu0 0
    %2460 = vmatpush2.bf16.msra.mxu0 0
    %2461 = vmatprep.subr.bf16.mxu0 0
    %2462 = vmatpush2.bf16.msra.mxu0 0
    %2463 = vmatprep.subr.bf16.mxu0 0
    %2464 = vmatpush2.bf16.msra.mxu0 0
    %2465 = vmatprep.subr.bf16.mxu0 0
    %2466 = vmatpush2.bf16.msra.mxu0 0
    %2467 = vmatprep.subr.bf16.mxu0 0
    %2468 = vmatpush2.bf16.msra.mxu0 0
    %2469 = vmatprep.subr.bf16.mxu0 0
    %2470 = vmatpush2.bf16.msra.mxu0 0
    %2471 = vmatprep.mubr.bf16.mxu0 0
    %2472 = vmatmul.mubr.bf16.gmra.mxu0 %v2397
    %v2473 = vpop.f32.mrf.mxu0
    %v2474 = vadd.f32 0.0, %v2473
    %v2475 = vpop.f32.mrf.mxu0
    %v2476 = vpop.f32.mrf.mxu0
    %v2477 = vpop.f32.mrf.mxu0
    %2478 = vdwg.mxu0
    %v2479 = vadd.f32 %v1663, %v2433
    %v2480 = vxor.u32 %v2479, 2147483648
    %v2481 = vmul.f32 %v2480, 1.442695
    %v2482 = vpow.pop %v2481
    %v2483 = vadd.f32 %v2482, 1.0
    %v2484 = vrcp.pop %v2483
    %v2485 = vmul.f32 1.0, %v2484
    %v2486 = vadd.f32 %v1665, %v2435
    %v2487 = vxor.u32 %v2486, 2147483648
    %v2488 = vmul.f32 %v2487, 1.442695
    %v2489 = vpow.pop %v2488
    %v2490 = vadd.f32 %v2489, 1.0
    %v2491 = vrcp.pop %v2490
    %v2492 = vmul.f32 1.0, %v2491
    %v2493 = vadd.f32 %v2474, %v1455
    %v2494 = vmul.f32 %v2485, %v2493
    %v2495 = vadd.f32 %v1731, %v2494
    %v2496 = vtanh.pop %v2495
    %v2497 = vsub.f32 1.0, %v2492
    %v2498 = vmul.f32 %v2497, %v2496
    %v2499 = vmul.f32 %v2492, %v2395
    %v2500 = vadd.f32 %v2498, %v2499
    %2501 = vst [vmem:[#allocation2 + $0x28] sm:$0xff] %v2500
    %v2502 = vpack.c.bf16 %v2500, %v2500
    %2503 = vmatprep.subr.bf16.mxu0 %v1847
    %2504 = vmatpush1.bf16.msra.mxu0 %v1846
    %2505 = vmatprep.subr.bf16.mxu0 %v1844
    %2506 = vmatpush1.bf16.msra.mxu0 %v1843
    %2507 = vmatprep.subr.bf16.mxu0 %v1841
    %2508 = vmatpush1.bf16.msra.mxu0 %v1840
    %2509 = vmatprep.subr.bf16.mxu0 %v1838
    %2510 = vmatpush1.bf16.msra.mxu0 %v1837
    %2511 = vmatprep.subr.bf16.mxu0 %v1835
    %2512 = vmatpush1.bf16.msra.mxu0 %v1834
    %2513 = vmatprep.subr.bf16.mxu0 %v1832
    %2514 = vmatpush1.bf16.msra.mxu0 %v1831
    %2515 = vmatprep.subr.bf16.mxu0 %v1829
    %2516 = vmatpush1.bf16.msra.mxu0 %v1828
    %2517 = vmatprep.subr.bf16.mxu0 %v1826
    %2518 = vmatpush1.bf16.msra.mxu0 %v1825
    %2519 = vmatprep.subr.bf16.mxu0 0
    %2520 = vmatpush2.bf16.msra.mxu0 0
    %2521 = vmatprep.subr.bf16.mxu0 0
    %2522 = vmatpush2.bf16.msra.mxu0 0
    %2523 = vmatprep.subr.bf16.mxu0 0
    %2524 = vmatpush2.bf16.msra.mxu0 0
    %2525 = vmatprep.subr.bf16.mxu0 0
    %2526 = vmatpush2.bf16.msra.mxu0 0
    %2527 = vmatprep.subr.bf16.mxu0 0
    %2528 = vmatpush2.bf16.msra.mxu0 0
    %2529 = vmatprep.subr.bf16.mxu0 0
    %2530 = vmatpush2.bf16.msra.mxu0 0
    %2531 = vmatprep.subr.bf16.mxu0 0
    %2532 = vmatpush2.bf16.msra.mxu0 0
    %2533 = vmatprep.subr.bf16.mxu0 0
    %2534 = vmatpush2.bf16.msra.mxu0 0
    %2535 = vmatprep.mubr.bf16.mxu0 0
    %2536 = vmatmul.mubr.bf16.gmra.mxu0 %v2502
    %v2537 = vpop.f32.mrf.mxu0
    %v2538 = vadd.f32 0.0, %v2537
    %v2539 = vpop.f32.mrf.mxu0
    %v2540 = vadd.f32 0.0, %v2539
    %v2541 = vpop.f32.mrf.mxu0
    %v2542 = vpop.f32.mrf.mxu0
    %2543 = vdwg.mxu0
    %2544 = vmatprep.subr.bf16.mxu0 0
    %2545 = vmatpush1.bf16.msra.mxu0 %v1848
    %2546 = vmatprep.subr.bf16.mxu0 0
    %2547 = vmatpush1.bf16.msra.mxu0 %v1845
    %2548 = vmatprep.subr.bf16.mxu0 0
    %2549 = vmatpush1.bf16.msra.mxu0 %v1842
    %2550 = vmatprep.subr.bf16.mxu0 0
    %2551 = vmatpush1.bf16.msra.mxu0 %v1839
    %2552 = vmatprep.subr.bf16.mxu0 0
    %2553 = vmatpush1.bf16.msra.mxu0 %v1836
    %2554 = vmatprep.subr.bf16.mxu0 0
    %2555 = vmatpush1.bf16.msra.mxu0 %v1833
    %2556 = vmatprep.subr.bf16.mxu0 0
    %2557 = vmatpush1.bf16.msra.mxu0 %v1830
    %2558 = vmatprep.subr.bf16.mxu0 0
    %2559 = vmatpush1.bf16.msra.mxu0 %v1827
    %2560 = vmatprep.subr.bf16.mxu0 0
    %2561 = vmatpush2.bf16.msra.mxu0 0
    %2562 = vmatprep.subr.bf16.mxu0 0
    %2563 = vmatpush2.bf16.msra.mxu0 0
    %2564 = vmatprep.subr.bf16.mxu0 0
    %2565 = vmatpush2.bf16.msra.mxu0 0
    %2566 = vmatprep.subr.bf16.mxu0 0
    %2567 = vmatpush2.bf16.msra.mxu0 0
    %2568 = vmatprep.subr.bf16.mxu0 0
    %2569 = vmatpush2.bf16.msra.mxu0 0
    %2570 = vmatprep.subr.bf16.mxu0 0
    %2571 = vmatpush2.bf16.msra.mxu0 0
    %2572 = vmatprep.subr.bf16.mxu0 0
    %2573 = vmatpush2.bf16.msra.mxu0 0
    %2574 = vmatprep.subr.bf16.mxu0 0
    %2575 = vmatpush2.bf16.msra.mxu0 0
    %2576 = vmatprep.mubr.bf16.mxu0 0
    %2577 = vmatmul.mubr.bf16.gmra.mxu0 %v2502
    %v2578 = vpop.f32.mrf.mxu0
    %v2579 = vadd.f32 0.0, %v2578
    %v2580 = vpop.f32.mrf.mxu0
    %v2581 = vpop.f32.mrf.mxu0
    %v2582 = vpop.f32.mrf.mxu0
    %2583 = vdwg.mxu0
    %v2584 = vadd.f32 %v1669, %v2538
    %v2585 = vxor.u32 %v2584, 2147483648
    %v2586 = vmul.f32 %v2585, 1.442695
    %v2587 = vpow.pop %v2586
    %v2588 = vadd.f32 %v2587, 1.0
    %v2589 = vrcp.pop %v2588
    %v2590 = vmul.f32 1.0, %v2589
    %v2591 = vadd.f32 %v1671, %v2540
    %v2592 = vxor.u32 %v2591, 2147483648
    %v2593 = vmul.f32 %v2592, 1.442695
    %v2594 = vpow.pop %v2593
    %v2595 = vadd.f32 %v2594, 1.0
    %v2596 = vrcp.pop %v2595
    %v2597 = vmul.f32 1.0, %v2596
    %v2598 = vadd.f32 %v2579, %v1455
    %v2599 = vmul.f32 %v2590, %v2598
    %v2600 = vadd.f32 %v1736, %v2599
    %v2601 = vtanh.pop %v2600
    %v2602 = vsub.f32 1.0, %v2597
    %v2603 = vmul.f32 %v2602, %v2601
    %v2604 = vmul.f32 %v2597, %v2500
    %v2605 = vadd.f32 %v2603, %v2604
    %2606 = vst [vmem:[#allocation2 + $0x30] sm:$0xff] %v2605
    %v2607 = vpack.c.bf16 %v2605, %v2605
    %2608 = vmatprep.subr.bf16.mxu0 %v1847
    %2609 = vmatpush1.bf16.msra.mxu0 %v1846
    %2610 = vmatprep.subr.bf16.mxu0 %v1844
    %2611 = vmatpush1.bf16.msra.mxu0 %v1843
    %2612 = vmatprep.subr.bf16.mxu0 %v1841
    %2613 = vmatpush1.bf16.msra.mxu0 %v1840
    %2614 = vmatprep.subr.bf16.mxu0 %v1838
    %2615 = vmatpush1.bf16.msra.mxu0 %v1837
    %2616 = vmatprep.subr.bf16.mxu0 %v1835
    %2617 = vmatpush1.bf16.msra.mxu0 %v1834
    %2618 = vmatprep.subr.bf16.mxu0 %v1832
    %2619 = vmatpush1.bf16.msra.mxu0 %v1831
    %2620 = vmatprep.subr.bf16.mxu0 %v1829
    %2621 = vmatpush1.bf16.msra.mxu0 %v1828
    %2622 = vmatprep.subr.bf16.mxu0 %v1826
    %2623 = vmatpush1.bf16.msra.mxu0 %v1825
    %2624 = vmatprep.subr.bf16.mxu0 0
    %2625 = vmatpush2.bf16.msra.mxu0 0
    %2626 = vmatprep.subr.bf16.mxu0 0
    %2627 = vmatpush2.bf16.msra.mxu0 0
    %2628 = vmatprep.subr.bf16.mxu0 0
    %2629 = vmatpush2.bf16.msra.mxu0 0
    %2630 = vmatprep.subr.bf16.mxu0 0
    %2631 = vmatpush2.bf16.msra.mxu0 0
    %2632 = vmatprep.subr.bf16.mxu0 0
    %2633 = vmatpush2.bf16.msra.mxu0 0
    %2634 = vmatprep.subr.bf16.mxu0 0
    %2635 = vmatpush2.bf16.msra.mxu0 0
    %2636 = vmatprep.subr.bf16.mxu0 0
    %2637 = vmatpush2.bf16.msra.mxu0 0
    %2638 = vmatprep.subr.bf16.mxu0 0
    %2639 = vmatpush2.bf16.msra.mxu0 0
    %2640 = vmatprep.mubr.bf16.mxu0 0
    %2641 = vmatmul.mubr.bf16.gmra.mxu0 %v2607
    %v2642 = vpop.f32.mrf.mxu0
    %v2643 = vadd.f32 0.0, %v2642
    %v2644 = vpop.f32.mrf.mxu0
    %v2645 = vadd.f32 0.0, %v2644
    %v2646 = vpop.f32.mrf.mxu0
    %v2647 = vpop.f32.mrf.mxu0
    %2648 = vdwg.mxu0
    %2649 = vmatprep.subr.bf16.mxu0 0
    %2650 = vmatpush1.bf16.msra.mxu0 %v1848
    %2651 = vmatprep.subr.bf16.mxu0 0
    %2652 = vmatpush1.bf16.msra.mxu0 %v1845
    %2653 = vmatprep.subr.bf16.mxu0 0
    %2654 = vmatpush1.bf16.msra.mxu0 %v1842
    %2655 = vmatprep.subr.bf16.mxu0 0
    %2656 = vmatpush1.bf16.msra.mxu0 %v1839
    %2657 = vmatprep.subr.bf16.mxu0 0
    %2658 = vmatpush1.bf16.msra.mxu0 %v1836
    %2659 = vmatprep.subr.bf16.mxu0 0
    %2660 = vmatpush1.bf16.msra.mxu0 %v1833
    %2661 = vmatprep.subr.bf16.mxu0 0
    %2662 = vmatpush1.bf16.msra.mxu0 %v1830
    %2663 = vmatprep.subr.bf16.mxu0 0
    %2664 = vmatpush1.bf16.msra.mxu0 %v1827
    %2665 = vmatprep.subr.bf16.mxu0 0
    %2666 = vmatpush2.bf16.msra.mxu0 0
    %2667 = vmatprep.subr.bf16.mxu0 0
    %2668 = vmatpush2.bf16.msra.mxu0 0
    %2669 = vmatprep.subr.bf16.mxu0 0
    %2670 = vmatpush2.bf16.msra.mxu0 0
    %2671 = vmatprep.subr.bf16.mxu0 0
    %2672 = vmatpush2.bf16.msra.mxu0 0
    %2673 = vmatprep.subr.bf16.mxu0 0
    %2674 = vmatpush2.bf16.msra.mxu0 0
    %2675 = vmatprep.subr.bf16.mxu0 0
    %2676 = vmatpush2.bf16.msra.mxu0 0
    %2677 = vmatprep.subr.bf16.mxu0 0
    %2678 = vmatpush2.bf16.msra.mxu0 0
    %2679 = vmatprep.subr.bf16.mxu0 0
    %2680 = vmatpush2.bf16.msra.mxu0 0
    %2681 = vmatprep.mubr.bf16.mxu0 0
    %2682 = vmatmul.mubr.bf16.gmra.mxu0 %v2607
    %v2683 = vpop.f32.mrf.mxu0
    %v2684 = vadd.f32 0.0, %v2683
    %v2685 = vpop.f32.mrf.mxu0
    %v2686 = vpop.f32.mrf.mxu0
    %v2687 = vpop.f32.mrf.mxu0
    %2688 = vdwg.mxu0
    %v2689 = vadd.f32 %v1673, %v2643
    %v2690 = vxor.u32 %v2689, 2147483648
    %v2691 = vmul.f32 %v2690, 1.442695
    %v2692 = vpow.pop %v2691
    %v2693 = vadd.f32 %v2692, 1.0
    %v2694 = vrcp.pop %v2693
    %v2695 = vmul.f32 1.0, %v2694
    %v2696 = vadd.f32 %v1675, %v2645
    %v2697 = vxor.u32 %v2696, 2147483648
    %v2698 = vmul.f32 %v2697, 1.442695
    %v2699 = vpow.pop %v2698
    %v2700 = vadd.f32 %v2699, 1.0
    %v2701 = vrcp.pop %v2700
    %v2702 = vmul.f32 1.0, %v2701
    %v2703 = vadd.f32 %v2684, %v1455
    %v2704 = vmul.f32 %v2695, %v2703
    %v2705 = vadd.f32 %v1739, %v2704
    %v2706 = vtanh.pop %v2705
    %v2707 = vsub.f32 1.0, %v2702
    %v2708 = vmul.f32 %v2707, %v2706
    %v2709 = vmul.f32 %v2702, %v2605
    %v2710 = vadd.f32 %v2708, %v2709
    %2711 = vst [vmem:[#allocation2 + $0x38] sm:$0xff] %v2710
    %s2712 = scalar_lea.vmem %s6, 8
    %2713 = vst [vmem:[%s2712] sm:$0xff] %v2710
    %v2714 = vld [vmem:[#allocation2] sm:$0xff]
    %v2715 = vld [vmem:[#allocation2 + $0x8] sm:$0xff]
    %v2716 = vld [vmem:[#allocation2 + $0x10] sm:$0xff]
    %v2717 = vld [vmem:[#allocation2 + $0x18] sm:$0xff]
    %v2718 = vld [vmem:[#allocation2 + $0x20] sm:$0xff]
    %v2719 = vld [vmem:[#allocation2 + $0x28] sm:$0xff]
    %v2720 = vld [vmem:[#allocation2 + $0x30] sm:$0xff]
    %v2721 = vld [vmem:[#allocation2 + $0x38] sm:$0xff]
    %v2722 = vld [vmem:[%s3 + $0x4] ss:$0 sm:$0xff]
    %v2723 = vld [vmem:[#allocation5] sm:$0xff]
    %v2724 = vld [vmem:[#allocation5 + $0x8] sm:$0xff]
    %v2725 = vld [vmem:[#allocation5 + $0x10] sm:$0xff]
    %v2726 = vld [vmem:[#allocation5 + $0x18] sm:$0xff]
    %v2727 = vld [vmem:[#allocation5 + $0x20] sm:$0xff]
    %v2728 = vld [vmem:[#allocation5 + $0x28] sm:$0xff]
    %v2729 = vld [vmem:[#allocation5 + $0x30] sm:$0xff]
    %v2730 = vld [vmem:[#allocation5 + $0x38] sm:$0xff]
    %v2731 = vld [vmem:[#allocation5 + $0x40] sm:$0xff]
    %v2732 = vld [vmem:[#allocation5 + $0x48] sm:$0xff]
    %v2733 = vld [vmem:[#allocation5 + $0x50] sm:$0xff]
    %v2734 = vld [vmem:[#allocation5 + $0x58] sm:$0xff]
    %v2735 = vld [vmem:[#allocation5 + $0x60] sm:$0xff]
    %v2736 = vld [vmem:[#allocation5 + $0x68] sm:$0xff]
    %v2737 = vld [vmem:[#allocation5 + $0x70] sm:$0xff]
    %v2738 = vld [vmem:[#allocation5 + $0x78] sm:$0xff]
    %2739 = vmatprep.subr.mxu0 0.0
    %2740 = vmatpush1.msra.mxu0 %v2738
    %2741 = vmatprep.subr.mxu0 0.0
    %2742 = vmatpush1.msra.mxu0 %v2737
    %2743 = vmatprep.subr.mxu0 0.0
    %2744 = vmatpush1.msra.mxu0 %v2736
    %2745 = vmatprep.subr.mxu0 0.0
    %2746 = vmatpush1.msra.mxu0 %v2735
    %2747 = vmatprep.subr.mxu0 0.0
    %2748 = vmatpush1.msra.mxu0 %v2734
    %2749 = vmatprep.subr.mxu0 0.0
    %2750 = vmatpush1.msra.mxu0 %v2733
    %2751 = vmatprep.subr.mxu0 0.0
    %2752 = vmatpush1.msra.mxu0 %v2732
    %2753 = vmatprep.subr.mxu0 0.0
    %2754 = vmatpush1.msra.mxu0 %v2731
    %2755 = vmatprep.subr.mxu0 0.0
    %2756 = vmatpush1.msra.mxu0 %v2730
    %2757 = vmatprep.subr.mxu0 0.0
    %2758 = vmatpush1.msra.mxu0 %v2729
    %2759 = vmatprep.subr.mxu0 0.0
    %2760 = vmatpush1.msra.mxu0 %v2728
    %2761 = vmatprep.subr.mxu0 0.0
    %2762 = vmatpush1.msra.mxu0 %v2727
    %2763 = vmatprep.subr.mxu0 0.0
    %2764 = vmatpush1.msra.mxu0 %v2726
    %2765 = vmatprep.subr.mxu0 0.0
    %2766 = vmatpush1.msra.mxu0 %v2725
    %2767 = vmatprep.subr.mxu0 0.0
    %2768 = vmatpush1.msra.mxu0 %v2724
    %2769 = vmatprep.subr.mxu0 0.0
    %2770 = vmatpush1.msra.mxu0 %v2723
    %2771 = vmatprep.subr.mxu0 0.0
    %2772 = vmatpush2.msra.mxu0 0.0
    %2773 = vmatprep.subr.mxu0 0.0
    %2774 = vmatpush2.msra.mxu0 0.0
    %2775 = vmatprep.subr.mxu0 0.0
    %2776 = vmatpush2.msra.mxu0 0.0
    %2777 = vmatprep.subr.mxu0 0.0
    %2778 = vmatpush2.msra.mxu0 0.0
    %2779 = vmatprep.subr.mxu0 0.0
    %2780 = vmatpush2.msra.mxu0 0.0
    %2781 = vmatprep.subr.mxu0 0.0
    %2782 = vmatpush2.msra.mxu0 0.0
    %2783 = vmatprep.subr.mxu0 0.0
    %2784 = vmatpush2.msra.mxu0 0.0
    %2785 = vmatprep.subr.mxu0 0.0
    %2786 = vmatpush2.msra.mxu0 0.0
    %2787 = vmatprep.subr.mxu0 0.0
    %2788 = vmatpush2.msra.mxu0 0.0
    %2789 = vmatprep.subr.mxu0 0.0
    %2790 = vmatpush2.msra.mxu0 0.0
    %2791 = vmatprep.subr.mxu0 0.0
    %2792 = vmatpush2.msra.mxu0 0.0
    %2793 = vmatprep.subr.mxu0 0.0
    %2794 = vmatpush2.msra.mxu0 0.0
    %2795 = vmatprep.subr.mxu0 0.0
    %2796 = vmatpush2.msra.mxu0 0.0
    %2797 = vmatprep.subr.mxu0 0.0
    %2798 = vmatpush2.msra.mxu0 0.0
    %2799 = vmatprep.subr.mxu0 0.0
    %2800 = vmatpush2.msra.mxu0 0.0
    %2801 = vmatprep.subr.mxu0 0.0
    %2802 = vmatpush2.msra.mxu0 0.0
    %2803 = vmatprep.mubr.f32.mxu0 0.0
    %2804 = vmatmul.mubr.f32.gmra.mxu0 %v2714
    %v2805 = vpop.f32.mrf.mxu0
    %v2806 = vadd.f32 %v2722, %v2805
    %v2807 = vpop.f32.mrf.mxu0
    %2808 = vmatprep.mubr.f32.mxu0 0.0
    %2809 = vmatmul.mubr.f32.gmra.mxu0 %v2715
    %v2810 = vpop.f32.mrf.mxu0
    %v2811 = vadd.f32 %v2722, %v2810
    %v2812 = vpop.f32.mrf.mxu0
    %2813 = vmatprep.mubr.f32.mxu0 0.0
    %2814 = vmatmul.mubr.f32.gmra.mxu0 %v2716
    %v2815 = vpop.f32.mrf.mxu0
    %v2816 = vadd.f32 %v2722, %v2815
    %v2817 = vpop.f32.mrf.mxu0
    %2818 = vmatprep.mubr.f32.mxu0 0.0
    %2819 = vmatmul.mubr.f32.gmra.mxu0 %v2717
    %v2820 = vpop.f32.mrf.mxu0
    %v2821 = vadd.f32 %v2722, %v2820
    %v2822 = vpop.f32.mrf.mxu0
    %2823 = vmatprep.mubr.f32.mxu0 0.0
    %2824 = vmatmul.mubr.f32.gmra.mxu0 %v2718
    %v2825 = vpop.f32.mrf.mxu0
    %v2826 = vadd.f32 %v2722, %v2825
    %v2827 = vpop.f32.mrf.mxu0
    %2828 = vmatprep.mubr.f32.mxu0 0.0
    %2829 = vmatmul.mubr.f32.gmra.mxu0 %v2719
    %v2830 = vpop.f32.mrf.mxu0
    %v2831 = vadd.f32 %v2722, %v2830
    %v2832 = vpop.f32.mrf.mxu0
    %2833 = vmatprep.mubr.f32.mxu0 0.0
    %2834 = vmatmul.mubr.f32.gmra.mxu0 %v2720
    %v2835 = vpop.f32.mrf.mxu0
    %v2836 = vadd.f32 %v2722, %v2835
    %v2837 = vpop.f32.mrf.mxu0
    %2838 = vmatprep.mubr.f32.mxu0 0.0
    %2839 = vmatmul.mubr.f32.gmra.mxu0 %v2721
    %v2840 = vpop.f32.mrf.mxu0
    %v2841 = vadd.f32 %v2722, %v2840
    %v2842 = vpop.f32.mrf.mxu0
    %2843 = vdwg.mxu0
    %2844 = vst [vmem:[%s5] sm:$0xff] %v2806
    %2845 = vst [vmem:[%s5 + $0x8] sm:$0xff] %v2811
    %2846 = vst [vmem:[%s5 + $0x10] sm:$0xff] %v2816
    %2847 = vst [vmem:[%s5 + $0x18] sm:$0xff] %v2821
    %2848 = vst [vmem:[%s5 + $0x20] sm:$0xff] %v2826
    %2849 = vst [vmem:[%s5 + $0x28] sm:$0xff] %v2831
    %2850 = vst [vmem:[%s5 + $0x30] sm:$0xff] %v2836
    %2851 = vst [vmem:[%s5 + $0x38] sm:$0xff] %v2841
    // Predicated region
    $region30: #{gru_forward.1} parent=1 // pred_check
      _
    $region31: #{gru_forward.1} parent=1 // pred_check_branch
      %2853 = sbr.rel (0) target = $region33
    $region32: #{gru_forward.1} parent=1 // pred_region
      _
    $region33: #{gru_forward.1} parent=1 // pred_fallthru
      _
    // Predicated region
    $region34: #{gru_forward.1} parent=1 // pred_check
      _
    $region35: #{gru_forward.1} parent=1 // pred_check_branch
      %2855 = sbr.rel (0) target = $region37
    $region36: #{gru_forward.1} parent=1 // pred_region
      _
    $region37: #{gru_forward.1} parent=1 // pred_fallthru
      _
    // Predicated region
    $region38: #{gru_forward.1} parent=1 // pred_check
      _
    $region39: #{gru_forward.1} parent=1 // pred_check_branch
      %2857 = sbr.rel (0) target = $region41
    $region40: #{gru_forward.1} parent=1 // pred_region
      _
    $region41: #{gru_forward.1} parent=1 // pred_fallthru
      _
    // Predicated region
    $region42: #{gru_forward.1} parent=1 // pred_check
      _
    $region43: #{gru_forward.1} parent=1 // pred_check_branch
      %2859 = sbr.rel (0) target = $region45
    $region44: #{gru_forward.1} parent=1 // pred_region
      _
    $region45: #{gru_forward.1} parent=1 // pred_fallthru
      _
    %2860 = vsyncpa [#allocation4], 1
    %2861 = vsyncpa [#allocation6], 1

</llo_original>
